<compile_context>
chip_gen: v7x
topology: tpu7x:2x2x1
jax: 0.10.0
libtpu: 0.0.40
codegen_flags: <defaults>
</compile_context>

<pallas_src>
import functools

import jax
import jax.numpy as jnp
from jax import lax
from jax.experimental import pallas as pl
from jax.experimental.pallas import tpu as pltpu


# ----------------------------- helpers ---------------------------------------


def _round_up(n, m):
    return ((n + m - 1) // m) * m


def _sigmoid(x):
    # logistic via tanh: single EUP transcendental, no divide, no overflow
    return 0.5 * (jnp.tanh(0.5 * x) + 1.0)


def _softplus(x):
    # numerically stable softplus: max(x,0) + log(1 + exp(-|x|))
    return jnp.maximum(x, 0.0) + jnp.log(1.0 + jnp.exp(-jnp.abs(x)))


# ----------------------------- kernel ----------------------------------------


def latent_ode_kernel(
    # data
    xt_ref,       # [S, Bp, Din+1]  concat(x, t_obs), time-major, batch-padded
    tcomb_ref,    # [T, Rp, 1]      stacked (recon | pred) time grid
    eps_ref,      # [Bp, L]
    # encoder GRU, fused gates (PyTorch order r|z|n along the last axis)
    wih_ref,      # [Din+1, 3H] bf16
    bih_ref,      # [1, 3H]     f32
    whh_ref,      # [H, 3H]     bf16
    bhh_ref,      # [1, 3H]     f32
    # variational heads
    wm_ref, bm_ref, ws_ref, bs_ref,      # [H, L] bf16, [1, L] f32 (x2)
    # ODE function MLP
    wodez_ref,    # [L, H] bf16
    wodet_ref,    # [1, H] f32  (VPU broadcast term)
    bode1_ref,    # [1, H] f32
    wode2_ref,    # [H, L] bf16
    bode2_ref,    # [1, L] f32
    # decoder MLP (output lane-padded to Dp)
    wdec1_ref, bdec1_ref, wdec2_ref, bdec2_ref,
    # outputs
    z0_mean_ref,  # [Bp, L]
    z0_std_ref,   # [Bp, L]
    ztraj_ref,    # [T, Rp, L]   stacked latent trajectory
    xdec_ref,     # [T*Rp, Dp]   lane-dense decoded slab
    # scratch
    gx_s,         # [S, Bp, 3H]  fused input-gate preactivations
    tterm_s,      # [T, Rp, H]   precomputed t * W_t + b1 term
    dt_s,         # [T, Rp, 1]   precomputed per-step dt
    *, batch, unroll_enc, unroll_ode):
    S, Bp, Dx = xt_ref.shape
    T, Rp, _ = tcomb_ref.shape
    H3 = whh_ref.shape[1]
    H = H3 // 3
    L = wm_ref.shape[1]
    B = batch
    f32 = jnp.float32
    bf16 = jnp.bfloat16

    # ---------- encoder: fused input-gate preactivations (one batched matmul)
    xt2 = xt_ref[...].reshape(S * Bp, Dx).astype(bf16)
    gx_s[...] = (jnp.dot(xt2, wih_ref[...], preferred_element_type=f32)
                 + bih_ref[...]).reshape(S, Bp, H3)

    whh = whh_ref[...]                                     # [H, 3H] bf16
    bhh_b = jnp.broadcast_to(bhh_ref[...], (Bp, H3))       # hoisted broadcast

    # ---------- GRU recurrence over reversed observation sequence ------------
    def gru_step(i, h):
        idx = S - 1 - i                                    # reverse time order
        gh = jnp.dot(h.astype(bf16), whh,
                     preferred_element_type=f32) + bhh_b   # [Bp, 3H], one push
        gx = gx_s[idx]                                     # [Bp, 3H]
        rz = _sigmoid(gx[:, 0:2 * H] + gh[:, 0:2 * H])     # r|z gates together
        r = rz[:, 0:H]
        zg = rz[:, H:2 * H]
        n = jnp.tanh(gx[:, 2 * H:3 * H] + r * gh[:, 2 * H:3 * H])
        return (1.0 - zg) * n + zg * h

    h0 = jnp.zeros((Bp, H), dtype=f32)
    h_final = lax.fori_loop(0, S, gru_step, h0, unroll=unroll_enc)
    h_bf = h_final.astype(bf16)

    z0_mean = jnp.dot(h_bf, wm_ref[...],
                      preferred_element_type=f32) + bm_ref[...]
    z0_std = _softplus(jnp.dot(h_bf, ws_ref[...],
                               preferred_element_type=f32) + bs_ref[...])
    z0_mean_ref[...] = z0_mean
    z0_std_ref[...] = z0_std

    # reparameterized initial latent state (padded batch rows carry eps = 0)
    z0 = z0_mean + z0_std * eps_ref[...]                   # [Bp, L]
    z0b = z0[0:B]                                          # valid batch rows

    # stacked initial state: rows 0..B-1 recon stream, B..2B-1 pred stream,
    # remaining sublane-padding rows get a finite copy of batch-0's z0.
    ztraj_ref[0, 0:B, :] = z0b
    ztraj_ref[0, B:2 * B, :] = z0b
    if Rp > 2 * B:
        ztraj_ref[0, 2 * B:Rp, :] = jnp.broadcast_to(z0[0:1, :],
                                                     (Rp - 2 * B, L))
    z_init = ztraj_ref[0]                                  # [Rp, L]

    # ---------- precompute per-step time term and dt (batched VPU pass) ------
    tall = tcomb_ref[...]                                  # [T, Rp, 1]
    tterm_s[...] = (tall * wodet_ref[...].reshape(1, 1, H)
                    + bode1_ref[...].reshape(1, 1, H))     # [T, Rp, H]
    dt_s[0] = jnp.zeros((Rp, 1), f32)
    if T > 1:
        dt_s[pl.ds(1, T - 1)] = tall[1:T] - tall[0:T - 1]

    wodez = wodez_ref[...]                                 # [L, H] bf16
    wode2 = wode2_ref[...]                                 # [H, L] bf16
    bode2_b = jnp.broadcast_to(bode2_ref[...], (Rp, L))    # hoisted broadcast

    # ---------- fused Euler integration of both streams (serial chain) -------
    def euler_step(k, z):
        hid = jnp.tanh(jnp.dot(z.astype(bf16), wodez,
                               preferred_element_type=f32) + tterm_s[k - 1])
        dz = jnp.dot(hid.astype(bf16), wode2,
                     preferred_element_type=f32) + bode2_b
        z_new = z + dt_s[k] * dz
        ztraj_ref[k] = z_new
        return z_new

    lax.fori_loop(1, T, euler_step, z_init, unroll=unroll_ode)

    # ---------- batched decode of the full trajectory (out of the loop) ------
    z_all = ztraj_ref[...].reshape(T * Rp, L).astype(bf16)  # sublane-aligned
    hd = jnp.maximum(
        jnp.dot(z_all, wdec1_ref[...], preferred_element_type=f32)
        + bdec1_ref[...], 0.0)                             # [T*Rp, H]
    xdec_ref[...] = (jnp.dot(hd.astype(bf16), wdec2_ref[...],
                             preferred_element_type=f32)
                     + bdec2_ref[...])                     # [T*Rp, Dp] full store


# ----------------------------- wrapper ----------------------------------------


def init_params(key, input_dim, latent_dim, hidden_dim):
    """Deterministic parameter initialization (shapes mirror the PyTorch
    module: GRU encoder, mean/std heads, ODE-func MLP, decoder MLP)."""
    ks = jax.random.split(key, 10)
    Din, L, H = input_dim, latent_dim, hidden_dim
    scale = 0.1

    def w(k, shape):
        return (scale * jax.random.normal(k, shape)).astype(jnp.float32)

    return dict(
        w_ih=w(ks[0], (Din + 1, 3 * H)),
        w_hh=w(ks[1], (H, 3 * H)),
        b_ih=jnp.zeros((1, 3 * H), jnp.float32),
        b_hh=jnp.zeros((1, 3 * H), jnp.float32),
        w_mean=w(ks[2], (H, L)),
        b_mean=jnp.zeros((1, L), jnp.float32),
        w_std=w(ks[3], (H, L)),
        b_std=jnp.zeros((1, L), jnp.float32),
        w_ode1=w(ks[4], (L + 1, H)),
        b_ode1=jnp.zeros((1, H), jnp.float32),
        w_ode2=w(ks[5], (H, L)),
        b_ode2=jnp.zeros((1, L), jnp.float32),
        w_dec1=w(ks[6], (L, H)),
        b_dec1=jnp.zeros((1, H), jnp.float32),
        w_dec2=w(ks[7], (H, Din)),
        b_dec2=jnp.zeros((1, Din), jnp.float32),
    )


@jax.jit
def latent_ode_forward(x, t_obs, t_pred, eps, params):
    """x: [B,S,Din], t_obs: [B,S], t_pred: [B,P], eps: [B,L] (float32)."""
    f32 = jnp.float32
    bf16 = jnp.bfloat16
    B, S, Din = x.shape
    P = t_pred.shape[1]
    H = params["w_hh"].shape[0]
    L = params["w_mean"].shape[1]

    Bp = _round_up(B, 8)                 # batch padded to full sublane groups
    Rp = _round_up(2 * B, 8)             # stacked (recon | pred) Euler streams
    T = max(S, P)
    Dp = max(128, _round_up(Din, 128))   # lane-dense decoder output width

    # cap unrolling: full unroll only for short sequences (vreg pressure)
    unroll_enc = True if S <= 16 else 8
    unroll_ode = True if T <= 16 else 8

    # ---- batch-pad inputs, build time-major encoder input -------------------
    def pad_batch(a):
        pad = [(0, Bp - B)] + [(0, 0)] * (a.ndim - 1)
        return jnp.pad(a, pad)

    x_p = pad_batch(x.astype(f32))                       # [Bp, S, Din]
    tobs_p = pad_batch(t_obs.astype(f32))                # [Bp, S]
    eps_p = pad_batch(eps.astype(f32))                   # [Bp, L]
    xt = jnp.concatenate([x_p, tobs_p[:, :, None]], axis=-1)  # [Bp, S, Din+1]
    xt_tm = jnp.transpose(xt, (1, 0, 2))                       # [S, Bp, Din+1]

    # ---- combined (recon | pred) time grid, time-major, row-stacked ---------
    def extend(t):  # [B, n] -> [B, T]; repeat last time so dt = 0 past the end
        n = t.shape[1]
        if n == T:
            return t
        return jnp.concatenate(
            [t, jnp.broadcast_to(t[:, -1:], (t.shape[0], T - n))], axis=1)

    t_stack = jnp.concatenate([extend(t_obs.astype(f32)),
                               extend(t_pred.astype(f32))], axis=0)  # [2B, T]
    if Rp > 2 * B:
        t_stack = jnp.concatenate(
            [t_stack, jnp.broadcast_to(t_stack[:1], (Rp - 2 * B, T))], axis=0)
    t_comb = jnp.transpose(t_stack)[:, :, None]                       # [T, Rp, 1]

    # ---- weight prep: bf16 for MXU operands, f32 for biases / VPU terms -----
    w_ode1 = params["w_ode1"]
    w_ode_z, w_ode_t = w_ode1[:L, :], w_ode1[L:, :]   # MXU part / VPU time part

    # lane-pad decoder output so the final store is a full (unmasked) slab
    w_dec2p = jnp.pad(params["w_dec2"], ((0, 0), (0, Dp - Din)))
    b_dec2p = jnp.pad(params["b_dec2"], ((0, 0), (0, Dp - Din)))

    inputs = [
        xt_tm, t_comb, eps_p,
        params["w_ih"].astype(bf16), params["b_ih"],
        params["w_hh"].astype(bf16), params["b_hh"],
        params["w_mean"].astype(bf16), params["b_mean"],
        params["w_std"].astype(bf16), params["b_std"],
        w_ode_z.astype(bf16), w_ode_t, params["b_ode1"],
        params["w_ode2"].astype(bf16), params["b_ode2"],
        params["w_dec1"].astype(bf16), params["b_dec1"],
        w_dec2p.astype(bf16), b_dec2p,
    ]

    vmem = pl.BlockSpec(memory_space=pltpu.MemorySpace.VMEM)
    out_shapes = (
        jax.ShapeDtypeStruct((Bp, L), f32),        # z0_mean (batch-padded)
        jax.ShapeDtypeStruct((Bp, L), f32),        # z0_std  (batch-padded)
        jax.ShapeDtypeStruct((T, Rp, L), f32),     # stacked latent trajectory
        jax.ShapeDtypeStruct((T * Rp, Dp), f32),   # lane-dense decoded slab
    )

    z0m, z0s, ztraj, xdec = pl.pallas_call(
        functools.partial(latent_ode_kernel, batch=B,
                          unroll_enc=unroll_enc, unroll_ode=unroll_ode),
        out_shape=out_shapes,
        in_specs=[vmem] * len(inputs),
        out_specs=tuple([vmem] * len(out_shapes)),
        scratch_shapes=[
            pltpu.VMEM((S, Bp, 3 * H), jnp.float32),   # fused input-gate preacts
            pltpu.VMEM((T, Rp, H), jnp.float32),       # precomputed time term
            pltpu.VMEM((T, Rp, 1), jnp.float32),       # precomputed dt
        ],
        compiler_params=pltpu.CompilerParams(
            vmem_limit_bytes=32 * 1024 * 1024),
    )(*inputs)

    # ---- unpack padded / stacked kernel outputs ------------------------------
    xd3 = xdec.reshape(T, Rp, Dp)
    x_rec = jnp.transpose(xd3[:S, :B, :Din], (1, 0, 2))         # [B, S, Din]
    x_pred = jnp.transpose(xd3[:P, B:2 * B, :Din], (1, 0, 2))   # [B, P, Din]
    z_pred = jnp.transpose(ztraj[:P, B:2 * B, :], (1, 0, 2))    # [B, P, L]

    return {
        "z0_mean": z0m[:B],              # [B, L]
        "z0_std": z0s[:B],               # [B, L]
        "reconstruction": x_rec,         # [B, S, Din]
        "prediction": x_pred,            # [B, P, Din]
        "z_pred": z_pred,                # [B, P, L]
    }


# ----------------------------- main -------------------------------------------


if __name__ == "__main__":
    # small shapes consistent with the module's forward signature
    B, S, P = 2, 8, 8
    input_dim, latent_dim, hidden_dim = 4, 8, 32

    key = jax.random.PRNGKey(0)
    k_x, k_eps, k_params = jax.random.split(key, 3)

    x = jax.random.normal(k_x, (B, S, input_dim), dtype=jnp.float32)
    # strictly increasing, irregular observation times per batch element
    t_obs = jnp.cumsum(
        0.1 + 0.05 * jnp.arange(1, S + 1, dtype=jnp.float32)[None, :]
        * jnp.ones((B, 1), jnp.float32), axis=1)
    t_pred = t_obs[:, -1:] + 0.1 * jnp.arange(
        1, P + 1, dtype=jnp.float32)[None, :] * jnp.ones((B, 1), jnp.float32)
    eps = jax.random.normal(k_eps, (B, latent_dim), dtype=jnp.float32)

    params = init_params(k_params, input_dim, latent_dim, hidden_dim)

    out = latent_ode_forward(x, t_obs, t_pred, eps, params)
    jax.block_until_ready(out)

    assert out["z0_mean"].shape == (B, latent_dim)
    assert out["z0_std"].shape == (B, latent_dim)
    assert out["reconstruction"].shape == (B, S, input_dim)
    assert out["prediction"].shape == (B, P, input_dim)
    assert out["z_pred"].shape == (B, P, latent_dim)
    assert all(bool(jnp.all(jnp.isfinite(v))) for v in out.values())

    print("KERNEL_OK")
</pallas_src>

<mosaic_0001>
module attributes {stable_mosaic.version = 11 : i64} {
  func.func @latent_ode_kernel(%arg0: memref<8x8x5xf32, #tpu.memory_space<vmem>>, %arg1: memref<8x8x1xf32, #tpu.memory_space<vmem>>, %arg2: memref<8x8xf32, #tpu.memory_space<vmem>>, %arg3: memref<5x96xbf16, #tpu.memory_space<vmem>>, %arg4: memref<1x96xf32, #tpu.memory_space<vmem>>, %arg5: memref<32x96xbf16, #tpu.memory_space<vmem>>, %arg6: memref<1x96xf32, #tpu.memory_space<vmem>>, %arg7: memref<32x8xbf16, #tpu.memory_space<vmem>>, %arg8: memref<1x8xf32, #tpu.memory_space<vmem>>, %arg9: memref<32x8xbf16, #tpu.memory_space<vmem>>, %arg10: memref<1x8xf32, #tpu.memory_space<vmem>>, %arg11: memref<8x32xbf16, #tpu.memory_space<vmem>>, %arg12: memref<1x32xf32, #tpu.memory_space<vmem>>, %arg13: memref<1x32xf32, #tpu.memory_space<vmem>>, %arg14: memref<32x8xbf16, #tpu.memory_space<vmem>>, %arg15: memref<1x8xf32, #tpu.memory_space<vmem>>, %arg16: memref<8x32xbf16, #tpu.memory_space<vmem>>, %arg17: memref<1x32xf32, #tpu.memory_space<vmem>>, %arg18: memref<32x128xbf16, #tpu.memory_space<vmem>>, %arg19: memref<1x128xf32, #tpu.memory_space<vmem>>, %arg20: memref<8x8xf32, #tpu.memory_space<vmem>>, %arg21: memref<8x8xf32, #tpu.memory_space<vmem>>, %arg22: memref<8x8x8xf32, #tpu.memory_space<vmem>>, %arg23: memref<64x128xf32, #tpu.memory_space<vmem>>, %arg24: memref<8x8x96xf32, #tpu.memory_space<vmem>>, %arg25: memref<8x8x32xf32, #tpu.memory_space<vmem>>, %arg26: memref<8x8x1xf32, #tpu.memory_space<vmem>>) attributes {dimension_semantics = [], scalar_prefetch = 0 : i64, scratch_operands = 3 : i64, tpu.core_type = #tpu.core_type<tc>} {
    %c0 = arith.constant 0 : index
    %c0_0 = arith.constant 0 : index
    %c0_1 = arith.constant 0 : index
    %0 = vector.load %arg0[%c0, %c0_0, %c0_1] : memref<8x8x5xf32, #tpu.memory_space<vmem>>, vector<8x8x5xf32>
    %1 = vector.shape_cast %0 : vector<8x8x5xf32> to vector<64x5xf32>
    %2 = arith.truncf %1 : vector<64x5xf32> to vector<64x5xbf16>
    %c0_2 = arith.constant 0 : index
    %c0_3 = arith.constant 0 : index
    %3 = vector.load %arg3[%c0_2, %c0_3] : memref<5x96xbf16, #tpu.memory_space<vmem>>, vector<5x96xbf16>
    %cst = arith.constant dense<0.000000e+00> : vector<64x96xf32>
    %4 = tpu.matmul %2, %3, %cst {dimension_numbers = #tpu.dot_dimension_numbers<[1], [0], [0], [1], [0, 0, 1, 1], [], []>} : vector<64x5xbf16>, vector<5x96xbf16>, vector<64x96xf32> -> vector<64x96xf32>
    %c0_4 = arith.constant 0 : index
    %c0_5 = arith.constant 0 : index
    %5 = vector.load %arg4[%c0_4, %c0_5] : memref<1x96xf32, #tpu.memory_space<vmem>>, vector<1x96xf32>
    %6 = vector.broadcast %5 : vector<1x96xf32> to vector<64x96xf32>
    %7 = arith.addf %4, %6 : vector<64x96xf32>
    %8 = vector.shape_cast %7 : vector<64x96xf32> to vector<8x8x96xf32>
    %c0_6 = arith.constant 0 : index
    %c0_7 = arith.constant 0 : index
    %c0_8 = arith.constant 0 : index
    %9 = vector.load %arg24[%c0_6, %c0_7, %c0_8] : memref<8x8x96xf32, #tpu.memory_space<vmem>>, vector<8x8x96xf32>
    tpu.vector_store %arg24[%c0_6, %c0_7, %c0_8], %8 {strides = array<i32>} : memref<8x8x96xf32, #tpu.memory_space<vmem>>, vector<8x8x96xf32>,
    %c0_9 = arith.constant 0 : index
    %c0_10 = arith.constant 0 : index
    %10 = vector.load %arg5[%c0_9, %c0_10] : memref<32x96xbf16, #tpu.memory_space<vmem>>, vector<32x96xbf16>
    %c0_11 = arith.constant 0 : index
    %c0_12 = arith.constant 0 : index
    %11 = vector.load %arg6[%c0_11, %c0_12] : memref<1x96xf32, #tpu.memory_space<vmem>>, vector<1x96xf32>
    %12 = vector.shape_cast %11 : vector<1x96xf32> to vector<1x96xf32>
    %13 = vector.broadcast %12 : vector<1x96xf32> to vector<8x96xf32>
    %cst_13 = arith.constant 0.000000e+00 : f32
    %14 = vector.broadcast %cst_13 : f32 to vector<8x32xf32>
    %c0_i32 = arith.constant 0 : i32
    %c7_i32 = arith.constant 7 : i32
    %15 = arith.subi %c7_i32, %c0_i32 : i32
    %16 = arith.truncf %14 : vector<8x32xf32> to vector<8x32xbf16>
    %cst_14 = arith.constant dense<0.000000e+00> : vector<8x96xf32>
    %17 = tpu.matmul %16, %10, %cst_14 {dimension_numbers = #tpu.dot_dimension_numbers<[1], [0], [0], [1], [0, 0, 1, 1], [], []>} : vector<8x32xbf16>, vector<32x96xbf16>, vector<8x96xf32> -> vector<8x96xf32>
    %18 = arith.addf %17, %13 : vector<8x96xf32>
    %19 = arith.index_cast %15 : i32 to index
    %c0_15 = arith.constant 0 : index
    %c0_16 = arith.constant 0 : index
    %20 = vector.load %arg24[%19, %c0_15, %c0_16] : memref<8x8x96xf32, #tpu.memory_space<vmem>>, vector<1x8x96xf32>
    %21 = vector.shape_cast %20 : vector<1x8x96xf32> to vector<8x96xf32>
    %22 = vector.extract_strided_slice %21 {offsets = [0, 0], sizes = [8, 64], strides = [1, 1]} : vector<8x96xf32> to vector<8x64xf32>
    %23 = vector.extract_strided_slice %18 {offsets = [0, 0], sizes = [8, 64], strides = [1, 1]} : vector<8x96xf32> to vector<8x64xf32>
    %24 = arith.addf %22, %23 : vector<8x64xf32>
    %cst_17 = arith.constant 5.000000e-01 : f32
    %25 = vector.broadcast %cst_17 : f32 to vector<8x64xf32>
    %26 = arith.mulf %25, %24 : vector<8x64xf32>
    %27 = math.tanh %26 : vector<8x64xf32>
    %cst_18 = arith.constant 1.000000e+00 : f32
    %28 = vector.broadcast %cst_18 : f32 to vector<8x64xf32>
    %29 = arith.addf %27, %28 : vector<8x64xf32>
    %cst_19 = arith.constant 5.000000e-01 : f32
    %30 = vector.broadcast %cst_19 : f32 to vector<8x64xf32>
    %31 = arith.mulf %30, %29 : vector<8x64xf32>
    %32 = vector.extract_strided_slice %31 {offsets = [0, 0], sizes = [8, 32], strides = [1, 1]} : vector<8x64xf32> to vector<8x32xf32>
    %33 = vector.extract_strided_slice %31 {offsets = [0, 32], sizes = [8, 32], strides = [1, 1]} : vector<8x64xf32> to vector<8x32xf32>
    %34 = vector.extract_strided_slice %21 {offsets = [0, 64], sizes = [8, 32], strides = [1, 1]} : vector<8x96xf32> to vector<8x32xf32>
    %35 = vector.extract_strided_slice %18 {offsets = [0, 64], sizes = [8, 32], strides = [1, 1]} : vector<8x96xf32> to vector<8x32xf32>
    %36 = arith.mulf %32, %35 : vector<8x32xf32>
    %37 = arith.addf %34, %36 : vector<8x32xf32>
    %38 = math.tanh %37 : vector<8x32xf32>
    %cst_20 = arith.constant 1.000000e+00 : f32
    %39 = vector.broadcast %cst_20 : f32 to vector<8x32xf32>
    %40 = arith.subf %39, %33 : vector<8x32xf32>
    %41 = arith.mulf %40, %38 : vector<8x32xf32>
    %42 = arith.mulf %33, %14 : vector<8x32xf32>
    %43 = arith.addf %41, %42 : vector<8x32xf32>
    %c1_i32 = arith.constant 1 : i32
    %c7_i32_21 = arith.constant 7 : i32
    %44 = arith.subi %c7_i32_21, %c1_i32 : i32
    %45 = arith.truncf %43 : vector<8x32xf32> to vector<8x32xbf16>
    %cst_22 = arith.constant dense<0.000000e+00> : vector<8x96xf32>
    %46 = tpu.matmul %45, %10, %cst_22 {dimension_numbers = #tpu.dot_dimension_numbers<[1], [0], [0], [1], [0, 0, 1, 1], [], []>} : vector<8x32xbf16>, vector<32x96xbf16>, vector<8x96xf32> -> vector<8x96xf32>
    %47 = arith.addf %46, %13 : vector<8x96xf32>
    %48 = arith.index_cast %44 : i32 to index
    %c0_23 = arith.constant 0 : index
    %c0_24 = arith.constant 0 : index
    %49 = vector.load %arg24[%48, %c0_23, %c0_24] : memref<8x8x96xf32, #tpu.memory_space<vmem>>, vector<1x8x96xf32>
    %50 = vector.shape_cast %49 : vector<1x8x96xf32> to vector<8x96xf32>
    %51 = vector.extract_strided_slice %50 {offsets = [0, 0], sizes = [8, 64], strides = [1, 1]} : vector<8x96xf32> to vector<8x64xf32>
    %52 = vector.extract_strided_slice %47 {offsets = [0, 0], sizes = [8, 64], strides = [1, 1]} : vector<8x96xf32> to vector<8x64xf32>
    %53 = arith.addf %51, %52 : vector<8x64xf32>
    %cst_25 = arith.constant 5.000000e-01 : f32
    %54 = vector.broadcast %cst_25 : f32 to vector<8x64xf32>
    %55 = arith.mulf %54, %53 : vector<8x64xf32>
    %56 = math.tanh %55 : vector<8x64xf32>
    %cst_26 = arith.constant 1.000000e+00 : f32
    %57 = vector.broadcast %cst_26 : f32 to vector<8x64xf32>
    %58 = arith.addf %56, %57 : vector<8x64xf32>
    %cst_27 = arith.constant 5.000000e-01 : f32
    %59 = vector.broadcast %cst_27 : f32 to vector<8x64xf32>
    %60 = arith.mulf %59, %58 : vector<8x64xf32>
    %61 = vector.extract_strided_slice %60 {offsets = [0, 0], sizes = [8, 32], strides = [1, 1]} : vector<8x64xf32> to vector<8x32xf32>
    %62 = vector.extract_strided_slice %60 {offsets = [0, 32], sizes = [8, 32], strides = [1, 1]} : vector<8x64xf32> to vector<8x32xf32>
    %63 = vector.extract_strided_slice %50 {offsets = [0, 64], sizes = [8, 32], strides = [1, 1]} : vector<8x96xf32> to vector<8x32xf32>
    %64 = vector.extract_strided_slice %47 {offsets = [0, 64], sizes = [8, 32], strides = [1, 1]} : vector<8x96xf32> to vector<8x32xf32>
    %65 = arith.mulf %61, %64 : vector<8x32xf32>
    %66 = arith.addf %63, %65 : vector<8x32xf32>
    %67 = math.tanh %66 : vector<8x32xf32>
    %cst_28 = arith.constant 1.000000e+00 : f32
    %68 = vector.broadcast %cst_28 : f32 to vector<8x32xf32>
    %69 = arith.subf %68, %62 : vector<8x32xf32>
    %70 = arith.mulf %69, %67 : vector<8x32xf32>
    %71 = arith.mulf %62, %43 : vector<8x32xf32>
    %72 = arith.addf %70, %71 : vector<8x32xf32>
    %c2_i32 = arith.constant 2 : i32
    %c7_i32_29 = arith.constant 7 : i32
    %73 = arith.subi %c7_i32_29, %c2_i32 : i32
    %74 = arith.truncf %72 : vector<8x32xf32> to vector<8x32xbf16>
    %cst_30 = arith.constant dense<0.000000e+00> : vector<8x96xf32>
    %75 = tpu.matmul %74, %10, %cst_30 {dimension_numbers = #tpu.dot_dimension_numbers<[1], [0], [0], [1], [0, 0, 1, 1], [], []>} : vector<8x32xbf16>, vector<32x96xbf16>, vector<8x96xf32> -> vector<8x96xf32>
    %76 = arith.addf %75, %13 : vector<8x96xf32>
    %77 = arith.index_cast %73 : i32 to index
    %c0_31 = arith.constant 0 : index
    %c0_32 = arith.constant 0 : index
    %78 = vector.load %arg24[%77, %c0_31, %c0_32] : memref<8x8x96xf32, #tpu.memory_space<vmem>>, vector<1x8x96xf32>
    %79 = vector.shape_cast %78 : vector<1x8x96xf32> to vector<8x96xf32>
    %80 = vector.extract_strided_slice %79 {offsets = [0, 0], sizes = [8, 64], strides = [1, 1]} : vector<8x96xf32> to vector<8x64xf32>
    %81 = vector.extract_strided_slice %76 {offsets = [0, 0], sizes = [8, 64], strides = [1, 1]} : vector<8x96xf32> to vector<8x64xf32>
    %82 = arith.addf %80, %81 : vector<8x64xf32>
    %cst_33 = arith.constant 5.000000e-01 : f32
    %83 = vector.broadcast %cst_33 : f32 to vector<8x64xf32>
    %84 = arith.mulf %83, %82 : vector<8x64xf32>
    %85 = math.tanh %84 : vector<8x64xf32>
    %cst_34 = arith.constant 1.000000e+00 : f32
    %86 = vector.broadcast %cst_34 : f32 to vector<8x64xf32>
    %87 = arith.addf %85, %86 : vector<8x64xf32>
    %cst_35 = arith.constant 5.000000e-01 : f32
    %88 = vector.broadcast %cst_35 : f32 to vector<8x64xf32>
    %89 = arith.mulf %88, %87 : vector<8x64xf32>
    %90 = vector.extract_strided_slice %89 {offsets = [0, 0], sizes = [8, 32], strides = [1, 1]} : vector<8x64xf32> to vector<8x32xf32>
    %91 = vector.extract_strided_slice %89 {offsets = [0, 32], sizes = [8, 32], strides = [1, 1]} : vector<8x64xf32> to vector<8x32xf32>
    %92 = vector.extract_strided_slice %79 {offsets = [0, 64], sizes = [8, 32], strides = [1, 1]} : vector<8x96xf32> to vector<8x32xf32>
    %93 = vector.extract_strided_slice %76 {offsets = [0, 64], sizes = [8, 32], strides = [1, 1]} : vector<8x96xf32> to vector<8x32xf32>
    %94 = arith.mulf %90, %93 : vector<8x32xf32>
    %95 = arith.addf %92, %94 : vector<8x32xf32>
    %96 = math.tanh %95 : vector<8x32xf32>
    %cst_36 = arith.constant 1.000000e+00 : f32
    %97 = vector.broadcast %cst_36 : f32 to vector<8x32xf32>
    %98 = arith.subf %97, %91 : vector<8x32xf32>
    %99 = arith.mulf %98, %96 : vector<8x32xf32>
    %100 = arith.mulf %91, %72 : vector<8x32xf32>
    %101 = arith.addf %99, %100 : vector<8x32xf32>
    %c3_i32 = arith.constant 3 : i32
    %c7_i32_37 = arith.constant 7 : i32
    %102 = arith.subi %c7_i32_37, %c3_i32 : i32
    %103 = arith.truncf %101 : vector<8x32xf32> to vector<8x32xbf16>
    %cst_38 = arith.constant dense<0.000000e+00> : vector<8x96xf32>
    %104 = tpu.matmul %103, %10, %cst_38 {dimension_numbers = #tpu.dot_dimension_numbers<[1], [0], [0], [1], [0, 0, 1, 1], [], []>} : vector<8x32xbf16>, vector<32x96xbf16>, vector<8x96xf32> -> vector<8x96xf32>
    %105 = arith.addf %104, %13 : vector<8x96xf32>
    %106 = arith.index_cast %102 : i32 to index
    %c0_39 = arith.constant 0 : index
    %c0_40 = arith.constant 0 : index
    %107 = vector.load %arg24[%106, %c0_39, %c0_40] : memref<8x8x96xf32, #tpu.memory_space<vmem>>, vector<1x8x96xf32>
    %108 = vector.shape_cast %107 : vector<1x8x96xf32> to vector<8x96xf32>
    %109 = vector.extract_strided_slice %108 {offsets = [0, 0], sizes = [8, 64], strides = [1, 1]} : vector<8x96xf32> to vector<8x64xf32>
    %110 = vector.extract_strided_slice %105 {offsets = [0, 0], sizes = [8, 64], strides = [1, 1]} : vector<8x96xf32> to vector<8x64xf32>
    %111 = arith.addf %109, %110 : vector<8x64xf32>
    %cst_41 = arith.constant 5.000000e-01 : f32
    %112 = vector.broadcast %cst_41 : f32 to vector<8x64xf32>
    %113 = arith.mulf %112, %111 : vector<8x64xf32>
    %114 = math.tanh %113 : vector<8x64xf32>
    %cst_42 = arith.constant 1.000000e+00 : f32
    %115 = vector.broadcast %cst_42 : f32 to vector<8x64xf32>
    %116 = arith.addf %114, %115 : vector<8x64xf32>
    %cst_43 = arith.constant 5.000000e-01 : f32
    %117 = vector.broadcast %cst_43 : f32 to vector<8x64xf32>
    %118 = arith.mulf %117, %116 : vector<8x64xf32>
    %119 = vector.extract_strided_slice %118 {offsets = [0, 0], sizes = [8, 32], strides = [1, 1]} : vector<8x64xf32> to vector<8x32xf32>
    %120 = vector.extract_strided_slice %118 {offsets = [0, 32], sizes = [8, 32], strides = [1, 1]} : vector<8x64xf32> to vector<8x32xf32>
    %121 = vector.extract_strided_slice %108 {offsets = [0, 64], sizes = [8, 32], strides = [1, 1]} : vector<8x96xf32> to vector<8x32xf32>
    %122 = vector.extract_strided_slice %105 {offsets = [0, 64], sizes = [8, 32], strides = [1, 1]} : vector<8x96xf32> to vector<8x32xf32>
    %123 = arith.mulf %119, %122 : vector<8x32xf32>
    %124 = arith.addf %121, %123 : vector<8x32xf32>
    %125 = math.tanh %124 : vector<8x32xf32>
    %cst_44 = arith.constant 1.000000e+00 : f32
    %126 = vector.broadcast %cst_44 : f32 to vector<8x32xf32>
    %127 = arith.subf %126, %120 : vector<8x32xf32>
    %128 = arith.mulf %127, %125 : vector<8x32xf32>
    %129 = arith.mulf %120, %101 : vector<8x32xf32>
    %130 = arith.addf %128, %129 : vector<8x32xf32>
    %c4_i32 = arith.constant 4 : i32
    %c7_i32_45 = arith.constant 7 : i32
    %131 = arith.subi %c7_i32_45, %c4_i32 : i32
    %132 = arith.truncf %130 : vector<8x32xf32> to vector<8x32xbf16>
    %cst_46 = arith.constant dense<0.000000e+00> : vector<8x96xf32>
    %133 = tpu.matmul %132, %10, %cst_46 {dimension_numbers = #tpu.dot_dimension_numbers<[1], [0], [0], [1], [0, 0, 1, 1], [], []>} : vector<8x32xbf16>, vector<32x96xbf16>, vector<8x96xf32> -> vector<8x96xf32>
    %134 = arith.addf %133, %13 : vector<8x96xf32>
    %135 = arith.index_cast %131 : i32 to index
    %c0_47 = arith.constant 0 : index
    %c0_48 = arith.constant 0 : index
    %136 = vector.load %arg24[%135, %c0_47, %c0_48] : memref<8x8x96xf32, #tpu.memory_space<vmem>>, vector<1x8x96xf32>
    %137 = vector.shape_cast %136 : vector<1x8x96xf32> to vector<8x96xf32>
    %138 = vector.extract_strided_slice %137 {offsets = [0, 0], sizes = [8, 64], strides = [1, 1]} : vector<8x96xf32> to vector<8x64xf32>
    %139 = vector.extract_strided_slice %134 {offsets = [0, 0], sizes = [8, 64], strides = [1, 1]} : vector<8x96xf32> to vector<8x64xf32>
    %140 = arith.addf %138, %139 : vector<8x64xf32>
    %cst_49 = arith.constant 5.000000e-01 : f32
    %141 = vector.broadcast %cst_49 : f32 to vector<8x64xf32>
    %142 = arith.mulf %141, %140 : vector<8x64xf32>
    %143 = math.tanh %142 : vector<8x64xf32>
    %cst_50 = arith.constant 1.000000e+00 : f32
    %144 = vector.broadcast %cst_50 : f32 to vector<8x64xf32>
    %145 = arith.addf %143, %144 : vector<8x64xf32>
    %cst_51 = arith.constant 5.000000e-01 : f32
    %146 = vector.broadcast %cst_51 : f32 to vector<8x64xf32>
    %147 = arith.mulf %146, %145 : vector<8x64xf32>
    %148 = vector.extract_strided_slice %147 {offsets = [0, 0], sizes = [8, 32], strides = [1, 1]} : vector<8x64xf32> to vector<8x32xf32>
    %149 = vector.extract_strided_slice %147 {offsets = [0, 32], sizes = [8, 32], strides = [1, 1]} : vector<8x64xf32> to vector<8x32xf32>
    %150 = vector.extract_strided_slice %137 {offsets = [0, 64], sizes = [8, 32], strides = [1, 1]} : vector<8x96xf32> to vector<8x32xf32>
    %151 = vector.extract_strided_slice %134 {offsets = [0, 64], sizes = [8, 32], strides = [1, 1]} : vector<8x96xf32> to vector<8x32xf32>
    %152 = arith.mulf %148, %151 : vector<8x32xf32>
    %153 = arith.addf %150, %152 : vector<8x32xf32>
    %154 = math.tanh %153 : vector<8x32xf32>
    %cst_52 = arith.constant 1.000000e+00 : f32
    %155 = vector.broadcast %cst_52 : f32 to vector<8x32xf32>
    %156 = arith.subf %155, %149 : vector<8x32xf32>
    %157 = arith.mulf %156, %154 : vector<8x32xf32>
    %158 = arith.mulf %149, %130 : vector<8x32xf32>
    %159 = arith.addf %157, %158 : vector<8x32xf32>
    %c5_i32 = arith.constant 5 : i32
    %c7_i32_53 = arith.constant 7 : i32
    %160 = arith.subi %c7_i32_53, %c5_i32 : i32
    %161 = arith.truncf %159 : vector<8x32xf32> to vector<8x32xbf16>
    %cst_54 = arith.constant dense<0.000000e+00> : vector<8x96xf32>
    %162 = tpu.matmul %161, %10, %cst_54 {dimension_numbers = #tpu.dot_dimension_numbers<[1], [0], [0], [1], [0, 0, 1, 1], [], []>} : vector<8x32xbf16>, vector<32x96xbf16>, vector<8x96xf32> -> vector<8x96xf32>
    %163 = arith.addf %162, %13 : vector<8x96xf32>
    %164 = arith.index_cast %160 : i32 to index
    %c0_55 = arith.constant 0 : index
    %c0_56 = arith.constant 0 : index
    %165 = vector.load %arg24[%164, %c0_55, %c0_56] : memref<8x8x96xf32, #tpu.memory_space<vmem>>, vector<1x8x96xf32>
    %166 = vector.shape_cast %165 : vector<1x8x96xf32> to vector<8x96xf32>
    %167 = vector.extract_strided_slice %166 {offsets = [0, 0], sizes = [8, 64], strides = [1, 1]} : vector<8x96xf32> to vector<8x64xf32>
    %168 = vector.extract_strided_slice %163 {offsets = [0, 0], sizes = [8, 64], strides = [1, 1]} : vector<8x96xf32> to vector<8x64xf32>
    %169 = arith.addf %167, %168 : vector<8x64xf32>
    %cst_57 = arith.constant 5.000000e-01 : f32
    %170 = vector.broadcast %cst_57 : f32 to vector<8x64xf32>
    %171 = arith.mulf %170, %169 : vector<8x64xf32>
    %172 = math.tanh %171 : vector<8x64xf32>
    %cst_58 = arith.constant 1.000000e+00 : f32
    %173 = vector.broadcast %cst_58 : f32 to vector<8x64xf32>
    %174 = arith.addf %172, %173 : vector<8x64xf32>
    %cst_59 = arith.constant 5.000000e-01 : f32
    %175 = vector.broadcast %cst_59 : f32 to vector<8x64xf32>
    %176 = arith.mulf %175, %174 : vector<8x64xf32>
    %177 = vector.extract_strided_slice %176 {offsets = [0, 0], sizes = [8, 32], strides = [1, 1]} : vector<8x64xf32> to vector<8x32xf32>
    %178 = vector.extract_strided_slice %176 {offsets = [0, 32], sizes = [8, 32], strides = [1, 1]} : vector<8x64xf32> to vector<8x32xf32>
    %179 = vector.extract_strided_slice %166 {offsets = [0, 64], sizes = [8, 32], strides = [1, 1]} : vector<8x96xf32> to vector<8x32xf32>
    %180 = vector.extract_strided_slice %163 {offsets = [0, 64], sizes = [8, 32], strides = [1, 1]} : vector<8x96xf32> to vector<8x32xf32>
    %181 = arith.mulf %177, %180 : vector<8x32xf32>
    %182 = arith.addf %179, %181 : vector<8x32xf32>
    %183 = math.tanh %182 : vector<8x32xf32>
    %cst_60 = arith.constant 1.000000e+00 : f32
    %184 = vector.broadcast %cst_60 : f32 to vector<8x32xf32>
    %185 = arith.subf %184, %178 : vector<8x32xf32>
    %186 = arith.mulf %185, %183 : vector<8x32xf32>
    %187 = arith.mulf %178, %159 : vector<8x32xf32>
    %188 = arith.addf %186, %187 : vector<8x32xf32>
    %c6_i32 = arith.constant 6 : i32
    %c7_i32_61 = arith.constant 7 : i32
    %189 = arith.subi %c7_i32_61, %c6_i32 : i32
    %190 = arith.truncf %188 : vector<8x32xf32> to vector<8x32xbf16>
    %cst_62 = arith.constant dense<0.000000e+00> : vector<8x96xf32>
    %191 = tpu.matmul %190, %10, %cst_62 {dimension_numbers = #tpu.dot_dimension_numbers<[1], [0], [0], [1], [0, 0, 1, 1], [], []>} : vector<8x32xbf16>, vector<32x96xbf16>, vector<8x96xf32> -> vector<8x96xf32>
    %192 = arith.addf %191, %13 : vector<8x96xf32>
    %193 = arith.index_cast %189 : i32 to index
    %c0_63 = arith.constant 0 : index
    %c0_64 = arith.constant 0 : index
    %194 = vector.load %arg24[%193, %c0_63, %c0_64] : memref<8x8x96xf32, #tpu.memory_space<vmem>>, vector<1x8x96xf32>
    %195 = vector.shape_cast %194 : vector<1x8x96xf32> to vector<8x96xf32>
    %196 = vector.extract_strided_slice %195 {offsets = [0, 0], sizes = [8, 64], strides = [1, 1]} : vector<8x96xf32> to vector<8x64xf32>
    %197 = vector.extract_strided_slice %192 {offsets = [0, 0], sizes = [8, 64], strides = [1, 1]} : vector<8x96xf32> to vector<8x64xf32>
    %198 = arith.addf %196, %197 : vector<8x64xf32>
    %cst_65 = arith.constant 5.000000e-01 : f32
    %199 = vector.broadcast %cst_65 : f32 to vector<8x64xf32>
    %200 = arith.mulf %199, %198 : vector<8x64xf32>
    %201 = math.tanh %200 : vector<8x64xf32>
    %cst_66 = arith.constant 1.000000e+00 : f32
    %202 = vector.broadcast %cst_66 : f32 to vector<8x64xf32>
    %203 = arith.addf %201, %202 : vector<8x64xf32>
    %cst_67 = arith.constant 5.000000e-01 : f32
    %204 = vector.broadcast %cst_67 : f32 to vector<8x64xf32>
    %205 = arith.mulf %204, %203 : vector<8x64xf32>
    %206 = vector.extract_strided_slice %205 {offsets = [0, 0], sizes = [8, 32], strides = [1, 1]} : vector<8x64xf32> to vector<8x32xf32>
    %207 = vector.extract_strided_slice %205 {offsets = [0, 32], sizes = [8, 32], strides = [1, 1]} : vector<8x64xf32> to vector<8x32xf32>
    %208 = vector.extract_strided_slice %195 {offsets = [0, 64], sizes = [8, 32], strides = [1, 1]} : vector<8x96xf32> to vector<8x32xf32>
    %209 = vector.extract_strided_slice %192 {offsets = [0, 64], sizes = [8, 32], strides = [1, 1]} : vector<8x96xf32> to vector<8x32xf32>
    %210 = arith.mulf %206, %209 : vector<8x32xf32>
    %211 = arith.addf %208, %210 : vector<8x32xf32>
    %212 = math.tanh %211 : vector<8x32xf32>
    %cst_68 = arith.constant 1.000000e+00 : f32
    %213 = vector.broadcast %cst_68 : f32 to vector<8x32xf32>
    %214 = arith.subf %213, %207 : vector<8x32xf32>
    %215 = arith.mulf %214, %212 : vector<8x32xf32>
    %216 = arith.mulf %207, %188 : vector<8x32xf32>
    %217 = arith.addf %215, %216 : vector<8x32xf32>
    %c7_i32_69 = arith.constant 7 : i32
    %c7_i32_70 = arith.constant 7 : i32
    %218 = arith.subi %c7_i32_70, %c7_i32_69 : i32
    %219 = arith.truncf %217 : vector<8x32xf32> to vector<8x32xbf16>
    %cst_71 = arith.constant dense<0.000000e+00> : vector<8x96xf32>
    %220 = tpu.matmul %219, %10, %cst_71 {dimension_numbers = #tpu.dot_dimension_numbers<[1], [0], [0], [1], [0, 0, 1, 1], [], []>} : vector<8x32xbf16>, vector<32x96xbf16>, vector<8x96xf32> -> vector<8x96xf32>
    %221 = arith.addf %220, %13 : vector<8x96xf32>
    %222 = arith.index_cast %218 : i32 to index
    %c0_72 = arith.constant 0 : index
    %c0_73 = arith.constant 0 : index
    %223 = vector.load %arg24[%222, %c0_72, %c0_73] : memref<8x8x96xf32, #tpu.memory_space<vmem>>, vector<1x8x96xf32>
    %224 = vector.shape_cast %223 : vector<1x8x96xf32> to vector<8x96xf32>
    %225 = vector.extract_strided_slice %224 {offsets = [0, 0], sizes = [8, 64], strides = [1, 1]} : vector<8x96xf32> to vector<8x64xf32>
    %226 = vector.extract_strided_slice %221 {offsets = [0, 0], sizes = [8, 64], strides = [1, 1]} : vector<8x96xf32> to vector<8x64xf32>
    %227 = arith.addf %225, %226 : vector<8x64xf32>
    %cst_74 = arith.constant 5.000000e-01 : f32
    %228 = vector.broadcast %cst_74 : f32 to vector<8x64xf32>
    %229 = arith.mulf %228, %227 : vector<8x64xf32>
    %230 = math.tanh %229 : vector<8x64xf32>
    %cst_75 = arith.constant 1.000000e+00 : f32
    %231 = vector.broadcast %cst_75 : f32 to vector<8x64xf32>
    %232 = arith.addf %230, %231 : vector<8x64xf32>
    %cst_76 = arith.constant 5.000000e-01 : f32
    %233 = vector.broadcast %cst_76 : f32 to vector<8x64xf32>
    %234 = arith.mulf %233, %232 : vector<8x64xf32>
    %235 = vector.extract_strided_slice %234 {offsets = [0, 0], sizes = [8, 32], strides = [1, 1]} : vector<8x64xf32> to vector<8x32xf32>
    %236 = vector.extract_strided_slice %234 {offsets = [0, 32], sizes = [8, 32], strides = [1, 1]} : vector<8x64xf32> to vector<8x32xf32>
    %237 = vector.extract_strided_slice %224 {offsets = [0, 64], sizes = [8, 32], strides = [1, 1]} : vector<8x96xf32> to vector<8x32xf32>
    %238 = vector.extract_strided_slice %221 {offsets = [0, 64], sizes = [8, 32], strides = [1, 1]} : vector<8x96xf32> to vector<8x32xf32>
    %239 = arith.mulf %235, %238 : vector<8x32xf32>
    %240 = arith.addf %237, %239 : vector<8x32xf32>
    %241 = math.tanh %240 : vector<8x32xf32>
    %cst_77 = arith.constant 1.000000e+00 : f32
    %242 = vector.broadcast %cst_77 : f32 to vector<8x32xf32>
    %243 = arith.subf %242, %236 : vector<8x32xf32>
    %244 = arith.mulf %243, %241 : vector<8x32xf32>
    %245 = arith.mulf %236, %217 : vector<8x32xf32>
    %246 = arith.addf %244, %245 : vector<8x32xf32>
    %c8_i32 = arith.constant 8 : i32
    %247 = arith.truncf %246 : vector<8x32xf32> to vector<8x32xbf16>
    %c0_78 = arith.constant 0 : index
    %c0_79 = arith.constant 0 : index
    %248 = vector.load %arg7[%c0_78, %c0_79] : memref<32x8xbf16, #tpu.memory_space<vmem>>, vector<32x8xbf16>
    %cst_80 = arith.constant dense<0.000000e+00> : vector<8x8xf32>
    %249 = tpu.matmul %247, %248, %cst_80 {dimension_numbers = #tpu.dot_dimension_numbers<[1], [0], [0], [1], [0, 0, 1, 1], [], []>} : vector<8x32xbf16>, vector<32x8xbf16>, vector<8x8xf32> -> vector<8x8xf32>
    %c0_81 = arith.constant 0 : index
    %c0_82 = arith.constant 0 : index
    %250 = vector.load %arg8[%c0_81, %c0_82] : memref<1x8xf32, #tpu.memory_space<vmem>>, vector<1x8xf32>
    %251 = vector.broadcast %250 : vector<1x8xf32> to vector<8x8xf32>
    %252 = arith.addf %249, %251 : vector<8x8xf32>
    %c0_83 = arith.constant 0 : index
    %c0_84 = arith.constant 0 : index
    %253 = vector.load %arg9[%c0_83, %c0_84] : memref<32x8xbf16, #tpu.memory_space<vmem>>, vector<32x8xbf16>
    %cst_85 = arith.constant dense<0.000000e+00> : vector<8x8xf32>
    %254 = tpu.matmul %247, %253, %cst_85 {dimension_numbers = #tpu.dot_dimension_numbers<[1], [0], [0], [1], [0, 0, 1, 1], [], []>} : vector<8x32xbf16>, vector<32x8xbf16>, vector<8x8xf32> -> vector<8x8xf32>
    %c0_86 = arith.constant 0 : index
    %c0_87 = arith.constant 0 : index
    %255 = vector.load %arg10[%c0_86, %c0_87] : memref<1x8xf32, #tpu.memory_space<vmem>>, vector<1x8xf32>
    %256 = vector.broadcast %255 : vector<1x8xf32> to vector<8x8xf32>
    %257 = arith.addf %254, %256 : vector<8x8xf32>
    %cst_88 = arith.constant 0.000000e+00 : f32
    %258 = vector.broadcast %cst_88 : f32 to vector<8x8xf32>
    %259 = arith.maximumf %257, %258 : vector<8x8xf32>
    %260 = math.absf %257 : vector<8x8xf32>
    %cst_89 = arith.constant 0.000000e+00 : f32
    %261 = vector.broadcast %cst_89 : f32 to vector<8x8xf32>
    %262 = arith.subf %261, %260 : vector<8x8xf32>
    %263 = math.exp %262 : vector<8x8xf32>
    %cst_90 = arith.constant 1.000000e+00 : f32
    %264 = vector.broadcast %cst_90 : f32 to vector<8x8xf32>
    %265 = arith.addf %264, %263 : vector<8x8xf32>
    %266 = math.log %265 : vector<8x8xf32>
    %267 = arith.addf %259, %266 : vector<8x8xf32>
    %c0_91 = arith.constant 0 : index
    %c0_92 = arith.constant 0 : index
    %268 = vector.load %arg20[%c0_91, %c0_92] : memref<8x8xf32, #tpu.memory_space<vmem>>, vector<8x8xf32>
    tpu.vector_store %arg20[%c0_91, %c0_92], %252 {strides = array<i32>} : memref<8x8xf32, #tpu.memory_space<vmem>>, vector<8x8xf32>,
    %c0_93 = arith.constant 0 : index
    %c0_94 = arith.constant 0 : index
    %269 = vector.load %arg21[%c0_93, %c0_94] : memref<8x8xf32, #tpu.memory_space<vmem>>, vector<8x8xf32>
    tpu.vector_store %arg21[%c0_93, %c0_94], %267 {strides = array<i32>} : memref<8x8xf32, #tpu.memory_space<vmem>>, vector<8x8xf32>,
    %c0_95 = arith.constant 0 : index
    %c0_96 = arith.constant 0 : index
    %270 = vector.load %arg2[%c0_95, %c0_96] : memref<8x8xf32, #tpu.memory_space<vmem>>, vector<8x8xf32>
    %271 = arith.mulf %267, %270 : vector<8x8xf32>
    %272 = arith.addf %252, %271 : vector<8x8xf32>
    %273 = vector.extract_strided_slice %272 {offsets = [0, 0], sizes = [2, 8], strides = [1, 1]} : vector<8x8xf32> to vector<2x8xf32>
    %c0_97 = arith.constant 0 : index
    %c0_98 = arith.constant 0 : index
    %c0_99 = arith.constant 0 : index
    %274 = vector.load %arg22[%c0_97, %c0_98, %c0_99] : memref<8x8x8xf32, #tpu.memory_space<vmem>>, vector<1x2x8xf32>
    %275 = vector.shape_cast %274 : vector<1x2x8xf32> to vector<2x8xf32>
    %276 = vector.shape_cast %273 : vector<2x8xf32> to vector<1x2x8xf32>
    tpu.vector_store %arg22[%c0_97, %c0_98, %c0_99], %276 {strides = array<i32>} : memref<8x8x8xf32, #tpu.memory_space<vmem>>, vector<1x2x8xf32>,
    %c0_100 = arith.constant 0 : index
    %c2 = arith.constant 2 : index
    %c0_101 = arith.constant 0 : index
    %277 = vector.load %arg22[%c0_100, %c2, %c0_101] : memref<8x8x8xf32, #tpu.memory_space<vmem>>, vector<1x2x8xf32>
    %278 = vector.shape_cast %277 : vector<1x2x8xf32> to vector<2x8xf32>
    %279 = vector.shape_cast %273 : vector<2x8xf32> to vector<1x2x8xf32>
    tpu.vector_store %arg22[%c0_100, %c2, %c0_101], %279 {strides = array<i32>} : memref<8x8x8xf32, #tpu.memory_space<vmem>>, vector<1x2x8xf32>,
    %280 = vector.extract_strided_slice %272 {offsets = [0, 0], sizes = [1, 8], strides = [1, 1]} : vector<8x8xf32> to vector<1x8xf32>
    %281 = vector.shape_cast %280 : vector<1x8xf32> to vector<1x8xf32>
    %282 = vector.broadcast %281 : vector<1x8xf32> to vector<4x8xf32>
    %c0_102 = arith.constant 0 : index
    %c4 = arith.constant 4 : index
    %c0_103 = arith.constant 0 : index
    %283 = vector.load %arg22[%c0_102, %c4, %c0_103] : memref<8x8x8xf32, #tpu.memory_space<vmem>>, vector<1x4x8xf32>
    %284 = vector.shape_cast %283 : vector<1x4x8xf32> to vector<4x8xf32>
    %285 = vector.shape_cast %282 : vector<4x8xf32> to vector<1x4x8xf32>
    tpu.vector_store %arg22[%c0_102, %c4, %c0_103], %285 {strides = array<i32>} : memref<8x8x8xf32, #tpu.memory_space<vmem>>, vector<1x4x8xf32>,
    %c0_104 = arith.constant 0 : index
    %c0_105 = arith.constant 0 : index
    %c0_106 = arith.constant 0 : index
    %286 = vector.load %arg22[%c0_104, %c0_105, %c0_106] : memref<8x8x8xf32, #tpu.memory_space<vmem>>, vector<1x8x8xf32>
    %287 = vector.shape_cast %286 : vector<1x8x8xf32> to vector<8x8xf32>
    %c0_107 = arith.constant 0 : index
    %c0_108 = arith.constant 0 : index
    %c0_109 = arith.constant 0 : index
    %288 = vector.load %arg1[%c0_107, %c0_108, %c0_109] : memref<8x8x1xf32, #tpu.memory_space<vmem>>, vector<8x8x1xf32>
    %c0_110 = arith.constant 0 : index
    %c0_111 = arith.constant 0 : index
    %289 = vector.load %arg12[%c0_110, %c0_111] : memref<1x32xf32, #tpu.memory_space<vmem>>, vector<1x32xf32>
    %290 = vector.shape_cast %289 : vector<1x32xf32> to vector<1x1x32xf32>
    %291 = vector.broadcast %288 : vector<8x8x1xf32> to vector<8x8x32xf32>
    %292 = vector.broadcast %290 : vector<1x1x32xf32> to vector<8x8x32xf32>
    %293 = arith.mulf %291, %292 : vector<8x8x32xf32>
    %c0_112 = arith.constant 0 : index
    %c0_113 = arith.constant 0 : index
    %294 = vector.load %arg13[%c0_112, %c0_113] : memref<1x32xf32, #tpu.memory_space<vmem>>, vector<1x32xf32>
    %295 = vector.shape_cast %294 : vector<1x32xf32> to vector<1x1x32xf32>
    %296 = vector.broadcast %295 : vector<1x1x32xf32> to vector<8x8x32xf32>
    %297 = arith.addf %293, %296 : vector<8x8x32xf32>
    %c0_114 = arith.constant 0 : index
    %c0_115 = arith.constant 0 : index
    %c0_116 = arith.constant 0 : index
    %298 = vector.load %arg25[%c0_114, %c0_115, %c0_116] : memref<8x8x32xf32, #tpu.memory_space<vmem>>, vector<8x8x32xf32>
    tpu.vector_store %arg25[%c0_114, %c0_115, %c0_116], %297 {strides = array<i32>} : memref<8x8x32xf32, #tpu.memory_space<vmem>>, vector<8x8x32xf32>,
    %cst_117 = arith.constant 0.000000e+00 : f32
    %299 = vector.broadcast %cst_117 : f32 to vector<8x1xf32>
    %c0_118 = arith.constant 0 : index
    %c0_119 = arith.constant 0 : index
    %c0_120 = arith.constant 0 : index
    %300 = vector.load %arg26[%c0_118, %c0_119, %c0_120] : memref<8x8x1xf32, #tpu.memory_space<vmem>>, vector<1x8x1xf32>
    %301 = vector.shape_cast %300 : vector<1x8x1xf32> to vector<8x1xf32>
    %302 = vector.shape_cast %299 : vector<8x1xf32> to vector<1x8x1xf32>
    tpu.vector_store %arg26[%c0_118, %c0_119, %c0_120], %302 {strides = array<i32>} : memref<8x8x1xf32, #tpu.memory_space<vmem>>, vector<1x8x1xf32>,
    %303 = vector.extract_strided_slice %288 {offsets = [1, 0, 0], sizes = [7, 8, 1], strides = [1, 1, 1]} : vector<8x8x1xf32> to vector<7x8x1xf32>
    %304 = vector.extract_strided_slice %288 {offsets = [0, 0, 0], sizes = [7, 8, 1], strides = [1, 1, 1]} : vector<8x8x1xf32> to vector<7x8x1xf32>
    %305 = arith.subf %303, %304 : vector<7x8x1xf32>
    %c1 = arith.constant 1 : index
    %c0_121 = arith.constant 0 : index
    %c0_122 = arith.constant 0 : index
    %306 = vector.load %arg26[%c1, %c0_121, %c0_122] : memref<8x8x1xf32, #tpu.memory_space<vmem>>, vector<7x8x1xf32>
    tpu.vector_store %arg26[%c1, %c0_121, %c0_122], %305 {strides = array<i32>} : memref<8x8x1xf32, #tpu.memory_space<vmem>>, vector<7x8x1xf32>,
    %c0_123 = arith.constant 0 : index
    %c0_124 = arith.constant 0 : index
    %307 = vector.load %arg11[%c0_123, %c0_124] : memref<8x32xbf16, #tpu.memory_space<vmem>>, vector<8x32xbf16>
    %c0_125 = arith.constant 0 : index
    %c0_126 = arith.constant 0 : index
    %308 = vector.load %arg14[%c0_125, %c0_126] : memref<32x8xbf16, #tpu.memory_space<vmem>>, vector<32x8xbf16>
    %c0_127 = arith.constant 0 : index
    %c0_128 = arith.constant 0 : index
    %309 = vector.load %arg15[%c0_127, %c0_128] : memref<1x8xf32, #tpu.memory_space<vmem>>, vector<1x8xf32>
    %310 = vector.shape_cast %309 : vector<1x8xf32> to vector<1x8xf32>
    %311 = vector.broadcast %310 : vector<1x8xf32> to vector<8x8xf32>
    %c1_i32_129 = arith.constant 1 : i32
    %312 = arith.truncf %287 : vector<8x8xf32> to vector<8x8xbf16>
    %cst_130 = arith.constant dense<0.000000e+00> : vector<8x32xf32>
    %313 = tpu.matmul %312, %307, %cst_130 {dimension_numbers = #tpu.dot_dimension_numbers<[1], [0], [0], [1], [0, 0, 1, 1], [], []>} : vector<8x8xbf16>, vector<8x32xbf16>, vector<8x32xf32> -> vector<8x32xf32>
    %c1_i32_131 = arith.constant 1 : i32
    %314 = arith.subi %c1_i32_129, %c1_i32_131 : i32
    %315 = arith.index_cast %314 : i32 to index
    %c0_132 = arith.constant 0 : index
    %c0_133 = arith.constant 0 : index
    %316 = vector.load %arg25[%315, %c0_132, %c0_133] : memref<8x8x32xf32, #tpu.memory_space<vmem>>, vector<1x8x32xf32>
    %317 = vector.shape_cast %316 : vector<1x8x32xf32> to vector<8x32xf32>
    %318 = arith.addf %313, %317 : vector<8x32xf32>
    %319 = math.tanh %318 : vector<8x32xf32>
    %320 = arith.truncf %319 : vector<8x32xf32> to vector<8x32xbf16>
    %cst_134 = arith.constant dense<0.000000e+00> : vector<8x8xf32>
    %321 = tpu.matmul %320, %308, %cst_134 {dimension_numbers = #tpu.dot_dimension_numbers<[1], [0], [0], [1], [0, 0, 1, 1], [], []>} : vector<8x32xbf16>, vector<32x8xbf16>, vector<8x8xf32> -> vector<8x8xf32>
    %322 = arith.addf %321, %311 : vector<8x8xf32>
    %323 = arith.index_cast %c1_i32_129 : i32 to index
    %c0_135 = arith.constant 0 : index
    %c0_136 = arith.constant 0 : index
    %324 = vector.load %arg26[%323, %c0_135, %c0_136] : memref<8x8x1xf32, #tpu.memory_space<vmem>>, vector<1x8x1xf32>
    %325 = vector.shape_cast %324 : vector<1x8x1xf32> to vector<8x1xf32>
    %326 = vector.broadcast %325 : vector<8x1xf32> to vector<8x8xf32>
    %327 = arith.mulf %326, %322 : vector<8x8xf32>
    %328 = arith.addf %287, %327 : vector<8x8xf32>
    %329 = arith.index_cast %c1_i32_129 : i32 to index
    %c0_137 = arith.constant 0 : index
    %c0_138 = arith.constant 0 : index
    %330 = vector.load %arg22[%329, %c0_137, %c0_138] : memref<8x8x8xf32, #tpu.memory_space<vmem>>, vector<1x8x8xf32>
    %331 = vector.shape_cast %330 : vector<1x8x8xf32> to vector<8x8xf32>
    %332 = vector.shape_cast %328 : vector<8x8xf32> to vector<1x8x8xf32>
    tpu.vector_store %arg22[%329, %c0_137, %c0_138], %332 {strides = array<i32>} : memref<8x8x8xf32, #tpu.memory_space<vmem>>, vector<1x8x8xf32>,
    %c2_i32_139 = arith.constant 2 : i32
    %333 = arith.truncf %328 : vector<8x8xf32> to vector<8x8xbf16>
    %cst_140 = arith.constant dense<0.000000e+00> : vector<8x32xf32>
    %334 = tpu.matmul %333, %307, %cst_140 {dimension_numbers = #tpu.dot_dimension_numbers<[1], [0], [0], [1], [0, 0, 1, 1], [], []>} : vector<8x8xbf16>, vector<8x32xbf16>, vector<8x32xf32> -> vector<8x32xf32>
    %c1_i32_141 = arith.constant 1 : i32
    %335 = arith.subi %c2_i32_139, %c1_i32_141 : i32
    %336 = arith.index_cast %335 : i32 to index
    %c0_142 = arith.constant 0 : index
    %c0_143 = arith.constant 0 : index
    %337 = vector.load %arg25[%336, %c0_142, %c0_143] : memref<8x8x32xf32, #tpu.memory_space<vmem>>, vector<1x8x32xf32>
    %338 = vector.shape_cast %337 : vector<1x8x32xf32> to vector<8x32xf32>
    %339 = arith.addf %334, %338 : vector<8x32xf32>
    %340 = math.tanh %339 : vector<8x32xf32>
    %341 = arith.truncf %340 : vector<8x32xf32> to vector<8x32xbf16>
    %cst_144 = arith.constant dense<0.000000e+00> : vector<8x8xf32>
    %342 = tpu.matmul %341, %308, %cst_144 {dimension_numbers = #tpu.dot_dimension_numbers<[1], [0], [0], [1], [0, 0, 1, 1], [], []>} : vector<8x32xbf16>, vector<32x8xbf16>, vector<8x8xf32> -> vector<8x8xf32>
    %343 = arith.addf %342, %311 : vector<8x8xf32>
    %344 = arith.index_cast %c2_i32_139 : i32 to index
    %c0_145 = arith.constant 0 : index
    %c0_146 = arith.constant 0 : index
    %345 = vector.load %arg26[%344, %c0_145, %c0_146] : memref<8x8x1xf32, #tpu.memory_space<vmem>>, vector<1x8x1xf32>
    %346 = vector.shape_cast %345 : vector<1x8x1xf32> to vector<8x1xf32>
    %347 = vector.broadcast %346 : vector<8x1xf32> to vector<8x8xf32>
    %348 = arith.mulf %347, %343 : vector<8x8xf32>
    %349 = arith.addf %328, %348 : vector<8x8xf32>
    %350 = arith.index_cast %c2_i32_139 : i32 to index
    %c0_147 = arith.constant 0 : index
    %c0_148 = arith.constant 0 : index
    %351 = vector.load %arg22[%350, %c0_147, %c0_148] : memref<8x8x8xf32, #tpu.memory_space<vmem>>, vector<1x8x8xf32>
    %352 = vector.shape_cast %351 : vector<1x8x8xf32> to vector<8x8xf32>
    %353 = vector.shape_cast %349 : vector<8x8xf32> to vector<1x8x8xf32>
    tpu.vector_store %arg22[%350, %c0_147, %c0_148], %353 {strides = array<i32>} : memref<8x8x8xf32, #tpu.memory_space<vmem>>, vector<1x8x8xf32>,
    %c3_i32_149 = arith.constant 3 : i32
    %354 = arith.truncf %349 : vector<8x8xf32> to vector<8x8xbf16>
    %cst_150 = arith.constant dense<0.000000e+00> : vector<8x32xf32>
    %355 = tpu.matmul %354, %307, %cst_150 {dimension_numbers = #tpu.dot_dimension_numbers<[1], [0], [0], [1], [0, 0, 1, 1], [], []>} : vector<8x8xbf16>, vector<8x32xbf16>, vector<8x32xf32> -> vector<8x32xf32>
    %c1_i32_151 = arith.constant 1 : i32
    %356 = arith.subi %c3_i32_149, %c1_i32_151 : i32
    %357 = arith.index_cast %356 : i32 to index
    %c0_152 = arith.constant 0 : index
    %c0_153 = arith.constant 0 : index
    %358 = vector.load %arg25[%357, %c0_152, %c0_153] : memref<8x8x32xf32, #tpu.memory_space<vmem>>, vector<1x8x32xf32>
    %359 = vector.shape_cast %358 : vector<1x8x32xf32> to vector<8x32xf32>
    %360 = arith.addf %355, %359 : vector<8x32xf32>
    %361 = math.tanh %360 : vector<8x32xf32>
    %362 = arith.truncf %361 : vector<8x32xf32> to vector<8x32xbf16>
    %cst_154 = arith.constant dense<0.000000e+00> : vector<8x8xf32>
    %363 = tpu.matmul %362, %308, %cst_154 {dimension_numbers = #tpu.dot_dimension_numbers<[1], [0], [0], [1], [0, 0, 1, 1], [], []>} : vector<8x32xbf16>, vector<32x8xbf16>, vector<8x8xf32> -> vector<8x8xf32>
    %364 = arith.addf %363, %311 : vector<8x8xf32>
    %365 = arith.index_cast %c3_i32_149 : i32 to index
    %c0_155 = arith.constant 0 : index
    %c0_156 = arith.constant 0 : index
    %366 = vector.load %arg26[%365, %c0_155, %c0_156] : memref<8x8x1xf32, #tpu.memory_space<vmem>>, vector<1x8x1xf32>
    %367 = vector.shape_cast %366 : vector<1x8x1xf32> to vector<8x1xf32>
    %368 = vector.broadcast %367 : vector<8x1xf32> to vector<8x8xf32>
    %369 = arith.mulf %368, %364 : vector<8x8xf32>
    %370 = arith.addf %349, %369 : vector<8x8xf32>
    %371 = arith.index_cast %c3_i32_149 : i32 to index
    %c0_157 = arith.constant 0 : index
    %c0_158 = arith.constant 0 : index
    %372 = vector.load %arg22[%371, %c0_157, %c0_158] : memref<8x8x8xf32, #tpu.memory_space<vmem>>, vector<1x8x8xf32>
    %373 = vector.shape_cast %372 : vector<1x8x8xf32> to vector<8x8xf32>
    %374 = vector.shape_cast %370 : vector<8x8xf32> to vector<1x8x8xf32>
    tpu.vector_store %arg22[%371, %c0_157, %c0_158], %374 {strides = array<i32>} : memref<8x8x8xf32, #tpu.memory_space<vmem>>, vector<1x8x8xf32>,
    %c4_i32_159 = arith.constant 4 : i32
    %375 = arith.truncf %370 : vector<8x8xf32> to vector<8x8xbf16>
    %cst_160 = arith.constant dense<0.000000e+00> : vector<8x32xf32>
    %376 = tpu.matmul %375, %307, %cst_160 {dimension_numbers = #tpu.dot_dimension_numbers<[1], [0], [0], [1], [0, 0, 1, 1], [], []>} : vector<8x8xbf16>, vector<8x32xbf16>, vector<8x32xf32> -> vector<8x32xf32>
    %c1_i32_161 = arith.constant 1 : i32
    %377 = arith.subi %c4_i32_159, %c1_i32_161 : i32
    %378 = arith.index_cast %377 : i32 to index
    %c0_162 = arith.constant 0 : index
    %c0_163 = arith.constant 0 : index
    %379 = vector.load %arg25[%378, %c0_162, %c0_163] : memref<8x8x32xf32, #tpu.memory_space<vmem>>, vector<1x8x32xf32>
    %380 = vector.shape_cast %379 : vector<1x8x32xf32> to vector<8x32xf32>
    %381 = arith.addf %376, %380 : vector<8x32xf32>
    %382 = math.tanh %381 : vector<8x32xf32>
    %383 = arith.truncf %382 : vector<8x32xf32> to vector<8x32xbf16>
    %cst_164 = arith.constant dense<0.000000e+00> : vector<8x8xf32>
    %384 = tpu.matmul %383, %308, %cst_164 {dimension_numbers = #tpu.dot_dimension_numbers<[1], [0], [0], [1], [0, 0, 1, 1], [], []>} : vector<8x32xbf16>, vector<32x8xbf16>, vector<8x8xf32> -> vector<8x8xf32>
    %385 = arith.addf %384, %311 : vector<8x8xf32>
    %386 = arith.index_cast %c4_i32_159 : i32 to index
    %c0_165 = arith.constant 0 : index
    %c0_166 = arith.constant 0 : index
    %387 = vector.load %arg26[%386, %c0_165, %c0_166] : memref<8x8x1xf32, #tpu.memory_space<vmem>>, vector<1x8x1xf32>
    %388 = vector.shape_cast %387 : vector<1x8x1xf32> to vector<8x1xf32>
    %389 = vector.broadcast %388 : vector<8x1xf32> to vector<8x8xf32>
    %390 = arith.mulf %389, %385 : vector<8x8xf32>
    %391 = arith.addf %370, %390 : vector<8x8xf32>
    %392 = arith.index_cast %c4_i32_159 : i32 to index
    %c0_167 = arith.constant 0 : index
    %c0_168 = arith.constant 0 : index
    %393 = vector.load %arg22[%392, %c0_167, %c0_168] : memref<8x8x8xf32, #tpu.memory_space<vmem>>, vector<1x8x8xf32>
    %394 = vector.shape_cast %393 : vector<1x8x8xf32> to vector<8x8xf32>
    %395 = vector.shape_cast %391 : vector<8x8xf32> to vector<1x8x8xf32>
    tpu.vector_store %arg22[%392, %c0_167, %c0_168], %395 {strides = array<i32>} : memref<8x8x8xf32, #tpu.memory_space<vmem>>, vector<1x8x8xf32>,
    %c5_i32_169 = arith.constant 5 : i32
    %396 = arith.truncf %391 : vector<8x8xf32> to vector<8x8xbf16>
    %cst_170 = arith.constant dense<0.000000e+00> : vector<8x32xf32>
    %397 = tpu.matmul %396, %307, %cst_170 {dimension_numbers = #tpu.dot_dimension_numbers<[1], [0], [0], [1], [0, 0, 1, 1], [], []>} : vector<8x8xbf16>, vector<8x32xbf16>, vector<8x32xf32> -> vector<8x32xf32>
    %c1_i32_171 = arith.constant 1 : i32
    %398 = arith.subi %c5_i32_169, %c1_i32_171 : i32
    %399 = arith.index_cast %398 : i32 to index
    %c0_172 = arith.constant 0 : index
    %c0_173 = arith.constant 0 : index
    %400 = vector.load %arg25[%399, %c0_172, %c0_173] : memref<8x8x32xf32, #tpu.memory_space<vmem>>, vector<1x8x32xf32>
    %401 = vector.shape_cast %400 : vector<1x8x32xf32> to vector<8x32xf32>
    %402 = arith.addf %397, %401 : vector<8x32xf32>
    %403 = math.tanh %402 : vector<8x32xf32>
    %404 = arith.truncf %403 : vector<8x32xf32> to vector<8x32xbf16>
    %cst_174 = arith.constant dense<0.000000e+00> : vector<8x8xf32>
    %405 = tpu.matmul %404, %308, %cst_174 {dimension_numbers = #tpu.dot_dimension_numbers<[1], [0], [0], [1], [0, 0, 1, 1], [], []>} : vector<8x32xbf16>, vector<32x8xbf16>, vector<8x8xf32> -> vector<8x8xf32>
    %406 = arith.addf %405, %311 : vector<8x8xf32>
    %407 = arith.index_cast %c5_i32_169 : i32 to index
    %c0_175 = arith.constant 0 : index
    %c0_176 = arith.constant 0 : index
    %408 = vector.load %arg26[%407, %c0_175, %c0_176] : memref<8x8x1xf32, #tpu.memory_space<vmem>>, vector<1x8x1xf32>
    %409 = vector.shape_cast %408 : vector<1x8x1xf32> to vector<8x1xf32>
    %410 = vector.broadcast %409 : vector<8x1xf32> to vector<8x8xf32>
    %411 = arith.mulf %410, %406 : vector<8x8xf32>
    %412 = arith.addf %391, %411 : vector<8x8xf32>
    %413 = arith.index_cast %c5_i32_169 : i32 to index
    %c0_177 = arith.constant 0 : index
    %c0_178 = arith.constant 0 : index
    %414 = vector.load %arg22[%413, %c0_177, %c0_178] : memref<8x8x8xf32, #tpu.memory_space<vmem>>, vector<1x8x8xf32>
    %415 = vector.shape_cast %414 : vector<1x8x8xf32> to vector<8x8xf32>
    %416 = vector.shape_cast %412 : vector<8x8xf32> to vector<1x8x8xf32>
    tpu.vector_store %arg22[%413, %c0_177, %c0_178], %416 {strides = array<i32>} : memref<8x8x8xf32, #tpu.memory_space<vmem>>, vector<1x8x8xf32>,
    %c6_i32_179 = arith.constant 6 : i32
    %417 = arith.truncf %412 : vector<8x8xf32> to vector<8x8xbf16>
    %cst_180 = arith.constant dense<0.000000e+00> : vector<8x32xf32>
    %418 = tpu.matmul %417, %307, %cst_180 {dimension_numbers = #tpu.dot_dimension_numbers<[1], [0], [0], [1], [0, 0, 1, 1], [], []>} : vector<8x8xbf16>, vector<8x32xbf16>, vector<8x32xf32> -> vector<8x32xf32>
    %c1_i32_181 = arith.constant 1 : i32
    %419 = arith.subi %c6_i32_179, %c1_i32_181 : i32
    %420 = arith.index_cast %419 : i32 to index
    %c0_182 = arith.constant 0 : index
    %c0_183 = arith.constant 0 : index
    %421 = vector.load %arg25[%420, %c0_182, %c0_183] : memref<8x8x32xf32, #tpu.memory_space<vmem>>, vector<1x8x32xf32>
    %422 = vector.shape_cast %421 : vector<1x8x32xf32> to vector<8x32xf32>
    %423 = arith.addf %418, %422 : vector<8x32xf32>
    %424 = math.tanh %423 : vector<8x32xf32>
    %425 = arith.truncf %424 : vector<8x32xf32> to vector<8x32xbf16>
    %cst_184 = arith.constant dense<0.000000e+00> : vector<8x8xf32>
    %426 = tpu.matmul %425, %308, %cst_184 {dimension_numbers = #tpu.dot_dimension_numbers<[1], [0], [0], [1], [0, 0, 1, 1], [], []>} : vector<8x32xbf16>, vector<32x8xbf16>, vector<8x8xf32> -> vector<8x8xf32>
    %427 = arith.addf %426, %311 : vector<8x8xf32>
    %428 = arith.index_cast %c6_i32_179 : i32 to index
    %c0_185 = arith.constant 0 : index
    %c0_186 = arith.constant 0 : index
    %429 = vector.load %arg26[%428, %c0_185, %c0_186] : memref<8x8x1xf32, #tpu.memory_space<vmem>>, vector<1x8x1xf32>
    %430 = vector.shape_cast %429 : vector<1x8x1xf32> to vector<8x1xf32>
    %431 = vector.broadcast %430 : vector<8x1xf32> to vector<8x8xf32>
    %432 = arith.mulf %431, %427 : vector<8x8xf32>
    %433 = arith.addf %412, %432 : vector<8x8xf32>
    %434 = arith.index_cast %c6_i32_179 : i32 to index
    %c0_187 = arith.constant 0 : index
    %c0_188 = arith.constant 0 : index
    %435 = vector.load %arg22[%434, %c0_187, %c0_188] : memref<8x8x8xf32, #tpu.memory_space<vmem>>, vector<1x8x8xf32>
    %436 = vector.shape_cast %435 : vector<1x8x8xf32> to vector<8x8xf32>
    %437 = vector.shape_cast %433 : vector<8x8xf32> to vector<1x8x8xf32>
    tpu.vector_store %arg22[%434, %c0_187, %c0_188], %437 {strides = array<i32>} : memref<8x8x8xf32, #tpu.memory_space<vmem>>, vector<1x8x8xf32>,
    %c7_i32_189 = arith.constant 7 : i32
    %438 = arith.truncf %433 : vector<8x8xf32> to vector<8x8xbf16>
    %cst_190 = arith.constant dense<0.000000e+00> : vector<8x32xf32>
    %439 = tpu.matmul %438, %307, %cst_190 {dimension_numbers = #tpu.dot_dimension_numbers<[1], [0], [0], [1], [0, 0, 1, 1], [], []>} : vector<8x8xbf16>, vector<8x32xbf16>, vector<8x32xf32> -> vector<8x32xf32>
    %c1_i32_191 = arith.constant 1 : i32
    %440 = arith.subi %c7_i32_189, %c1_i32_191 : i32
    %441 = arith.index_cast %440 : i32 to index
    %c0_192 = arith.constant 0 : index
    %c0_193 = arith.constant 0 : index
    %442 = vector.load %arg25[%441, %c0_192, %c0_193] : memref<8x8x32xf32, #tpu.memory_space<vmem>>, vector<1x8x32xf32>
    %443 = vector.shape_cast %442 : vector<1x8x32xf32> to vector<8x32xf32>
    %444 = arith.addf %439, %443 : vector<8x32xf32>
    %445 = math.tanh %444 : vector<8x32xf32>
    %446 = arith.truncf %445 : vector<8x32xf32> to vector<8x32xbf16>
    %cst_194 = arith.constant dense<0.000000e+00> : vector<8x8xf32>
    %447 = tpu.matmul %446, %308, %cst_194 {dimension_numbers = #tpu.dot_dimension_numbers<[1], [0], [0], [1], [0, 0, 1, 1], [], []>} : vector<8x32xbf16>, vector<32x8xbf16>, vector<8x8xf32> -> vector<8x8xf32>
    %448 = arith.addf %447, %311 : vector<8x8xf32>
    %449 = arith.index_cast %c7_i32_189 : i32 to index
    %c0_195 = arith.constant 0 : index
    %c0_196 = arith.constant 0 : index
    %450 = vector.load %arg26[%449, %c0_195, %c0_196] : memref<8x8x1xf32, #tpu.memory_space<vmem>>, vector<1x8x1xf32>
    %451 = vector.shape_cast %450 : vector<1x8x1xf32> to vector<8x1xf32>
    %452 = vector.broadcast %451 : vector<8x1xf32> to vector<8x8xf32>
    %453 = arith.mulf %452, %448 : vector<8x8xf32>
    %454 = arith.addf %433, %453 : vector<8x8xf32>
    %455 = arith.index_cast %c7_i32_189 : i32 to index
    %c0_197 = arith.constant 0 : index
    %c0_198 = arith.constant 0 : index
    %456 = vector.load %arg22[%455, %c0_197, %c0_198] : memref<8x8x8xf32, #tpu.memory_space<vmem>>, vector<1x8x8xf32>
    %457 = vector.shape_cast %456 : vector<1x8x8xf32> to vector<8x8xf32>
    %458 = vector.shape_cast %454 : vector<8x8xf32> to vector<1x8x8xf32>
    tpu.vector_store %arg22[%455, %c0_197, %c0_198], %458 {strides = array<i32>} : memref<8x8x8xf32, #tpu.memory_space<vmem>>, vector<1x8x8xf32>,
    %c7_i32_199 = arith.constant 7 : i32
    %c0_200 = arith.constant 0 : index
    %c0_201 = arith.constant 0 : index
    %c0_202 = arith.constant 0 : index
    %459 = vector.load %arg22[%c0_200, %c0_201, %c0_202] : memref<8x8x8xf32, #tpu.memory_space<vmem>>, vector<8x8x8xf32>
    %460 = vector.shape_cast %459 : vector<8x8x8xf32> to vector<64x8xf32>
    %461 = arith.truncf %460 : vector<64x8xf32> to vector<64x8xbf16>
    %c0_203 = arith.constant 0 : index
    %c0_204 = arith.constant 0 : index
    %462 = vector.load %arg16[%c0_203, %c0_204] : memref<8x32xbf16, #tpu.memory_space<vmem>>, vector<8x32xbf16>
    %cst_205 = arith.constant dense<0.000000e+00> : vector<64x32xf32>
    %463 = tpu.matmul %461, %462, %cst_205 {dimension_numbers = #tpu.dot_dimension_numbers<[1], [0], [0], [1], [0, 0, 1, 1], [], []>} : vector<64x8xbf16>, vector<8x32xbf16>, vector<64x32xf32> -> vector<64x32xf32>
    %c0_206 = arith.constant 0 : index
    %c0_207 = arith.constant 0 : index
    %464 = vector.load %arg17[%c0_206, %c0_207] : memref<1x32xf32, #tpu.memory_space<vmem>>, vector<1x32xf32>
    %465 = vector.broadcast %464 : vector<1x32xf32> to vector<64x32xf32>
    %466 = arith.addf %463, %465 : vector<64x32xf32>
    %cst_208 = arith.constant 0.000000e+00 : f32
    %467 = vector.broadcast %cst_208 : f32 to vector<64x32xf32>
    %468 = arith.maximumf %466, %467 : vector<64x32xf32>
    %469 = arith.truncf %468 : vector<64x32xf32> to vector<64x32xbf16>
    %c0_209 = arith.constant 0 : index
    %c0_210 = arith.constant 0 : index
    %470 = vector.load %arg18[%c0_209, %c0_210] : memref<32x128xbf16, #tpu.memory_space<vmem>>, vector<32x128xbf16>
    %cst_211 = arith.constant dense<0.000000e+00> : vector<64x128xf32>
    %471 = tpu.matmul %469, %470, %cst_211 {dimension_numbers = #tpu.dot_dimension_numbers<[1], [0], [0], [1], [0, 0, 1, 1], [], []>} : vector<64x32xbf16>, vector<32x128xbf16>, vector<64x128xf32> -> vector<64x128xf32>
    %c0_212 = arith.constant 0 : index
    %c0_213 = arith.constant 0 : index
    %472 = vector.load %arg19[%c0_212, %c0_213] : memref<1x128xf32, #tpu.memory_space<vmem>>, vector<1x128xf32>
    %473 = vector.broadcast %472 : vector<1x128xf32> to vector<64x128xf32>
    %474 = arith.addf %471, %473 : vector<64x128xf32>
    %c0_214 = arith.constant 0 : index
    %c0_215 = arith.constant 0 : index
    %475 = vector.load %arg23[%c0_214, %c0_215] : memref<64x128xf32, #tpu.memory_space<vmem>>, vector<64x128xf32>
    tpu.vector_store %arg23[%c0_214, %c0_215], %474 {strides = array<i32>} : memref<64x128xf32, #tpu.memory_space<vmem>>, vector<64x128xf32>,
    return
  }
}

</mosaic_0001>

<llo_original>
// kernel: latent_ode_forward.1
$region0: #{latent_ode_forward.1}
  #allocation0 [shape = 'u32[]', space=smem, size = 0x4, offset = 0x4, fixed_abs, tag = 'smem constant byte address 0x4 - core index']
  #allocation1 [shape = 'u32[144,128]{1,0:T(1,128)}', space=vmem, size = 0x12000, scoped, tag = 'internal scratch']
  #allocation2 [shape = 'f32[8,8,96]{2,1,0:T(8,128)}', space=vmem, size = 0x8000, scoped, tag = 'scratch operand']
  #allocation3 [shape = 'f32[8,8,32]{2,1,0:T(8,128)}', space=vmem, size = 0x8000, scoped, tag = 'scratch operand']
  #allocation4 [shape = 'f32[8,8,1]{2,1,0:T(8,128)}', space=vmem, size = 0x8000, scoped, tag = 'scratch operand']
  %s0 = inlined_call_operand.vmem [shape: f32[8,8,5], index: 0, kind: input, shape index: {}]
  %s1 = inlined_call_operand.vmem [shape: f32[8,8,1], index: 1, kind: input, shape index: {}]
  %s2 = inlined_call_operand.vmem [shape: f32[8,8], index: 2, kind: input, shape index: {}]
  %s3 = inlined_call_operand.vmem [shape: bf16[5,96], index: 3, kind: input, shape index: {}]
  %s4 = inlined_call_operand.vmem [shape: f32[1,96], index: 4, kind: input, shape index: {}]
  %s5 = inlined_call_operand.vmem [shape: bf16[32,96], index: 5, kind: input, shape index: {}]
  %s6 = inlined_call_operand.vmem [shape: f32[1,96], index: 6, kind: input, shape index: {}]
  %s7 = inlined_call_operand.vmem [shape: bf16[32,8], index: 7, kind: input, shape index: {}]
  %s8 = inlined_call_operand.vmem [shape: f32[1,8], index: 8, kind: input, shape index: {}]
  %s9 = inlined_call_operand.vmem [shape: bf16[32,8], index: 9, kind: input, shape index: {}]
  %s10 = inlined_call_operand.vmem [shape: f32[1,8], index: 10, kind: input, shape index: {}]
  %s11 = inlined_call_operand.vmem [shape: bf16[8,32], index: 11, kind: input, shape index: {}]
  %s12 = inlined_call_operand.vmem [shape: f32[1,32], index: 12, kind: input, shape index: {}]
  %s13 = inlined_call_operand.vmem [shape: f32[1,32], index: 13, kind: input, shape index: {}]
  %s14 = inlined_call_operand.vmem [shape: bf16[32,8], index: 14, kind: input, shape index: {}]
  %s15 = inlined_call_operand.vmem [shape: f32[1,8], index: 15, kind: input, shape index: {}]
  %s16 = inlined_call_operand.vmem [shape: bf16[8,32], index: 16, kind: input, shape index: {}]
  %s17 = inlined_call_operand.vmem [shape: f32[1,32], index: 17, kind: input, shape index: {}]
  %s18 = inlined_call_operand.vmem [shape: bf16[32,128], index: 18, kind: input, shape index: {}]
  %s19 = inlined_call_operand.vmem [shape: f32[1,128], index: 19, kind: input, shape index: {}]
  %s20 = inlined_call_operand.vmem [shape: f32[8,8], index: 20, kind: output, shape index: {0}]
  %s21 = inlined_call_operand.vmem [shape: f32[8,8], index: 21, kind: output, shape index: {1}]
  %s22 = inlined_call_operand.vmem [shape: f32[8,8,8], index: 22, kind: output, shape index: {2}]
  %s23 = inlined_call_operand.vmem [shape: f32[64,128], index: 23, kind: output, shape index: {3}]
  %24 = xla_tuple %s20, %s21, %s22, %s23
  %s25 = sld [smem:[#allocation0]]
  $region114: #{latent_ode_forward.1} parent=0
    _
  %s27 = ssub.s32 1, %s25
  %s28 = scalar_select 0, %s27, %s25
  // Predicated region
  $region2: #{latent_ode_forward.1} parent=0 // pred_check
    _
  $region3: #{latent_ode_forward.1} parent=0 // pred_check_branch
    %30 = sbr.rel (0) target = $region5
  $region4: #{latent_ode_forward.1} parent=0 // pred_region
    _
  $region5: #{latent_ode_forward.1} parent=0 // pred_fallthru
    _
  // Predicated region
  $region6: #{latent_ode_forward.1} parent=0 // pred_check
    _
  $region7: #{latent_ode_forward.1} parent=0 // pred_check_branch
    %32 = sbr.rel (0) target = $region9
  $region8: #{latent_ode_forward.1} parent=0 // pred_region
    _
  $region9: #{latent_ode_forward.1} parent=0 // pred_fallthru
    _
  // Predicated region
  $region10: #{latent_ode_forward.1} parent=0 // pred_check
    _
  $region11: #{latent_ode_forward.1} parent=0 // pred_check_branch
    %34 = sbr.rel (0) target = $region13
  $region12: #{latent_ode_forward.1} parent=0 // pred_region
    _
  $region13: #{latent_ode_forward.1} parent=0 // pred_fallthru
    _
  // Predicated region
  $region14: #{latent_ode_forward.1} parent=0 // pred_check
    _
  $region15: #{latent_ode_forward.1} parent=0 // pred_check_branch
    %36 = sbr.rel (0) target = $region17
  $region16: #{latent_ode_forward.1} parent=0 // pred_region
    _
  $region17: #{latent_ode_forward.1} parent=0 // pred_fallthru
    _
  // Predicated region
  $region18: #{latent_ode_forward.1} parent=0 // pred_check
    _
  $region19: #{latent_ode_forward.1} parent=0 // pred_check_branch
    %38 = sbr.rel (0) target = $region21
  $region20: #{latent_ode_forward.1} parent=0 // pred_region
    _
  $region21: #{latent_ode_forward.1} parent=0 // pred_fallthru
    _
  // Predicated region
  $region22: #{latent_ode_forward.1} parent=0 // pred_check
    _
  $region23: #{latent_ode_forward.1} parent=0 // pred_check_branch
    %40 = sbr.rel (0) target = $region25
  $region24: #{latent_ode_forward.1} parent=0 // pred_region
    _
  $region25: #{latent_ode_forward.1} parent=0 // pred_fallthru
    _
  // Predicated region
  $region26: #{latent_ode_forward.1} parent=0 // pred_check
    _
  $region27: #{latent_ode_forward.1} parent=0 // pred_check_branch
    %42 = sbr.rel (0) target = $region29
  $region28: #{latent_ode_forward.1} parent=0 // pred_region
    _
  $region29: #{latent_ode_forward.1} parent=0 // pred_fallthru
    _
  // Predicated region
  $region30: #{latent_ode_forward.1} parent=0 // pred_check
    _
  $region31: #{latent_ode_forward.1} parent=0 // pred_check_branch
    %44 = sbr.rel (0) target = $region33
  $region32: #{latent_ode_forward.1} parent=0 // pred_region
    _
  $region33: #{latent_ode_forward.1} parent=0 // pred_fallthru
    _
  // Predicated region
  $region34: #{latent_ode_forward.1} parent=0 // pred_check
    _
  $region35: #{latent_ode_forward.1} parent=0 // pred_check_branch
    %46 = sbr.rel (0) target = $region37
  $region36: #{latent_ode_forward.1} parent=0 // pred_region
    _
  $region37: #{latent_ode_forward.1} parent=0 // pred_fallthru
    _
  // Predicated region
  $region38: #{latent_ode_forward.1} parent=0 // pred_check
    _
  $region39: #{latent_ode_forward.1} parent=0 // pred_check_branch
    %48 = sbr.rel (0) target = $region41
  $region40: #{latent_ode_forward.1} parent=0 // pred_region
    _
  $region41: #{latent_ode_forward.1} parent=0 // pred_fallthru
    _
  // Predicated region
  $region42: #{latent_ode_forward.1} parent=0 // pred_check
    _
  $region43: #{latent_ode_forward.1} parent=0 // pred_check_branch
    %50 = sbr.rel (0) target = $region45
  $region44: #{latent_ode_forward.1} parent=0 // pred_region
    _
  $region45: #{latent_ode_forward.1} parent=0 // pred_fallthru
    _
  // Predicated region
  $region46: #{latent_ode_forward.1} parent=0 // pred_check
    _
  $region47: #{latent_ode_forward.1} parent=0 // pred_check_branch
    %52 = sbr.rel (0) target = $region49
  $region48: #{latent_ode_forward.1} parent=0 // pred_region
    _
  $region49: #{latent_ode_forward.1} parent=0 // pred_fallthru
    _
  // Predicated region
  $region50: #{latent_ode_forward.1} parent=0 // pred_check
    _
  $region51: #{latent_ode_forward.1} parent=0 // pred_check_branch
    %54 = sbr.rel (0) target = $region53
  $region52: #{latent_ode_forward.1} parent=0 // pred_region
    _
  $region53: #{latent_ode_forward.1} parent=0 // pred_fallthru
    _
  // Predicated region
  $region54: #{latent_ode_forward.1} parent=0 // pred_check
    _
  $region55: #{latent_ode_forward.1} parent=0 // pred_check_branch
    %56 = sbr.rel (0) target = $region57
  $region56: #{latent_ode_forward.1} parent=0 // pred_region
    _
  $region57: #{latent_ode_forward.1} parent=0 // pred_fallthru
    _
  // Predicated region
  $region58: #{latent_ode_forward.1} parent=0 // pred_check
    _
  $region59: #{latent_ode_forward.1} parent=0 // pred_check_branch
    %58 = sbr.rel (0) target = $region61
  $region60: #{latent_ode_forward.1} parent=0 // pred_region
    _
  $region61: #{latent_ode_forward.1} parent=0 // pred_fallthru
    _
  // Predicated region
  $region62: #{latent_ode_forward.1} parent=0 // pred_check
    _
  $region63: #{latent_ode_forward.1} parent=0 // pred_check_branch
    %60 = sbr.rel (0) target = $region65
  $region64: #{latent_ode_forward.1} parent=0 // pred_region
    _
  $region65: #{latent_ode_forward.1} parent=0 // pred_fallthru
    _
  // Predicated region
  $region66: #{latent_ode_forward.1} parent=0 // pred_check
    _
  $region67: #{latent_ode_forward.1} parent=0 // pred_check_branch
    %62 = sbr.rel (0) target = $region69
  $region68: #{latent_ode_forward.1} parent=0 // pred_region
    _
  $region69: #{latent_ode_forward.1} parent=0 // pred_fallthru
    _
  // Predicated region
  $region70: #{latent_ode_forward.1} parent=0 // pred_check
    _
  $region71: #{latent_ode_forward.1} parent=0 // pred_check_branch
    %64 = sbr.rel (0) target = $region73
  $region72: #{latent_ode_forward.1} parent=0 // pred_region
    _
  $region73: #{latent_ode_forward.1} parent=0 // pred_fallthru
    _
  // Predicated region
  $region74: #{latent_ode_forward.1} parent=0 // pred_check
    _
  $region75: #{latent_ode_forward.1} parent=0 // pred_check_branch
    %66 = sbr.rel (0) target = $region77
  $region76: #{latent_ode_forward.1} parent=0 // pred_region
    _
  $region77: #{latent_ode_forward.1} parent=0 // pred_fallthru
    _
  // Predicated region
  $region78: #{latent_ode_forward.1} parent=0 // pred_check
    _
  $region79: #{latent_ode_forward.1} parent=0 // pred_check_branch
    %68 = sbr.rel (0) target = $region81
  $region80: #{latent_ode_forward.1} parent=0 // pred_region
    _
  $region81: #{latent_ode_forward.1} parent=0 // pred_fallthru
    _
  %v70 = vld [vmem:[%s0] sm:$0xff]
  %v71 = vld [vmem:[%s0 + $0x8] sm:$0xff]
  %v72 = vld [vmem:[%s0 + $0x10] sm:$0xff]
  %v73 = vld [vmem:[%s0 + $0x18] sm:$0xff]
  %v74 = vld [vmem:[%s0 + $0x20] sm:$0xff]
  %v75 = vld [vmem:[%s0 + $0x28] sm:$0xff]
  %v76 = vld [vmem:[%s0 + $0x30] sm:$0xff]
  %v77 = vld [vmem:[%s0 + $0x38] sm:$0xff]
  %v78 = vpack.c.bf16 %v71, %v70
  %v79 = vpack.c.bf16 %v73, %v72
  %v80 = vpack.c.bf16 %v75, %v74
  %v81 = vpack.c.bf16 %v77, %v76
  %v82 = vld [vmem:[%s3] sm:$0x7]
  %v83 = vld [vmem:[%s4] sm:$0x1]
  %v85 = vlaneseq
  %v86 = vshrl.u32 %v85, 7
  %v87 = vsub.s32 0, %v86
  %v88 = vrot.slane %v83, %v87
  %vm90 = vcmask 39936
  %v92 = vsel %vm90, %v78, 0
  %v95 = vsel %vm90, %v79, 0
  %v98 = vsel %vm90, %v80, 0
  %v101 = vsel %vm90, %v81, 0
  %vm103 = vcmask 1041408
  %vm104 = vcmask 1042432
  %v105 = vsel %vm103, 4294967295, 65535
  %v106 = vsel %vm104, %v105, 0
  %v108 = vand.u32 %v82, %v106
  %110 = vmatprep.subr.bf16.mxu0 0
  %111 = vmatpush1.bf16.msra.mxu0 %v108
  %112 = vmatprep.subr.bf16.mxu0 0
  %113 = vmatpush1.bf16.msra.mxu0 0
  %114 = vmatprep.subr.bf16.mxu0 0
  %115 = vmatpush1.bf16.msra.mxu0 0
  %116 = vmatprep.subr.bf16.mxu0 0
  %117 = vmatpush1.bf16.msra.mxu0 0
  %118 = vmatprep.subr.bf16.mxu0 0
  %119 = vmatpush1.bf16.msra.mxu0 0
  %120 = vmatprep.subr.bf16.mxu0 0
  %121 = vmatpush1.bf16.msra.mxu0 0
  %122 = vmatprep.subr.bf16.mxu0 0
  %123 = vmatpush1.bf16.msra.mxu0 0
  %124 = vmatprep.subr.bf16.mxu0 0
  %125 = vmatpush1.bf16.msra.mxu0 0
  %126 = vmatprep.subr.bf16.mxu0 0
  %127 = vmatpush1.bf16.msra.mxu0 0
  %128 = vmatprep.subr.bf16.mxu0 0
  %129 = vmatpush1.bf16.msra.mxu0 0
  %130 = vmatprep.subr.bf16.mxu0 0
  %131 = vmatpush1.bf16.msra.mxu0 0
  %132 = vmatprep.subr.bf16.mxu0 0
  %133 = vmatpush1.bf16.msra.mxu0 0
  %134 = vmatprep.subr.bf16.mxu0 0
  %135 = vmatpush1.bf16.msra.mxu0 0
  %136 = vmatprep.subr.bf16.mxu0 0
  %137 = vmatpush1.bf16.msra.mxu0 0
  %138 = vmatprep.subr.bf16.mxu0 0
  %139 = vmatpush1.bf16.msra.mxu0 0
  %140 = vmatprep.subr.bf16.mxu0 0
  %141 = vmatpush1.bf16.msra.mxu0 0
  %142 = vmatprep.mubr.bf16.mxu0 0
  %143 = vmatmul.mubr.bf16.gmra.mrb[0].mxu0 %v92
  %v144 = vpop.f32.mrb[0].mxu0
  %v145 = vadd.f32 %v88, %v144
  %v146 = vpop.f32.mrb[0].mxu0
  %v147 = vpop.f32.mrb[0].mxu0
  %v148 = vadd.f32 %v88, %v147
  %v149 = vpop.f32.mrb[0].mxu0
  %150 = vmatprep.mubr.bf16.mxu0 0
  %151 = vmatmul.mubr.bf16.gmra.mrb[0].mxu0 %v95
  %v152 = vpop.f32.mrb[0].mxu0
  %v153 = vadd.f32 %v88, %v152
  %v154 = vpop.f32.mrb[0].mxu0
  %v155 = vpop.f32.mrb[0].mxu0
  %v156 = vadd.f32 %v88, %v155
  %v157 = vpop.f32.mrb[0].mxu0
  %158 = vmatprep.mubr.bf16.mxu0 0
  %159 = vmatmul.mubr.bf16.gmra.mrb[0].mxu0 %v98
  %v160 = vpop.f32.mrb[0].mxu0
  %v161 = vadd.f32 %v88, %v160
  %v162 = vpop.f32.mrb[0].mxu0
  %v163 = vpop.f32.mrb[0].mxu0
  %v164 = vadd.f32 %v88, %v163
  %v165 = vpop.f32.mrb[0].mxu0
  %166 = vmatprep.mubr.bf16.mxu0 0
  %167 = vmatmul.mubr.bf16.gmra.mrb[0].mxu0 %v101
  %v168 = vpop.f32.mrb[0].mxu0
  %v169 = vadd.f32 %v88, %v168
  %v170 = vpop.f32.mrb[0].mxu0
  %v171 = vpop.f32.mrb[0].mxu0
  %v172 = vadd.f32 %v88, %v171
  %v173 = vpop.f32.mrb[0].mxu0
  %174 = vdwg.mxu0
  %vm175 = vcmask 785408
  %176 = vst.msk [vmem:[#allocation2] sm:$0xff] %vm175, %v145
  %177 = vst.msk [vmem:[#allocation2 + $0x8] sm:$0xff] %vm175, %v148
  %178 = vst.msk [vmem:[#allocation2 + $0x10] sm:$0xff] %vm175, %v153
  %179 = vst.msk [vmem:[#allocation2 + $0x18] sm:$0xff] %vm175, %v156
  %180 = vst.msk [vmem:[#allocation2 + $0x20] sm:$0xff] %vm175, %v161
  %181 = vst.msk [vmem:[#allocation2 + $0x28] sm:$0xff] %vm175, %v164
  %182 = vst.msk [vmem:[#allocation2 + $0x30] sm:$0xff] %vm175, %v169
  %183 = vst.msk [vmem:[#allocation2 + $0x38] sm:$0xff] %vm175, %v172
  %v184 = vld [vmem:[%s5] sm:$0xf]
  %v185 = vld [vmem:[%s5 + $0x4] sm:$0xf]
  %v186 = vld [vmem:[%s5 + $0x8] sm:$0xf]
  %v187 = vld [vmem:[%s5 + $0xc] sm:$0xf]
  %v188 = vld [vmem:[%s6] sm:$0x1]
  %v190 = vlaneseq
  %v191 = vshrl.u32 %v190, 7
  %v192 = vsub.s32 0, %v191
  %v193 = vrot.slane %v188, %v192
  %v199 = vunpack.c.l.b16 %v184
  %v200 = vunpack.c.l.b16 %v185
  %v201 = vunpack.c.l.b16 %v186
  %v202 = vunpack.c.l.b16 %v187
  %v203 = vpack.c.b16 %v200, %v199
  %v204 = vpack.c.b16 %v202, %v201
  %vm207 = vcmask 261120
  %v209 = vsel %vm207, 0, 0
  %211 = vmatprep.subr.bf16.mxu0 0
  %212 = vmatpush1.bf16.msra.mxu0 %v203
  %213 = vmatprep.subr.bf16.mxu0 0
  %214 = vmatpush1.bf16.msra.mxu0 %v204
  %215 = vmatprep.subr.bf16.mxu0 0
  %216 = vmatpush1.bf16.msra.mxu0 0
  %217 = vmatprep.subr.bf16.mxu0 0
  %218 = vmatpush1.bf16.msra.mxu0 0
  %219 = vmatprep.subr.bf16.mxu0 0
  %220 = vmatpush1.bf16.msra.mxu0 0
  %221 = vmatprep.subr.bf16.mxu0 0
  %222 = vmatpush1.bf16.msra.mxu0 0
  %223 = vmatprep.subr.bf16.mxu0 0
  %224 = vmatpush1.bf16.msra.mxu0 0
  %225 = vmatprep.subr.bf16.mxu0 0
  %226 = vmatpush1.bf16.msra.mxu0 0
  %227 = vmatprep.subr.bf16.mxu0 0
  %228 = vmatpush1.bf16.msra.mxu0 0
  %229 = vmatprep.subr.bf16.mxu0 0
  %230 = vmatpush1.bf16.msra.mxu0 0
  %231 = vmatprep.subr.bf16.mxu0 0
  %232 = vmatpush1.bf16.msra.mxu0 0
  %233 = vmatprep.subr.bf16.mxu0 0
  %234 = vmatpush1.bf16.msra.mxu0 0
  %235 = vmatprep.subr.bf16.mxu0 0
  %236 = vmatpush1.bf16.msra.mxu0 0
  %237 = vmatprep.subr.bf16.mxu0 0
  %238 = vmatpush1.bf16.msra.mxu0 0
  %239 = vmatprep.subr.bf16.mxu0 0
  %240 = vmatpush1.bf16.msra.mxu0 0
  %241 = vmatprep.subr.bf16.mxu0 0
  %242 = vmatpush1.bf16.msra.mxu0 0
  %243 = vmatprep.mubr.bf16.mxu0 0
  %244 = vmatmul.mubr.bf16.gmra.mrb[0].mxu0 %v209
  %v245 = vpop.f32.mrb[0].mxu0
  %v246 = vadd.f32 %v193, %v245
  %v247 = vpop.f32.mrb[0].mxu0
  %v248 = vpop.f32.mrb[0].mxu0
  %v249 = vpop.f32.mrb[0].mxu0
  %250 = vdwg.mxu0
  %s251 = scalar_lea.vmem [#allocation2], 56
  %v252 = vld [vmem:[%s251] sm:$0xff]
  %v253 = vadd.f32 %v252, %v246
  %v254 = vmul.f32 %v253, 0.5
  %v255 = vtanh.pop %v254
  %v256 = vadd.f32 %v255, 1.0
  %v257 = vmul.f32 %v256, 0.5
  %259 = vrot.lane.b32.xlu0 %v246, 64
  %v260 = vpop.permute.xlu0 %259
  %v262 = vmul.f32 %v257, %v260
  %264 = vrot.lane.b32.xlu0 %v262, 64
  %v265 = vpop.permute.xlu0 %264
  %v267 = vadd.f32 %v252, %v265
  %v268 = vtanh.pop %v267
  %v269 = vsub.f32 1.0, %v257
  %271 = vrot.lane.b32.xlu0 %v268, 96
  %v272 = vpop.permute.xlu0 %271
  %v274 = vmul.f32 %v269, %v272
  %v275 = vmul.f32 %v257, 0.0
  %v276 = vadd.f32 %v274, %v275
  %v277 = vpack.c.bf16 %v276, %v276
  %279 = vrot.lane.b32.xlu0 %v277, 96
  %v280 = vpop.permute.xlu0 %279
  %v282 = vsel %vm207, %v280, 0
  %284 = vmatprep.subr.bf16.mxu0 0
  %285 = vmatpush1.bf16.msra.mxu0 %v203
  %286 = vmatprep.subr.bf16.mxu0 0
  %287 = vmatpush1.bf16.msra.mxu0 %v204
  %288 = vmatprep.subr.bf16.mxu0 0
  %289 = vmatpush1.bf16.msra.mxu0 0
  %290 = vmatprep.subr.bf16.mxu0 0
  %291 = vmatpush1.bf16.msra.mxu0 0
  %292 = vmatprep.subr.bf16.mxu0 0
  %293 = vmatpush1.bf16.msra.mxu0 0
  %294 = vmatprep.subr.bf16.mxu0 0
  %295 = vmatpush1.bf16.msra.mxu0 0
  %296 = vmatprep.subr.bf16.mxu0 0
  %297 = vmatpush1.bf16.msra.mxu0 0
  %298 = vmatprep.subr.bf16.mxu0 0
  %299 = vmatpush1.bf16.msra.mxu0 0
  %300 = vmatprep.subr.bf16.mxu0 0
  %301 = vmatpush1.bf16.msra.mxu0 0
  %302 = vmatprep.subr.bf16.mxu0 0
  %303 = vmatpush1.bf16.msra.mxu0 0
  %304 = vmatprep.subr.bf16.mxu0 0
  %305 = vmatpush1.bf16.msra.mxu0 0
  %306 = vmatprep.subr.bf16.mxu0 0
  %307 = vmatpush1.bf16.msra.mxu0 0
  %308 = vmatprep.subr.bf16.mxu0 0
  %309 = vmatpush1.bf16.msra.mxu0 0
  %310 = vmatprep.subr.bf16.mxu0 0
  %311 = vmatpush1.bf16.msra.mxu0 0
  %312 = vmatprep.subr.bf16.mxu0 0
  %313 = vmatpush1.bf16.msra.mxu0 0
  %314 = vmatprep.subr.bf16.mxu0 0
  %315 = vmatpush1.bf16.msra.mxu0 0
  %316 = vmatprep.mubr.bf16.mxu0 0
  %317 = vmatmul.mubr.bf16.gmra.mrb[0].mxu0 %v282
  %v318 = vpop.f32.mrb[0].mxu0
  %v319 = vadd.f32 %v193, %v318
  %v320 = vpop.f32.mrb[0].mxu0
  %v321 = vpop.f32.mrb[0].mxu0
  %v322 = vpop.f32.mrb[0].mxu0
  %323 = vdwg.mxu0
  %s324 = scalar_lea.vmem [#allocation2], 48
  %v325 = vld [vmem:[%s324] sm:$0xff]
  %v326 = vadd.f32 %v325, %v319
  %v327 = vmul.f32 %v326, 0.5
  %v328 = vtanh.pop %v327
  %v329 = vadd.f32 %v328, 1.0
  %v330 = vmul.f32 %v329, 0.5
  %332 = vrot.lane.b32.xlu0 %v319, 64
  %v333 = vpop.permute.xlu0 %332
  %v335 = vmul.f32 %v330, %v333
  %337 = vrot.lane.b32.xlu0 %v335, 64
  %v338 = vpop.permute.xlu0 %337
  %v340 = vadd.f32 %v325, %v338
  %v341 = vtanh.pop %v340
  %v342 = vsub.f32 1.0, %v330
  %344 = vrot.lane.b32.xlu0 %v341, 96
  %v345 = vpop.permute.xlu0 %344
  %v347 = vmul.f32 %v342, %v345
  %v348 = vmul.f32 %v330, %v276
  %v349 = vadd.f32 %v347, %v348
  %v350 = vpack.c.bf16 %v349, %v349
  %352 = vrot.lane.b32.xlu0 %v350, 96
  %v353 = vpop.permute.xlu0 %352
  %v355 = vsel %vm207, %v353, 0
  %357 = vmatprep.subr.bf16.mxu0 0
  %358 = vmatpush1.bf16.msra.mxu0 %v203
  %359 = vmatprep.subr.bf16.mxu0 0
  %360 = vmatpush1.bf16.msra.mxu0 %v204
  %361 = vmatprep.subr.bf16.mxu0 0
  %362 = vmatpush1.bf16.msra.mxu0 0
  %363 = vmatprep.subr.bf16.mxu0 0
  %364 = vmatpush1.bf16.msra.mxu0 0
  %365 = vmatprep.subr.bf16.mxu0 0
  %366 = vmatpush1.bf16.msra.mxu0 0
  %367 = vmatprep.subr.bf16.mxu0 0
  %368 = vmatpush1.bf16.msra.mxu0 0
  %369 = vmatprep.subr.bf16.mxu0 0
  %370 = vmatpush1.bf16.msra.mxu0 0
  %371 = vmatprep.subr.bf16.mxu0 0
  %372 = vmatpush1.bf16.msra.mxu0 0
  %373 = vmatprep.subr.bf16.mxu0 0
  %374 = vmatpush1.bf16.msra.mxu0 0
  %375 = vmatprep.subr.bf16.mxu0 0
  %376 = vmatpush1.bf16.msra.mxu0 0
  %377 = vmatprep.subr.bf16.mxu0 0
  %378 = vmatpush1.bf16.msra.mxu0 0
  %379 = vmatprep.subr.bf16.mxu0 0
  %380 = vmatpush1.bf16.msra.mxu0 0
  %381 = vmatprep.subr.bf16.mxu0 0
  %382 = vmatpush1.bf16.msra.mxu0 0
  %383 = vmatprep.subr.bf16.mxu0 0
  %384 = vmatpush1.bf16.msra.mxu0 0
  %385 = vmatprep.subr.bf16.mxu0 0
  %386 = vmatpush1.bf16.msra.mxu0 0
  %387 = vmatprep.subr.bf16.mxu0 0
  %388 = vmatpush1.bf16.msra.mxu0 0
  %389 = vmatprep.mubr.bf16.mxu0 0
  %390 = vmatmul.mubr.bf16.gmra.mrb[0].mxu0 %v355
  %v391 = vpop.f32.mrb[0].mxu0
  %v392 = vadd.f32 %v193, %v391
  %v393 = vpop.f32.mrb[0].mxu0
  %v394 = vpop.f32.mrb[0].mxu0
  %v395 = vpop.f32.mrb[0].mxu0
  %396 = vdwg.mxu0
  %s397 = scalar_lea.vmem [#allocation2], 40
  %v398 = vld [vmem:[%s397] sm:$0xff]
  %v399 = vadd.f32 %v398, %v392
  %v400 = vmul.f32 %v399, 0.5
  %v401 = vtanh.pop %v400
  %v402 = vadd.f32 %v401, 1.0
  %v403 = vmul.f32 %v402, 0.5
  %405 = vrot.lane.b32.xlu0 %v392, 64
  %v406 = vpop.permute.xlu0 %405
  %v408 = vmul.f32 %v403, %v406
  %410 = vrot.lane.b32.xlu0 %v408, 64
  %v411 = vpop.permute.xlu0 %410
  %v413 = vadd.f32 %v398, %v411
  %v414 = vtanh.pop %v413
  %v415 = vsub.f32 1.0, %v403
  %417 = vrot.lane.b32.xlu0 %v414, 96
  %v418 = vpop.permute.xlu0 %417
  %v420 = vmul.f32 %v415, %v418
  %v421 = vmul.f32 %v403, %v349
  %v422 = vadd.f32 %v420, %v421
  %v423 = vpack.c.bf16 %v422, %v422
  %425 = vrot.lane.b32.xlu0 %v423, 96
  %v426 = vpop.permute.xlu0 %425
  %v428 = vsel %vm207, %v426, 0
  %430 = vmatprep.subr.bf16.mxu0 0
  %431 = vmatpush1.bf16.msra.mxu0 %v203
  %432 = vmatprep.subr.bf16.mxu0 0
  %433 = vmatpush1.bf16.msra.mxu0 %v204
  %434 = vmatprep.subr.bf16.mxu0 0
  %435 = vmatpush1.bf16.msra.mxu0 0
  %436 = vmatprep.subr.bf16.mxu0 0
  %437 = vmatpush1.bf16.msra.mxu0 0
  %438 = vmatprep.subr.bf16.mxu0 0
  %439 = vmatpush1.bf16.msra.mxu0 0
  %440 = vmatprep.subr.bf16.mxu0 0
  %441 = vmatpush1.bf16.msra.mxu0 0
  %442 = vmatprep.subr.bf16.mxu0 0
  %443 = vmatpush1.bf16.msra.mxu0 0
  %444 = vmatprep.subr.bf16.mxu0 0
  %445 = vmatpush1.bf16.msra.mxu0 0
  %446 = vmatprep.subr.bf16.mxu0 0
  %447 = vmatpush1.bf16.msra.mxu0 0
  %448 = vmatprep.subr.bf16.mxu0 0
  %449 = vmatpush1.bf16.msra.mxu0 0
  %450 = vmatprep.subr.bf16.mxu0 0
  %451 = vmatpush1.bf16.msra.mxu0 0
  %452 = vmatprep.subr.bf16.mxu0 0
  %453 = vmatpush1.bf16.msra.mxu0 0
  %454 = vmatprep.subr.bf16.mxu0 0
  %455 = vmatpush1.bf16.msra.mxu0 0
  %456 = vmatprep.subr.bf16.mxu0 0
  %457 = vmatpush1.bf16.msra.mxu0 0
  %458 = vmatprep.subr.bf16.mxu0 0
  %459 = vmatpush1.bf16.msra.mxu0 0
  %460 = vmatprep.subr.bf16.mxu0 0
  %461 = vmatpush1.bf16.msra.mxu0 0
  %462 = vmatprep.mubr.bf16.mxu0 0
  %463 = vmatmul.mubr.bf16.gmra.mrb[0].mxu0 %v428
  %v464 = vpop.f32.mrb[0].mxu0
  %v465 = vadd.f32 %v193, %v464
  %v466 = vpop.f32.mrb[0].mxu0
  %v467 = vpop.f32.mrb[0].mxu0
  %v468 = vpop.f32.mrb[0].mxu0
  %469 = vdwg.mxu0
  %s470 = scalar_lea.vmem [#allocation2], 32
  %v471 = vld [vmem:[%s470] sm:$0xff]
  %v472 = vadd.f32 %v471, %v465
  %v473 = vmul.f32 %v472, 0.5
  %v474 = vtanh.pop %v473
  %v475 = vadd.f32 %v474, 1.0
  %v476 = vmul.f32 %v475, 0.5
  %478 = vrot.lane.b32.xlu0 %v465, 64
  %v479 = vpop.permute.xlu0 %478
  %v481 = vmul.f32 %v476, %v479
  %483 = vrot.lane.b32.xlu0 %v481, 64
  %v484 = vpop.permute.xlu0 %483
  %v486 = vadd.f32 %v471, %v484
  %v487 = vtanh.pop %v486
  %v488 = vsub.f32 1.0, %v476
  %490 = vrot.lane.b32.xlu0 %v487, 96
  %v491 = vpop.permute.xlu0 %490
  %v493 = vmul.f32 %v488, %v491
  %v494 = vmul.f32 %v476, %v422
  %v495 = vadd.f32 %v493, %v494
  %v496 = vpack.c.bf16 %v495, %v495
  %498 = vrot.lane.b32.xlu0 %v496, 96
  %v499 = vpop.permute.xlu0 %498
  %v501 = vsel %vm207, %v499, 0
  %503 = vmatprep.subr.bf16.mxu0 0
  %504 = vmatpush1.bf16.msra.mxu0 %v203
  %505 = vmatprep.subr.bf16.mxu0 0
  %506 = vmatpush1.bf16.msra.mxu0 %v204
  %507 = vmatprep.subr.bf16.mxu0 0
  %508 = vmatpush1.bf16.msra.mxu0 0
  %509 = vmatprep.subr.bf16.mxu0 0
  %510 = vmatpush1.bf16.msra.mxu0 0
  %511 = vmatprep.subr.bf16.mxu0 0
  %512 = vmatpush1.bf16.msra.mxu0 0
  %513 = vmatprep.subr.bf16.mxu0 0
  %514 = vmatpush1.bf16.msra.mxu0 0
  %515 = vmatprep.subr.bf16.mxu0 0
  %516 = vmatpush1.bf16.msra.mxu0 0
  %517 = vmatprep.subr.bf16.mxu0 0
  %518 = vmatpush1.bf16.msra.mxu0 0
  %519 = vmatprep.subr.bf16.mxu0 0
  %520 = vmatpush1.bf16.msra.mxu0 0
  %521 = vmatprep.subr.bf16.mxu0 0
  %522 = vmatpush1.bf16.msra.mxu0 0
  %523 = vmatprep.subr.bf16.mxu0 0
  %524 = vmatpush1.bf16.msra.mxu0 0
  %525 = vmatprep.subr.bf16.mxu0 0
  %526 = vmatpush1.bf16.msra.mxu0 0
  %527 = vmatprep.subr.bf16.mxu0 0
  %528 = vmatpush1.bf16.msra.mxu0 0
  %529 = vmatprep.subr.bf16.mxu0 0
  %530 = vmatpush1.bf16.msra.mxu0 0
  %531 = vmatprep.subr.bf16.mxu0 0
  %532 = vmatpush1.bf16.msra.mxu0 0
  %533 = vmatprep.subr.bf16.mxu0 0
  %534 = vmatpush1.bf16.msra.mxu0 0
  %535 = vmatprep.mubr.bf16.mxu0 0
  %536 = vmatmul.mubr.bf16.gmra.mrb[0].mxu0 %v501
  %v537 = vpop.f32.mrb[0].mxu0
  %v538 = vadd.f32 %v193, %v537
  %v539 = vpop.f32.mrb[0].mxu0
  %v540 = vpop.f32.mrb[0].mxu0
  %v541 = vpop.f32.mrb[0].mxu0
  %542 = vdwg.mxu0
  %s543 = scalar_lea.vmem [#allocation2], 24
  %v544 = vld [vmem:[%s543] sm:$0xff]
  %v545 = vadd.f32 %v544, %v538
  %v546 = vmul.f32 %v545, 0.5
  %v547 = vtanh.pop %v546
  %v548 = vadd.f32 %v547, 1.0
  %v549 = vmul.f32 %v548, 0.5
  %551 = vrot.lane.b32.xlu0 %v538, 64
  %v552 = vpop.permute.xlu0 %551
  %v554 = vmul.f32 %v549, %v552
  %556 = vrot.lane.b32.xlu0 %v554, 64
  %v557 = vpop.permute.xlu0 %556
  %v559 = vadd.f32 %v544, %v557
  %v560 = vtanh.pop %v559
  %v561 = vsub.f32 1.0, %v549
  %563 = vrot.lane.b32.xlu0 %v560, 96
  %v564 = vpop.permute.xlu0 %563
  %v566 = vmul.f32 %v561, %v564
  %v567 = vmul.f32 %v549, %v495
  %v568 = vadd.f32 %v566, %v567
  %v569 = vpack.c.bf16 %v568, %v568
  %571 = vrot.lane.b32.xlu0 %v569, 96
  %v572 = vpop.permute.xlu0 %571
  %v574 = vsel %vm207, %v572, 0
  %576 = vmatprep.subr.bf16.mxu0 0
  %577 = vmatpush1.bf16.msra.mxu0 %v203
  %578 = vmatprep.subr.bf16.mxu0 0
  %579 = vmatpush1.bf16.msra.mxu0 %v204
  %580 = vmatprep.subr.bf16.mxu0 0
  %581 = vmatpush1.bf16.msra.mxu0 0
  %582 = vmatprep.subr.bf16.mxu0 0
  %583 = vmatpush1.bf16.msra.mxu0 0
  %584 = vmatprep.subr.bf16.mxu0 0
  %585 = vmatpush1.bf16.msra.mxu0 0
  %586 = vmatprep.subr.bf16.mxu0 0
  %587 = vmatpush1.bf16.msra.mxu0 0
  %588 = vmatprep.subr.bf16.mxu0 0
  %589 = vmatpush1.bf16.msra.mxu0 0
  %590 = vmatprep.subr.bf16.mxu0 0
  %591 = vmatpush1.bf16.msra.mxu0 0
  %592 = vmatprep.subr.bf16.mxu0 0
  %593 = vmatpush1.bf16.msra.mxu0 0
  %594 = vmatprep.subr.bf16.mxu0 0
  %595 = vmatpush1.bf16.msra.mxu0 0
  %596 = vmatprep.subr.bf16.mxu0 0
  %597 = vmatpush1.bf16.msra.mxu0 0
  %598 = vmatprep.subr.bf16.mxu0 0
  %599 = vmatpush1.bf16.msra.mxu0 0
  %600 = vmatprep.subr.bf16.mxu0 0
  %601 = vmatpush1.bf16.msra.mxu0 0
  %602 = vmatprep.subr.bf16.mxu0 0
  %603 = vmatpush1.bf16.msra.mxu0 0
  %604 = vmatprep.subr.bf16.mxu0 0
  %605 = vmatpush1.bf16.msra.mxu0 0
  %606 = vmatprep.subr.bf16.mxu0 0
  %607 = vmatpush1.bf16.msra.mxu0 0
  %608 = vmatprep.mubr.bf16.mxu0 0
  %609 = vmatmul.mubr.bf16.gmra.mrb[0].mxu0 %v574
  %v610 = vpop.f32.mrb[0].mxu0
  %v611 = vadd.f32 %v193, %v610
  %v612 = vpop.f32.mrb[0].mxu0
  %v613 = vpop.f32.mrb[0].mxu0
  %v614 = vpop.f32.mrb[0].mxu0
  %615 = vdwg.mxu0
  %s616 = scalar_lea.vmem [#allocation2], 16
  %v617 = vld [vmem:[%s616] sm:$0xff]
  %v618 = vadd.f32 %v617, %v611
  %v619 = vmul.f32 %v618, 0.5
  %v620 = vtanh.pop %v619
  %v621 = vadd.f32 %v620, 1.0
  %v622 = vmul.f32 %v621, 0.5
  %624 = vrot.lane.b32.xlu0 %v611, 64
  %v625 = vpop.permute.xlu0 %624
  %v627 = vmul.f32 %v622, %v625
  %629 = vrot.lane.b32.xlu0 %v627, 64
  %v630 = vpop.permute.xlu0 %629
  %v632 = vadd.f32 %v617, %v630
  %v633 = vtanh.pop %v632
  %v634 = vsub.f32 1.0, %v622
  %636 = vrot.lane.b32.xlu0 %v633, 96
  %v637 = vpop.permute.xlu0 %636
  %v639 = vmul.f32 %v634, %v637
  %v640 = vmul.f32 %v622, %v568
  %v641 = vadd.f32 %v639, %v640
  %v642 = vpack.c.bf16 %v641, %v641
  %644 = vrot.lane.b32.xlu0 %v642, 96
  %v645 = vpop.permute.xlu0 %644
  %v647 = vsel %vm207, %v645, 0
  %649 = vmatprep.subr.bf16.mxu0 0
  %650 = vmatpush1.bf16.msra.mxu0 %v203
  %651 = vmatprep.subr.bf16.mxu0 0
  %652 = vmatpush1.bf16.msra.mxu0 %v204
  %653 = vmatprep.subr.bf16.mxu0 0
  %654 = vmatpush1.bf16.msra.mxu0 0
  %655 = vmatprep.subr.bf16.mxu0 0
  %656 = vmatpush1.bf16.msra.mxu0 0
  %657 = vmatprep.subr.bf16.mxu0 0
  %658 = vmatpush1.bf16.msra.mxu0 0
  %659 = vmatprep.subr.bf16.mxu0 0
  %660 = vmatpush1.bf16.msra.mxu0 0
  %661 = vmatprep.subr.bf16.mxu0 0
  %662 = vmatpush1.bf16.msra.mxu0 0
  %663 = vmatprep.subr.bf16.mxu0 0
  %664 = vmatpush1.bf16.msra.mxu0 0
  %665 = vmatprep.subr.bf16.mxu0 0
  %666 = vmatpush1.bf16.msra.mxu0 0
  %667 = vmatprep.subr.bf16.mxu0 0
  %668 = vmatpush1.bf16.msra.mxu0 0
  %669 = vmatprep.subr.bf16.mxu0 0
  %670 = vmatpush1.bf16.msra.mxu0 0
  %671 = vmatprep.subr.bf16.mxu0 0
  %672 = vmatpush1.bf16.msra.mxu0 0
  %673 = vmatprep.subr.bf16.mxu0 0
  %674 = vmatpush1.bf16.msra.mxu0 0
  %675 = vmatprep.subr.bf16.mxu0 0
  %676 = vmatpush1.bf16.msra.mxu0 0
  %677 = vmatprep.subr.bf16.mxu0 0
  %678 = vmatpush1.bf16.msra.mxu0 0
  %679 = vmatprep.subr.bf16.mxu0 0
  %680 = vmatpush1.bf16.msra.mxu0 0
  %681 = vmatprep.mubr.bf16.mxu0 0
  %682 = vmatmul.mubr.bf16.gmra.mrb[0].mxu0 %v647
  %v683 = vpop.f32.mrb[0].mxu0
  %v684 = vadd.f32 %v193, %v683
  %v685 = vpop.f32.mrb[0].mxu0
  %v686 = vpop.f32.mrb[0].mxu0
  %v687 = vpop.f32.mrb[0].mxu0
  %688 = vdwg.mxu0
  %s689 = scalar_lea.vmem [#allocation2], 8
  %v690 = vld [vmem:[%s689] sm:$0xff]
  %v691 = vadd.f32 %v690, %v684
  %v692 = vmul.f32 %v691, 0.5
  %v693 = vtanh.pop %v692
  %v694 = vadd.f32 %v693, 1.0
  %v695 = vmul.f32 %v694, 0.5
  %697 = vrot.lane.b32.xlu0 %v684, 64
  %v698 = vpop.permute.xlu0 %697
  %v700 = vmul.f32 %v695, %v698
  %702 = vrot.lane.b32.xlu0 %v700, 64
  %v703 = vpop.permute.xlu0 %702
  %v705 = vadd.f32 %v690, %v703
  %v706 = vtanh.pop %v705
  %v707 = vsub.f32 1.0, %v695
  %709 = vrot.lane.b32.xlu0 %v706, 96
  %v710 = vpop.permute.xlu0 %709
  %v712 = vmul.f32 %v707, %v710
  %v713 = vmul.f32 %v695, %v641
  %v714 = vadd.f32 %v712, %v713
  %v715 = vpack.c.bf16 %v714, %v714
  %717 = vrot.lane.b32.xlu0 %v715, 96
  %v718 = vpop.permute.xlu0 %717
  %v720 = vsel %vm207, %v718, 0
  %722 = vmatprep.subr.bf16.mxu0 0
  %723 = vmatpush1.bf16.msra.mxu0 %v203
  %724 = vmatprep.subr.bf16.mxu0 0
  %725 = vmatpush1.bf16.msra.mxu0 %v204
  %726 = vmatprep.subr.bf16.mxu0 0
  %727 = vmatpush1.bf16.msra.mxu0 0
  %728 = vmatprep.subr.bf16.mxu0 0
  %729 = vmatpush1.bf16.msra.mxu0 0
  %730 = vmatprep.subr.bf16.mxu0 0
  %731 = vmatpush1.bf16.msra.mxu0 0
  %732 = vmatprep.subr.bf16.mxu0 0
  %733 = vmatpush1.bf16.msra.mxu0 0
  %734 = vmatprep.subr.bf16.mxu0 0
  %735 = vmatpush1.bf16.msra.mxu0 0
  %736 = vmatprep.subr.bf16.mxu0 0
  %737 = vmatpush1.bf16.msra.mxu0 0
  %738 = vmatprep.subr.bf16.mxu0 0
  %739 = vmatpush1.bf16.msra.mxu0 0
  %740 = vmatprep.subr.bf16.mxu0 0
  %741 = vmatpush1.bf16.msra.mxu0 0
  %742 = vmatprep.subr.bf16.mxu0 0
  %743 = vmatpush1.bf16.msra.mxu0 0
  %744 = vmatprep.subr.bf16.mxu0 0
  %745 = vmatpush1.bf16.msra.mxu0 0
  %746 = vmatprep.subr.bf16.mxu0 0
  %747 = vmatpush1.bf16.msra.mxu0 0
  %748 = vmatprep.subr.bf16.mxu0 0
  %749 = vmatpush1.bf16.msra.mxu0 0
  %750 = vmatprep.subr.bf16.mxu0 0
  %751 = vmatpush1.bf16.msra.mxu0 0
  %752 = vmatprep.subr.bf16.mxu0 0
  %753 = vmatpush1.bf16.msra.mxu0 0
  %754 = vmatprep.mubr.bf16.mxu0 0
  %755 = vmatmul.mubr.bf16.gmra.mrb[0].mxu0 %v720
  %v756 = vpop.f32.mrb[0].mxu0
  %v757 = vadd.f32 %v193, %v756
  %v758 = vpop.f32.mrb[0].mxu0
  %v759 = vpop.f32.mrb[0].mxu0
  %v760 = vpop.f32.mrb[0].mxu0
  %761 = vdwg.mxu0
  %v762 = vld [vmem:[#allocation2] sm:$0xff]
  %v763 = vadd.f32 %v762, %v757
  %v764 = vmul.f32 %v763, 0.5
  %v765 = vtanh.pop %v764
  %v766 = vadd.f32 %v765, 1.0
  %v767 = vmul.f32 %v766, 0.5
  %769 = vrot.lane.b32.xlu0 %v757, 64
  %v770 = vpop.permute.xlu0 %769
  %v772 = vmul.f32 %v767, %v770
  %774 = vrot.lane.b32.xlu0 %v772, 64
  %v775 = vpop.permute.xlu0 %774
  %v777 = vadd.f32 %v762, %v775
  %v778 = vtanh.pop %v777
  %v779 = vsub.f32 1.0, %v767
  %781 = vrot.lane.b32.xlu0 %v778, 96
  %v782 = vpop.permute.xlu0 %781
  %v784 = vmul.f32 %v779, %v782
  %v785 = vmul.f32 %v767, %v714
  %v786 = vadd.f32 %v784, %v785
  %v787 = vpack.c.bf16 %v786, %v786
  %v788 = vld [vmem:[%s7] sm:$0xf]
  %v789 = vld [vmem:[%s7 + $0x4] sm:$0xf]
  %v790 = vld [vmem:[%s7 + $0x8] sm:$0xf]
  %v791 = vld [vmem:[%s7 + $0xc] sm:$0xf]
  %v792 = vld [vmem:[%s8] sm:$0x1]
  %v794 = vlaneseq
  %v795 = vshrl.u32 %v794, 7
  %v796 = vsub.s32 0, %v795
  %v797 = vrot.slane %v792, %v796
  %800 = vrot.lane.b32.xlu0 %v787, 96
  %v801 = vpop.permute.xlu0 %800
  %v806 = vunpack.c.l.b16 %v788
  %v807 = vunpack.c.l.b16 %v789
  %v808 = vunpack.c.l.b16 %v790
  %v809 = vunpack.c.l.b16 %v791
  %v810 = vpack.c.b16 %v807, %v806
  %v811 = vpack.c.b16 %v809, %v808
  %v815 = vsel %vm207, %v801, 0
  %817 = vmatprep.subr.bf16.mxu0 0
  %818 = vmatpush1.bf16.msra.mxu0 %v810
  %819 = vmatprep.subr.bf16.mxu0 0
  %820 = vmatpush1.bf16.msra.mxu0 %v811
  %821 = vmatprep.subr.bf16.mxu0 0
  %822 = vmatpush1.bf16.msra.mxu0 0
  %823 = vmatprep.subr.bf16.mxu0 0
  %824 = vmatpush1.bf16.msra.mxu0 0
  %825 = vmatprep.subr.bf16.mxu0 0
  %826 = vmatpush1.bf16.msra.mxu0 0
  %827 = vmatprep.subr.bf16.mxu0 0
  %828 = vmatpush1.bf16.msra.mxu0 0
  %829 = vmatprep.subr.bf16.mxu0 0
  %830 = vmatpush1.bf16.msra.mxu0 0
  %831 = vmatprep.subr.bf16.mxu0 0
  %832 = vmatpush1.bf16.msra.mxu0 0
  %833 = vmatprep.subr.bf16.mxu0 0
  %834 = vmatpush1.bf16.msra.mxu0 0
  %835 = vmatprep.subr.bf16.mxu0 0
  %836 = vmatpush1.bf16.msra.mxu0 0
  %837 = vmatprep.subr.bf16.mxu0 0
  %838 = vmatpush1.bf16.msra.mxu0 0
  %839 = vmatprep.subr.bf16.mxu0 0
  %840 = vmatpush1.bf16.msra.mxu0 0
  %841 = vmatprep.subr.bf16.mxu0 0
  %842 = vmatpush1.bf16.msra.mxu0 0
  %843 = vmatprep.subr.bf16.mxu0 0
  %844 = vmatpush1.bf16.msra.mxu0 0
  %845 = vmatprep.subr.bf16.mxu0 0
  %846 = vmatpush1.bf16.msra.mxu0 0
  %847 = vmatprep.subr.bf16.mxu0 0
  %848 = vmatpush1.bf16.msra.mxu0 0
  %849 = vmatprep.mubr.bf16.mxu0 0
  %850 = vmatmul.mubr.bf16.gmra.mrb[0].mxu0 %v815
  %v851 = vpop.f32.mrb[0].mxu0
  %v852 = vadd.f32 %v797, %v851
  %v853 = vpop.f32.mrb[0].mxu0
  %v854 = vpop.f32.mrb[0].mxu0
  %v855 = vpop.f32.mrb[0].mxu0
  %856 = vdwg.mxu0
  %v857 = vld [vmem:[%s9] sm:$0xf]
  %v858 = vld [vmem:[%s9 + $0x4] sm:$0xf]
  %v859 = vld [vmem:[%s9 + $0x8] sm:$0xf]
  %v860 = vld [vmem:[%s9 + $0xc] sm:$0xf]
  %v861 = vld [vmem:[%s10] sm:$0x1]
  %v863 = vlaneseq
  %v864 = vshrl.u32 %v863, 7
  %v865 = vsub.s32 0, %v864
  %v866 = vrot.slane %v861, %v865
  %v872 = vunpack.c.l.b16 %v857
  %v873 = vunpack.c.l.b16 %v858
  %v874 = vunpack.c.l.b16 %v859
  %v875 = vunpack.c.l.b16 %v860
  %v876 = vpack.c.b16 %v873, %v872
  %v877 = vpack.c.b16 %v875, %v874
  %880 = vmatprep.subr.bf16.mxu0 0
  %881 = vmatpush1.bf16.msra.mxu0 %v876
  %882 = vmatprep.subr.bf16.mxu0 0
  %883 = vmatpush1.bf16.msra.mxu0 %v877
  %884 = vmatprep.subr.bf16.mxu0 0
  %885 = vmatpush1.bf16.msra.mxu0 0
  %886 = vmatprep.subr.bf16.mxu0 0
  %887 = vmatpush1.bf16.msra.mxu0 0
  %888 = vmatprep.subr.bf16.mxu0 0
  %889 = vmatpush1.bf16.msra.mxu0 0
  %890 = vmatprep.subr.bf16.mxu0 0
  %891 = vmatpush1.bf16.msra.mxu0 0
  %892 = vmatprep.subr.bf16.mxu0 0
  %893 = vmatpush1.bf16.msra.mxu0 0
  %894 = vmatprep.subr.bf16.mxu0 0
  %895 = vmatpush1.bf16.msra.mxu0 0
  %896 = vmatprep.subr.bf16.mxu0 0
  %897 = vmatpush1.bf16.msra.mxu0 0
  %898 = vmatprep.subr.bf16.mxu0 0
  %899 = vmatpush1.bf16.msra.mxu0 0
  %900 = vmatprep.subr.bf16.mxu0 0
  %901 = vmatpush1.bf16.msra.mxu0 0
  %902 = vmatprep.subr.bf16.mxu0 0
  %903 = vmatpush1.bf16.msra.mxu0 0
  %904 = vmatprep.subr.bf16.mxu0 0
  %905 = vmatpush1.bf16.msra.mxu0 0
  %906 = vmatprep.subr.bf16.mxu0 0
  %907 = vmatpush1.bf16.msra.mxu0 0
  %908 = vmatprep.subr.bf16.mxu0 0
  %909 = vmatpush1.bf16.msra.mxu0 0
  %910 = vmatprep.subr.bf16.mxu0 0
  %911 = vmatpush1.bf16.msra.mxu0 0
  %912 = vmatprep.mubr.bf16.mxu0 0
  %913 = vmatmul.mubr.bf16.gmra.mrb[0].mxu0 %v815
  %v914 = vpop.f32.mrb[0].mxu0
  %v915 = vadd.f32 %v866, %v914
  %v916 = vpop.f32.mrb[0].mxu0
  %v917 = vpop.f32.mrb[0].mxu0
  %v918 = vpop.f32.mrb[0].mxu0
  %919 = vdwg.mxu0
  %v920 = vmax.f32 %v915, 0.0
  %v921 = vand.u32 2147483647, %v915
  %v922 = vsub.f32 0.0, %v921
  %v923 = vmul.f32 %v922, 1.442695
  %v924 = vpow.pop %v923
  %v925 = vadd.f32 %v924, 1.0
  %v926 = vlog2.pop %v925
  %v927 = vmul.f32 %v926, 0.6931472
  %v928 = vadd.f32 %v920, %v927
  %vm929 = vcmask 64512
  %930 = vst.msk [vmem:[%s20] sm:$0xff] %vm929, %v852
  %931 = vst.msk [vmem:[%s21] sm:$0xff] %vm929, %v928
  %v932 = vld [vmem:[%s2] sm:$0xff]
  %v933 = vmul.f32 %v928, %v932
  %v934 = vadd.f32 %v852, %v933
  %vm935 = vcmask 58368
  %936 = vst.msk [vmem:[%s22] sm:$0x3] %vm935, %v934
  %937 = vst.msk [vmem:[%s22 + $0x2] sm:$0x3] %vm935, %v934
  %v938 = vlaneseq
  %v939 = vshrl.u32 %v938, 7
  %v940 = vsub.s32 0, %v939
  %v941 = vrot.slane %v934, %v940
  %vm942 = vcmask 60416
  %943 = vst.msk [vmem:[%s22 + $0x4] sm:$0xf] %vm942, %v941
  %v944 = vld [vmem:[%s22] sm:$0xff]
  %v945 = vld [vmem:[%s1] sm:$0xff]
  %v946 = vld [vmem:[%s1 + $0x8] sm:$0xff]
  %v947 = vld [vmem:[%s1 + $0x10] sm:$0xff]
  %v948 = vld [vmem:[%s1 + $0x18] sm:$0xff]
  %v949 = vld [vmem:[%s1 + $0x20] sm:$0xff]
  %v950 = vld [vmem:[%s1 + $0x28] sm:$0xff]
  %v951 = vld [vmem:[%s1 + $0x30] sm:$0xff]
  %v952 = vld [vmem:[%s1 + $0x38] sm:$0xff]
  %v953 = vld [vmem:[%s12] sm:$0x1]
  %955 = vset.pattern.permute.xlu0 0
  %956 = vperm.xlu0 %955, %v945
  %v957 = vpop.permute.xlu0 %956
  %960 = vset.pattern.permute.xlu0 0
  %961 = vperm.xlu0 %960, %v946
  %v962 = vpop.permute.xlu0 %961
  %965 = vset.pattern.permute.xlu0 0
  %966 = vperm.xlu0 %965, %v947
  %v967 = vpop.permute.xlu0 %966
  %970 = vset.pattern.permute.xlu0 0
  %971 = vperm.xlu0 %970, %v948
  %v972 = vpop.permute.xlu0 %971
  %975 = vset.pattern.permute.xlu0 0
  %976 = vperm.xlu0 %975, %v949
  %v977 = vpop.permute.xlu0 %976
  %980 = vset.pattern.permute.xlu0 0
  %981 = vperm.xlu0 %980, %v950
  %v982 = vpop.permute.xlu0 %981
  %985 = vset.pattern.permute.xlu0 0
  %986 = vperm.xlu0 %985, %v951
  %v987 = vpop.permute.xlu0 %986
  %990 = vset.pattern.permute.xlu0 0
  %991 = vperm.xlu0 %990, %v952
  %v992 = vpop.permute.xlu0 %991
  %v995 = vlaneseq
  %v996 = vshrl.u32 %v995, 7
  %v997 = vsub.s32 0, %v996
  %v998 = vrot.slane %v953, %v997
  %v1000 = vmul.f32 %v957, %v998
  %v1001 = vmul.f32 %v962, %v998
  %v1002 = vmul.f32 %v967, %v998
  %v1003 = vmul.f32 %v972, %v998
  %v1004 = vmul.f32 %v977, %v998
  %v1005 = vmul.f32 %v982, %v998
  %v1006 = vmul.f32 %v987, %v998
  %v1007 = vmul.f32 %v992, %v998
  %v1008 = vld [vmem:[%s13] sm:$0x1]
  %v1010 = vlaneseq
  %v1011 = vshrl.u32 %v1010, 7
  %v1012 = vsub.s32 0, %v1011
  %v1013 = vrot.slane %v1008, %v1012
  %v1015 = vadd.f32 %v1000, %v1013
  %v1016 = vadd.f32 %v1001, %v1013
  %v1017 = vadd.f32 %v1002, %v1013
  %v1018 = vadd.f32 %v1003, %v1013
  %v1019 = vadd.f32 %v1004, %v1013
  %v1020 = vadd.f32 %v1005, %v1013
  %v1021 = vadd.f32 %v1006, %v1013
  %v1022 = vadd.f32 %v1007, %v1013
  %1023 = vst.msk [vmem:[#allocation3] sm:$0xff] %vm207, %v1015
  %1024 = vst.msk [vmem:[#allocation3 + $0x8] sm:$0xff] %vm207, %v1016
  %1025 = vst.msk [vmem:[#allocation3 + $0x10] sm:$0xff] %vm207, %v1017
  %1026 = vst.msk [vmem:[#allocation3 + $0x18] sm:$0xff] %vm207, %v1018
  %1027 = vst.msk [vmem:[#allocation3 + $0x20] sm:$0xff] %vm207, %v1019
  %1028 = vst.msk [vmem:[#allocation3 + $0x28] sm:$0xff] %vm207, %v1020
  %1029 = vst.msk [vmem:[#allocation3 + $0x30] sm:$0xff] %vm207, %v1021
  %1030 = vst.msk [vmem:[#allocation3 + $0x38] sm:$0xff] %vm207, %v1022
  %vm1031 = vcmask 7168
  %1032 = vst.msk [vmem:[#allocation4] sm:$0xff] %vm1031, 0.0
  %v1033 = vsub.f32 %v946, %v945
  %v1034 = vsub.f32 %v947, %v946
  %v1035 = vsub.f32 %v948, %v947
  %v1036 = vsub.f32 %v949, %v948
  %v1037 = vsub.f32 %v950, %v949
  %v1038 = vsub.f32 %v951, %v950
  %v1039 = vsub.f32 %v952, %v951
  %s1040 = scalar_lea.vmem [#allocation4], 8
  %1041 = vst.msk [vmem:[%s1040] sm:$0xff] %vm1031, %v1033
  %1042 = vst.msk [vmem:[%s1040 + $0x8] sm:$0xff] %vm1031, %v1034
  %1043 = vst.msk [vmem:[%s1040 + $0x10] sm:$0xff] %vm1031, %v1035
  %1044 = vst.msk [vmem:[%s1040 + $0x18] sm:$0xff] %vm1031, %v1036
  %1045 = vst.msk [vmem:[%s1040 + $0x20] sm:$0xff] %vm1031, %v1037
  %1046 = vst.msk [vmem:[%s1040 + $0x28] sm:$0xff] %vm1031, %v1038
  %1047 = vst.msk [vmem:[%s1040 + $0x30] sm:$0xff] %vm1031, %v1039
  %v1048 = vld [vmem:[%s11] sm:$0xf]
  %v1049 = vld [vmem:[%s14] sm:$0xf]
  %v1050 = vld [vmem:[%s14 + $0x4] sm:$0xf]
  %v1051 = vld [vmem:[%s14 + $0x8] sm:$0xf]
  %v1052 = vld [vmem:[%s14 + $0xc] sm:$0xf]
  %v1053 = vld [vmem:[%s15] sm:$0x1]
  %v1055 = vlaneseq
  %v1056 = vshrl.u32 %v1055, 7
  %v1057 = vsub.s32 0, %v1056
  %v1058 = vrot.slane %v1053, %v1057
  %v1060 = vpack.c.bf16 %v944, %v944
  %v1061 = vld [vmem:[#allocation3] sm:$0xff]
  %v1063 = vsel %vm929, %v1060, 0
  %vm1065 = vcmask 1043456
  %v1067 = vsel %vm1065, %v1048, 0
  %1069 = vmatprep.subr.bf16.mxu0 0
  %1070 = vmatpush1.bf16.msra.mxu0 %v1067
  %1071 = vmatprep.subr.bf16.mxu0 0
  %1072 = vmatpush1.bf16.msra.mxu0 0
  %1073 = vmatprep.subr.bf16.mxu0 0
  %1074 = vmatpush1.bf16.msra.mxu0 0
  %1075 = vmatprep.subr.bf16.mxu0 0
  %1076 = vmatpush1.bf16.msra.mxu0 0
  %1077 = vmatprep.subr.bf16.mxu0 0
  %1078 = vmatpush1.bf16.msra.mxu0 0
  %1079 = vmatprep.subr.bf16.mxu0 0
  %1080 = vmatpush1.bf16.msra.mxu0 0
  %1081 = vmatprep.subr.bf16.mxu0 0
  %1082 = vmatpush1.bf16.msra.mxu0 0
  %1083 = vmatprep.subr.bf16.mxu0 0
  %1084 = vmatpush1.bf16.msra.mxu0 0
  %1085 = vmatprep.subr.bf16.mxu0 0
  %1086 = vmatpush1.bf16.msra.mxu0 0
  %1087 = vmatprep.subr.bf16.mxu0 0
  %1088 = vmatpush1.bf16.msra.mxu0 0
  %1089 = vmatprep.subr.bf16.mxu0 0
  %1090 = vmatpush1.bf16.msra.mxu0 0
  %1091 = vmatprep.subr.bf16.mxu0 0
  %1092 = vmatpush1.bf16.msra.mxu0 0
  %1093 = vmatprep.subr.bf16.mxu0 0
  %1094 = vmatpush1.bf16.msra.mxu0 0
  %1095 = vmatprep.subr.bf16.mxu0 0
  %1096 = vmatpush1.bf16.msra.mxu0 0
  %1097 = vmatprep.subr.bf16.mxu0 0
  %1098 = vmatpush1.bf16.msra.mxu0 0
  %1099 = vmatprep.subr.bf16.mxu0 0
  %1100 = vmatpush1.bf16.msra.mxu0 0
  %1101 = vmatprep.mubr.bf16.mxu0 0
  %1102 = vmatmul.mubr.bf16.gmra.mrb[0].mxu0 %v1063
  %v1103 = vpop.f32.mrb[0].mxu0
  %v1104 = vadd.f32 %v1061, %v1103
  %v1105 = vpop.f32.mrb[0].mxu0
  %v1106 = vpop.f32.mrb[0].mxu0
  %v1107 = vpop.f32.mrb[0].mxu0
  %1108 = vdwg.mxu0
  %v1109 = vtanh.pop %v1104
  %v1110 = vpack.c.bf16 %v1109, %v1109
  %v1115 = vunpack.c.l.b16 %v1049
  %v1116 = vunpack.c.l.b16 %v1050
  %v1117 = vunpack.c.l.b16 %v1051
  %v1118 = vunpack.c.l.b16 %v1052
  %v1119 = vpack.c.b16 %v1116, %v1115
  %v1120 = vpack.c.b16 %v1118, %v1117
  %v1124 = vsel %vm207, %v1110, 0
  %1126 = vmatprep.subr.bf16.mxu0 0
  %1127 = vmatpush1.bf16.msra.mxu0 %v1119
  %1128 = vmatprep.subr.bf16.mxu0 0
  %1129 = vmatpush1.bf16.msra.mxu0 %v1120
  %1130 = vmatprep.subr.bf16.mxu0 0
  %1131 = vmatpush1.bf16.msra.mxu0 0
  %1132 = vmatprep.subr.bf16.mxu0 0
  %1133 = vmatpush1.bf16.msra.mxu0 0
  %1134 = vmatprep.subr.bf16.mxu0 0
  %1135 = vmatpush1.bf16.msra.mxu0 0
  %1136 = vmatprep.subr.bf16.mxu0 0
  %1137 = vmatpush1.bf16.msra.mxu0 0
  %1138 = vmatprep.subr.bf16.mxu0 0
  %1139 = vmatpush1.bf16.msra.mxu0 0
  %1140 = vmatprep.subr.bf16.mxu0 0
  %1141 = vmatpush1.bf16.msra.mxu0 0
  %1142 = vmatprep.subr.bf16.mxu0 0
  %1143 = vmatpush1.bf16.msra.mxu0 0
  %1144 = vmatprep.subr.bf16.mxu0 0
  %1145 = vmatpush1.bf16.msra.mxu0 0
  %1146 = vmatprep.subr.bf16.mxu0 0
  %1147 = vmatpush1.bf16.msra.mxu0 0
  %1148 = vmatprep.subr.bf16.mxu0 0
  %1149 = vmatpush1.bf16.msra.mxu0 0
  %1150 = vmatprep.subr.bf16.mxu0 0
  %1151 = vmatpush1.bf16.msra.mxu0 0
  %1152 = vmatprep.subr.bf16.mxu0 0
  %1153 = vmatpush1.bf16.msra.mxu0 0
  %1154 = vmatprep.subr.bf16.mxu0 0
  %1155 = vmatpush1.bf16.msra.mxu0 0
  %1156 = vmatprep.subr.bf16.mxu0 0
  %1157 = vmatpush1.bf16.msra.mxu0 0
  %1158 = vmatprep.mubr.bf16.mxu0 0
  %1159 = vmatmul.mubr.bf16.gmra.mrb[0].mxu0 %v1124
  %v1160 = vpop.f32.mrb[0].mxu0
  %v1161 = vadd.f32 %v1058, %v1160
  %v1162 = vpop.f32.mrb[0].mxu0
  %v1163 = vpop.f32.mrb[0].mxu0
  %v1164 = vpop.f32.mrb[0].mxu0
  %1165 = vdwg.mxu0
  %v1166 = vld [vmem:[%s1040] sm:$0xff]
  %1168 = vset.pattern.permute.xlu0 0
  %1169 = vperm.xlu0 %1168, %v1166
  %v1170 = vpop.permute.xlu0 %1169
  %v1172 = vmul.f32 %v1170, %v1161
  %v1173 = vadd.f32 %v944, %v1172
  %s1174 = scalar_lea.vmem %s22, 8
  %1175 = vst.msk [vmem:[%s1174] sm:$0xff] %vm929, %v1173
  %v1176 = vpack.c.bf16 %v1173, %v1173
  %s1177 = scalar_lea.vmem [#allocation3], 8
  %v1178 = vld [vmem:[%s1177] sm:$0xff]
  %v1180 = vsel %vm929, %v1176, 0
  %1182 = vmatprep.subr.bf16.mxu0 0
  %1183 = vmatpush1.bf16.msra.mxu0 %v1067
  %1184 = vmatprep.subr.bf16.mxu0 0
  %1185 = vmatpush1.bf16.msra.mxu0 0
  %1186 = vmatprep.subr.bf16.mxu0 0
  %1187 = vmatpush1.bf16.msra.mxu0 0
  %1188 = vmatprep.subr.bf16.mxu0 0
  %1189 = vmatpush1.bf16.msra.mxu0 0
  %1190 = vmatprep.subr.bf16.mxu0 0
  %1191 = vmatpush1.bf16.msra.mxu0 0
  %1192 = vmatprep.subr.bf16.mxu0 0
  %1193 = vmatpush1.bf16.msra.mxu0 0
  %1194 = vmatprep.subr.bf16.mxu0 0
  %1195 = vmatpush1.bf16.msra.mxu0 0
  %1196 = vmatprep.subr.bf16.mxu0 0
  %1197 = vmatpush1.bf16.msra.mxu0 0
  %1198 = vmatprep.subr.bf16.mxu0 0
  %1199 = vmatpush1.bf16.msra.mxu0 0
  %1200 = vmatprep.subr.bf16.mxu0 0
  %1201 = vmatpush1.bf16.msra.mxu0 0
  %1202 = vmatprep.subr.bf16.mxu0 0
  %1203 = vmatpush1.bf16.msra.mxu0 0
  %1204 = vmatprep.subr.bf16.mxu0 0
  %1205 = vmatpush1.bf16.msra.mxu0 0
  %1206 = vmatprep.subr.bf16.mxu0 0
  %1207 = vmatpush1.bf16.msra.mxu0 0
  %1208 = vmatprep.subr.bf16.mxu0 0
  %1209 = vmatpush1.bf16.msra.mxu0 0
  %1210 = vmatprep.subr.bf16.mxu0 0
  %1211 = vmatpush1.bf16.msra.mxu0 0
  %1212 = vmatprep.subr.bf16.mxu0 0
  %1213 = vmatpush1.bf16.msra.mxu0 0
  %1214 = vmatprep.mubr.bf16.mxu0 0
  %1215 = vmatmul.mubr.bf16.gmra.mrb[0].mxu0 %v1180
  %v1216 = vpop.f32.mrb[0].mxu0
  %v1217 = vadd.f32 %v1178, %v1216
  %v1218 = vpop.f32.mrb[0].mxu0
  %v1219 = vpop.f32.mrb[0].mxu0
  %v1220 = vpop.f32.mrb[0].mxu0
  %1221 = vdwg.mxu0
  %v1222 = vtanh.pop %v1217
  %v1223 = vpack.c.bf16 %v1222, %v1222
  %v1225 = vsel %vm207, %v1223, 0
  %1227 = vmatprep.subr.bf16.mxu0 0
  %1228 = vmatpush1.bf16.msra.mxu0 %v1119
  %1229 = vmatprep.subr.bf16.mxu0 0
  %1230 = vmatpush1.bf16.msra.mxu0 %v1120
  %1231 = vmatprep.subr.bf16.mxu0 0
  %1232 = vmatpush1.bf16.msra.mxu0 0
  %1233 = vmatprep.subr.bf16.mxu0 0
  %1234 = vmatpush1.bf16.msra.mxu0 0
  %1235 = vmatprep.subr.bf16.mxu0 0
  %1236 = vmatpush1.bf16.msra.mxu0 0
  %1237 = vmatprep.subr.bf16.mxu0 0
  %1238 = vmatpush1.bf16.msra.mxu0 0
  %1239 = vmatprep.subr.bf16.mxu0 0
  %1240 = vmatpush1.bf16.msra.mxu0 0
  %1241 = vmatprep.subr.bf16.mxu0 0
  %1242 = vmatpush1.bf16.msra.mxu0 0
  %1243 = vmatprep.subr.bf16.mxu0 0
  %1244 = vmatpush1.bf16.msra.mxu0 0
  %1245 = vmatprep.subr.bf16.mxu0 0
  %1246 = vmatpush1.bf16.msra.mxu0 0
  %1247 = vmatprep.subr.bf16.mxu0 0
  %1248 = vmatpush1.bf16.msra.mxu0 0
  %1249 = vmatprep.subr.bf16.mxu0 0
  %1250 = vmatpush1.bf16.msra.mxu0 0
  %1251 = vmatprep.subr.bf16.mxu0 0
  %1252 = vmatpush1.bf16.msra.mxu0 0
  %1253 = vmatprep.subr.bf16.mxu0 0
  %1254 = vmatpush1.bf16.msra.mxu0 0
  %1255 = vmatprep.subr.bf16.mxu0 0
  %1256 = vmatpush1.bf16.msra.mxu0 0
  %1257 = vmatprep.subr.bf16.mxu0 0
  %1258 = vmatpush1.bf16.msra.mxu0 0
  %1259 = vmatprep.mubr.bf16.mxu0 0
  %1260 = vmatmul.mubr.bf16.gmra.mrb[0].mxu0 %v1225
  %v1261 = vpop.f32.mrb[0].mxu0
  %v1262 = vadd.f32 %v1058, %v1261
  %v1263 = vpop.f32.mrb[0].mxu0
  %v1264 = vpop.f32.mrb[0].mxu0
  %v1265 = vpop.f32.mrb[0].mxu0
  %1266 = vdwg.mxu0
  %s1267 = scalar_lea.vmem [#allocation4], 16
  %v1268 = vld [vmem:[%s1267] sm:$0xff]
  %1270 = vset.pattern.permute.xlu0 0
  %1271 = vperm.xlu0 %1270, %v1268
  %v1272 = vpop.permute.xlu0 %1271
  %v1274 = vmul.f32 %v1272, %v1262
  %v1275 = vadd.f32 %v1173, %v1274
  %s1276 = scalar_lea.vmem %s22, 16
  %1277 = vst.msk [vmem:[%s1276] sm:$0xff] %vm929, %v1275
  %v1278 = vpack.c.bf16 %v1275, %v1275
  %s1279 = scalar_lea.vmem [#allocation3], 16
  %v1280 = vld [vmem:[%s1279] sm:$0xff]
  %v1282 = vsel %vm929, %v1278, 0
  %1284 = vmatprep.subr.bf16.mxu0 0
  %1285 = vmatpush1.bf16.msra.mxu0 %v1067
  %1286 = vmatprep.subr.bf16.mxu0 0
  %1287 = vmatpush1.bf16.msra.mxu0 0
  %1288 = vmatprep.subr.bf16.mxu0 0
  %1289 = vmatpush1.bf16.msra.mxu0 0
  %1290 = vmatprep.subr.bf16.mxu0 0
  %1291 = vmatpush1.bf16.msra.mxu0 0
  %1292 = vmatprep.subr.bf16.mxu0 0
  %1293 = vmatpush1.bf16.msra.mxu0 0
  %1294 = vmatprep.subr.bf16.mxu0 0
  %1295 = vmatpush1.bf16.msra.mxu0 0
  %1296 = vmatprep.subr.bf16.mxu0 0
  %1297 = vmatpush1.bf16.msra.mxu0 0
  %1298 = vmatprep.subr.bf16.mxu0 0
  %1299 = vmatpush1.bf16.msra.mxu0 0
  %1300 = vmatprep.subr.bf16.mxu0 0
  %1301 = vmatpush1.bf16.msra.mxu0 0
  %1302 = vmatprep.subr.bf16.mxu0 0
  %1303 = vmatpush1.bf16.msra.mxu0 0
  %1304 = vmatprep.subr.bf16.mxu0 0
  %1305 = vmatpush1.bf16.msra.mxu0 0
  %1306 = vmatprep.subr.bf16.mxu0 0
  %1307 = vmatpush1.bf16.msra.mxu0 0
  %1308 = vmatprep.subr.bf16.mxu0 0
  %1309 = vmatpush1.bf16.msra.mxu0 0
  %1310 = vmatprep.subr.bf16.mxu0 0
  %1311 = vmatpush1.bf16.msra.mxu0 0
  %1312 = vmatprep.subr.bf16.mxu0 0
  %1313 = vmatpush1.bf16.msra.mxu0 0
  %1314 = vmatprep.subr.bf16.mxu0 0
  %1315 = vmatpush1.bf16.msra.mxu0 0
  %1316 = vmatprep.mubr.bf16.mxu0 0
  %1317 = vmatmul.mubr.bf16.gmra.mrb[0].mxu0 %v1282
  %v1318 = vpop.f32.mrb[0].mxu0
  %v1319 = vadd.f32 %v1280, %v1318
  %v1320 = vpop.f32.mrb[0].mxu0
  %v1321 = vpop.f32.mrb[0].mxu0
  %v1322 = vpop.f32.mrb[0].mxu0
  %1323 = vdwg.mxu0
  %v1324 = vtanh.pop %v1319
  %v1325 = vpack.c.bf16 %v1324, %v1324
  %v1327 = vsel %vm207, %v1325, 0
  %1329 = vmatprep.subr.bf16.mxu0 0
  %1330 = vmatpush1.bf16.msra.mxu0 %v1119
  %1331 = vmatprep.subr.bf16.mxu0 0
  %1332 = vmatpush1.bf16.msra.mxu0 %v1120
  %1333 = vmatprep.subr.bf16.mxu0 0
  %1334 = vmatpush1.bf16.msra.mxu0 0
  %1335 = vmatprep.subr.bf16.mxu0 0
  %1336 = vmatpush1.bf16.msra.mxu0 0
  %1337 = vmatprep.subr.bf16.mxu0 0
  %1338 = vmatpush1.bf16.msra.mxu0 0
  %1339 = vmatprep.subr.bf16.mxu0 0
  %1340 = vmatpush1.bf16.msra.mxu0 0
  %1341 = vmatprep.subr.bf16.mxu0 0
  %1342 = vmatpush1.bf16.msra.mxu0 0
  %1343 = vmatprep.subr.bf16.mxu0 0
  %1344 = vmatpush1.bf16.msra.mxu0 0
  %1345 = vmatprep.subr.bf16.mxu0 0
  %1346 = vmatpush1.bf16.msra.mxu0 0
  %1347 = vmatprep.subr.bf16.mxu0 0
  %1348 = vmatpush1.bf16.msra.mxu0 0
  %1349 = vmatprep.subr.bf16.mxu0 0
  %1350 = vmatpush1.bf16.msra.mxu0 0
  %1351 = vmatprep.subr.bf16.mxu0 0
  %1352 = vmatpush1.bf16.msra.mxu0 0
  %1353 = vmatprep.subr.bf16.mxu0 0
  %1354 = vmatpush1.bf16.msra.mxu0 0
  %1355 = vmatprep.subr.bf16.mxu0 0
  %1356 = vmatpush1.bf16.msra.mxu0 0
  %1357 = vmatprep.subr.bf16.mxu0 0
  %1358 = vmatpush1.bf16.msra.mxu0 0
  %1359 = vmatprep.subr.bf16.mxu0 0
  %1360 = vmatpush1.bf16.msra.mxu0 0
  %1361 = vmatprep.mubr.bf16.mxu0 0
  %1362 = vmatmul.mubr.bf16.gmra.mrb[0].mxu0 %v1327
  %v1363 = vpop.f32.mrb[0].mxu0
  %v1364 = vadd.f32 %v1058, %v1363
  %v1365 = vpop.f32.mrb[0].mxu0
  %v1366 = vpop.f32.mrb[0].mxu0
  %v1367 = vpop.f32.mrb[0].mxu0
  %1368 = vdwg.mxu0
  %s1369 = scalar_lea.vmem [#allocation4], 24
  %v1370 = vld [vmem:[%s1369] sm:$0xff]
  %1372 = vset.pattern.permute.xlu0 0
  %1373 = vperm.xlu0 %1372, %v1370
  %v1374 = vpop.permute.xlu0 %1373
  %v1376 = vmul.f32 %v1374, %v1364
  %v1377 = vadd.f32 %v1275, %v1376
  %s1378 = scalar_lea.vmem %s22, 24
  %1379 = vst.msk [vmem:[%s1378] sm:$0xff] %vm929, %v1377
  %v1380 = vpack.c.bf16 %v1377, %v1377
  %s1381 = scalar_lea.vmem [#allocation3], 24
  %v1382 = vld [vmem:[%s1381] sm:$0xff]
  %v1384 = vsel %vm929, %v1380, 0
  %1386 = vmatprep.subr.bf16.mxu0 0
  %1387 = vmatpush1.bf16.msra.mxu0 %v1067
  %1388 = vmatprep.subr.bf16.mxu0 0
  %1389 = vmatpush1.bf16.msra.mxu0 0
  %1390 = vmatprep.subr.bf16.mxu0 0
  %1391 = vmatpush1.bf16.msra.mxu0 0
  %1392 = vmatprep.subr.bf16.mxu0 0
  %1393 = vmatpush1.bf16.msra.mxu0 0
  %1394 = vmatprep.subr.bf16.mxu0 0
  %1395 = vmatpush1.bf16.msra.mxu0 0
  %1396 = vmatprep.subr.bf16.mxu0 0
  %1397 = vmatpush1.bf16.msra.mxu0 0
  %1398 = vmatprep.subr.bf16.mxu0 0
  %1399 = vmatpush1.bf16.msra.mxu0 0
  %1400 = vmatprep.subr.bf16.mxu0 0
  %1401 = vmatpush1.bf16.msra.mxu0 0
  %1402 = vmatprep.subr.bf16.mxu0 0
  %1403 = vmatpush1.bf16.msra.mxu0 0
  %1404 = vmatprep.subr.bf16.mxu0 0
  %1405 = vmatpush1.bf16.msra.mxu0 0
  %1406 = vmatprep.subr.bf16.mxu0 0
  %1407 = vmatpush1.bf16.msra.mxu0 0
  %1408 = vmatprep.subr.bf16.mxu0 0
  %1409 = vmatpush1.bf16.msra.mxu0 0
  %1410 = vmatprep.subr.bf16.mxu0 0
  %1411 = vmatpush1.bf16.msra.mxu0 0
  %1412 = vmatprep.subr.bf16.mxu0 0
  %1413 = vmatpush1.bf16.msra.mxu0 0
  %1414 = vmatprep.subr.bf16.mxu0 0
  %1415 = vmatpush1.bf16.msra.mxu0 0
  %1416 = vmatprep.subr.bf16.mxu0 0
  %1417 = vmatpush1.bf16.msra.mxu0 0
  %1418 = vmatprep.mubr.bf16.mxu0 0
  %1419 = vmatmul.mubr.bf16.gmra.mrb[0].mxu0 %v1384
  %v1420 = vpop.f32.mrb[0].mxu0
  %v1421 = vadd.f32 %v1382, %v1420
  %v1422 = vpop.f32.mrb[0].mxu0
  %v1423 = vpop.f32.mrb[0].mxu0
  %v1424 = vpop.f32.mrb[0].mxu0
  %1425 = vdwg.mxu0
  %v1426 = vtanh.pop %v1421
  %v1427 = vpack.c.bf16 %v1426, %v1426
  %v1429 = vsel %vm207, %v1427, 0
  %1431 = vmatprep.subr.bf16.mxu0 0
  %1432 = vmatpush1.bf16.msra.mxu0 %v1119
  %1433 = vmatprep.subr.bf16.mxu0 0
  %1434 = vmatpush1.bf16.msra.mxu0 %v1120
  %1435 = vmatprep.subr.bf16.mxu0 0
  %1436 = vmatpush1.bf16.msra.mxu0 0
  %1437 = vmatprep.subr.bf16.mxu0 0
  %1438 = vmatpush1.bf16.msra.mxu0 0
  %1439 = vmatprep.subr.bf16.mxu0 0
  %1440 = vmatpush1.bf16.msra.mxu0 0
  %1441 = vmatprep.subr.bf16.mxu0 0
  %1442 = vmatpush1.bf16.msra.mxu0 0
  %1443 = vmatprep.subr.bf16.mxu0 0
  %1444 = vmatpush1.bf16.msra.mxu0 0
  %1445 = vmatprep.subr.bf16.mxu0 0
  %1446 = vmatpush1.bf16.msra.mxu0 0
  %1447 = vmatprep.subr.bf16.mxu0 0
  %1448 = vmatpush1.bf16.msra.mxu0 0
  %1449 = vmatprep.subr.bf16.mxu0 0
  %1450 = vmatpush1.bf16.msra.mxu0 0
  %1451 = vmatprep.subr.bf16.mxu0 0
  %1452 = vmatpush1.bf16.msra.mxu0 0
  %1453 = vmatprep.subr.bf16.mxu0 0
  %1454 = vmatpush1.bf16.msra.mxu0 0
  %1455 = vmatprep.subr.bf16.mxu0 0
  %1456 = vmatpush1.bf16.msra.mxu0 0
  %1457 = vmatprep.subr.bf16.mxu0 0
  %1458 = vmatpush1.bf16.msra.mxu0 0
  %1459 = vmatprep.subr.bf16.mxu0 0
  %1460 = vmatpush1.bf16.msra.mxu0 0
  %1461 = vmatprep.subr.bf16.mxu0 0
  %1462 = vmatpush1.bf16.msra.mxu0 0
  %1463 = vmatprep.mubr.bf16.mxu0 0
  %1464 = vmatmul.mubr.bf16.gmra.mrb[0].mxu0 %v1429
  %v1465 = vpop.f32.mrb[0].mxu0
  %v1466 = vadd.f32 %v1058, %v1465
  %v1467 = vpop.f32.mrb[0].mxu0
  %v1468 = vpop.f32.mrb[0].mxu0
  %v1469 = vpop.f32.mrb[0].mxu0
  %1470 = vdwg.mxu0
  %s1471 = scalar_lea.vmem [#allocation4], 32
  %v1472 = vld [vmem:[%s1471] sm:$0xff]
  %1474 = vset.pattern.permute.xlu0 0
  %1475 = vperm.xlu0 %1474, %v1472
  %v1476 = vpop.permute.xlu0 %1475
  %v1478 = vmul.f32 %v1476, %v1466
  %v1479 = vadd.f32 %v1377, %v1478
  %s1480 = scalar_lea.vmem %s22, 32
  %1481 = vst.msk [vmem:[%s1480] sm:$0xff] %vm929, %v1479
  %v1482 = vpack.c.bf16 %v1479, %v1479
  %s1483 = scalar_lea.vmem [#allocation3], 32
  %v1484 = vld [vmem:[%s1483] sm:$0xff]
  %v1486 = vsel %vm929, %v1482, 0
  %1488 = vmatprep.subr.bf16.mxu0 0
  %1489 = vmatpush1.bf16.msra.mxu0 %v1067
  %1490 = vmatprep.subr.bf16.mxu0 0
  %1491 = vmatpush1.bf16.msra.mxu0 0
  %1492 = vmatprep.subr.bf16.mxu0 0
  %1493 = vmatpush1.bf16.msra.mxu0 0
  %1494 = vmatprep.subr.bf16.mxu0 0
  %1495 = vmatpush1.bf16.msra.mxu0 0
  %1496 = vmatprep.subr.bf16.mxu0 0
  %1497 = vmatpush1.bf16.msra.mxu0 0
  %1498 = vmatprep.subr.bf16.mxu0 0
  %1499 = vmatpush1.bf16.msra.mxu0 0
  %1500 = vmatprep.subr.bf16.mxu0 0
  %1501 = vmatpush1.bf16.msra.mxu0 0
  %1502 = vmatprep.subr.bf16.mxu0 0
  %1503 = vmatpush1.bf16.msra.mxu0 0
  %1504 = vmatprep.subr.bf16.mxu0 0
  %1505 = vmatpush1.bf16.msra.mxu0 0
  %1506 = vmatprep.subr.bf16.mxu0 0
  %1507 = vmatpush1.bf16.msra.mxu0 0
  %1508 = vmatprep.subr.bf16.mxu0 0
  %1509 = vmatpush1.bf16.msra.mxu0 0
  %1510 = vmatprep.subr.bf16.mxu0 0
  %1511 = vmatpush1.bf16.msra.mxu0 0
  %1512 = vmatprep.subr.bf16.mxu0 0
  %1513 = vmatpush1.bf16.msra.mxu0 0
  %1514 = vmatprep.subr.bf16.mxu0 0
  %1515 = vmatpush1.bf16.msra.mxu0 0
  %1516 = vmatprep.subr.bf16.mxu0 0
  %1517 = vmatpush1.bf16.msra.mxu0 0
  %1518 = vmatprep.subr.bf16.mxu0 0
  %1519 = vmatpush1.bf16.msra.mxu0 0
  %1520 = vmatprep.mubr.bf16.mxu0 0
  %1521 = vmatmul.mubr.bf16.gmra.mrb[0].mxu0 %v1486
  %v1522 = vpop.f32.mrb[0].mxu0
  %v1523 = vadd.f32 %v1484, %v1522
  %v1524 = vpop.f32.mrb[0].mxu0
  %v1525 = vpop.f32.mrb[0].mxu0
  %v1526 = vpop.f32.mrb[0].mxu0
  %1527 = vdwg.mxu0
  %v1528 = vtanh.pop %v1523
  %v1529 = vpack.c.bf16 %v1528, %v1528
  %v1531 = vsel %vm207, %v1529, 0
  %1533 = vmatprep.subr.bf16.mxu0 0
  %1534 = vmatpush1.bf16.msra.mxu0 %v1119
  %1535 = vmatprep.subr.bf16.mxu0 0
  %1536 = vmatpush1.bf16.msra.mxu0 %v1120
  %1537 = vmatprep.subr.bf16.mxu0 0
  %1538 = vmatpush1.bf16.msra.mxu0 0
  %1539 = vmatprep.subr.bf16.mxu0 0
  %1540 = vmatpush1.bf16.msra.mxu0 0
  %1541 = vmatprep.subr.bf16.mxu0 0
  %1542 = vmatpush1.bf16.msra.mxu0 0
  %1543 = vmatprep.subr.bf16.mxu0 0
  %1544 = vmatpush1.bf16.msra.mxu0 0
  %1545 = vmatprep.subr.bf16.mxu0 0
  %1546 = vmatpush1.bf16.msra.mxu0 0
  %1547 = vmatprep.subr.bf16.mxu0 0
  %1548 = vmatpush1.bf16.msra.mxu0 0
  %1549 = vmatprep.subr.bf16.mxu0 0
  %1550 = vmatpush1.bf16.msra.mxu0 0
  %1551 = vmatprep.subr.bf16.mxu0 0
  %1552 = vmatpush1.bf16.msra.mxu0 0
  %1553 = vmatprep.subr.bf16.mxu0 0
  %1554 = vmatpush1.bf16.msra.mxu0 0
  %1555 = vmatprep.subr.bf16.mxu0 0
  %1556 = vmatpush1.bf16.msra.mxu0 0
  %1557 = vmatprep.subr.bf16.mxu0 0
  %1558 = vmatpush1.bf16.msra.mxu0 0
  %1559 = vmatprep.subr.bf16.mxu0 0
  %1560 = vmatpush1.bf16.msra.mxu0 0
  %1561 = vmatprep.subr.bf16.mxu0 0
  %1562 = vmatpush1.bf16.msra.mxu0 0
  %1563 = vmatprep.subr.bf16.mxu0 0
  %1564 = vmatpush1.bf16.msra.mxu0 0
  %1565 = vmatprep.mubr.bf16.mxu0 0
  %1566 = vmatmul.mubr.bf16.gmra.mrb[0].mxu0 %v1531
  %v1567 = vpop.f32.mrb[0].mxu0
  %v1568 = vadd.f32 %v1058, %v1567
  %v1569 = vpop.f32.mrb[0].mxu0
  %v1570 = vpop.f32.mrb[0].mxu0
  %v1571 = vpop.f32.mrb[0].mxu0
  %1572 = vdwg.mxu0
  %s1573 = scalar_lea.vmem [#allocation4], 40
  %v1574 = vld [vmem:[%s1573] sm:$0xff]
  %1576 = vset.pattern.permute.xlu0 0
  %1577 = vperm.xlu0 %1576, %v1574
  %v1578 = vpop.permute.xlu0 %1577
  %v1580 = vmul.f32 %v1578, %v1568
  %v1581 = vadd.f32 %v1479, %v1580
  %s1582 = scalar_lea.vmem %s22, 40
  %1583 = vst.msk [vmem:[%s1582] sm:$0xff] %vm929, %v1581
  %v1584 = vpack.c.bf16 %v1581, %v1581
  %s1585 = scalar_lea.vmem [#allocation3], 40
  %v1586 = vld [vmem:[%s1585] sm:$0xff]
  %v1588 = vsel %vm929, %v1584, 0
  %1590 = vmatprep.subr.bf16.mxu0 0
  %1591 = vmatpush1.bf16.msra.mxu0 %v1067
  %1592 = vmatprep.subr.bf16.mxu0 0
  %1593 = vmatpush1.bf16.msra.mxu0 0
  %1594 = vmatprep.subr.bf16.mxu0 0
  %1595 = vmatpush1.bf16.msra.mxu0 0
  %1596 = vmatprep.subr.bf16.mxu0 0
  %1597 = vmatpush1.bf16.msra.mxu0 0
  %1598 = vmatprep.subr.bf16.mxu0 0
  %1599 = vmatpush1.bf16.msra.mxu0 0
  %1600 = vmatprep.subr.bf16.mxu0 0
  %1601 = vmatpush1.bf16.msra.mxu0 0
  %1602 = vmatprep.subr.bf16.mxu0 0
  %1603 = vmatpush1.bf16.msra.mxu0 0
  %1604 = vmatprep.subr.bf16.mxu0 0
  %1605 = vmatpush1.bf16.msra.mxu0 0
  %1606 = vmatprep.subr.bf16.mxu0 0
  %1607 = vmatpush1.bf16.msra.mxu0 0
  %1608 = vmatprep.subr.bf16.mxu0 0
  %1609 = vmatpush1.bf16.msra.mxu0 0
  %1610 = vmatprep.subr.bf16.mxu0 0
  %1611 = vmatpush1.bf16.msra.mxu0 0
  %1612 = vmatprep.subr.bf16.mxu0 0
  %1613 = vmatpush1.bf16.msra.mxu0 0
  %1614 = vmatprep.subr.bf16.mxu0 0
  %1615 = vmatpush1.bf16.msra.mxu0 0
  %1616 = vmatprep.subr.bf16.mxu0 0
  %1617 = vmatpush1.bf16.msra.mxu0 0
  %1618 = vmatprep.subr.bf16.mxu0 0
  %1619 = vmatpush1.bf16.msra.mxu0 0
  %1620 = vmatprep.subr.bf16.mxu0 0
  %1621 = vmatpush1.bf16.msra.mxu0 0
  %1622 = vmatprep.mubr.bf16.mxu0 0
  %1623 = vmatmul.mubr.bf16.gmra.mrb[0].mxu0 %v1588
  %v1624 = vpop.f32.mrb[0].mxu0
  %v1625 = vadd.f32 %v1586, %v1624
  %v1626 = vpop.f32.mrb[0].mxu0
  %v1627 = vpop.f32.mrb[0].mxu0
  %v1628 = vpop.f32.mrb[0].mxu0
  %1629 = vdwg.mxu0
  %v1630 = vtanh.pop %v1625
  %v1631 = vpack.c.bf16 %v1630, %v1630
  %v1633 = vsel %vm207, %v1631, 0
  %1635 = vmatprep.subr.bf16.mxu0 0
  %1636 = vmatpush1.bf16.msra.mxu0 %v1119
  %1637 = vmatprep.subr.bf16.mxu0 0
  %1638 = vmatpush1.bf16.msra.mxu0 %v1120
  %1639 = vmatprep.subr.bf16.mxu0 0
  %1640 = vmatpush1.bf16.msra.mxu0 0
  %1641 = vmatprep.subr.bf16.mxu0 0
  %1642 = vmatpush1.bf16.msra.mxu0 0
  %1643 = vmatprep.subr.bf16.mxu0 0
  %1644 = vmatpush1.bf16.msra.mxu0 0
  %1645 = vmatprep.subr.bf16.mxu0 0
  %1646 = vmatpush1.bf16.msra.mxu0 0
  %1647 = vmatprep.subr.bf16.mxu0 0
  %1648 = vmatpush1.bf16.msra.mxu0 0
  %1649 = vmatprep.subr.bf16.mxu0 0
  %1650 = vmatpush1.bf16.msra.mxu0 0
  %1651 = vmatprep.subr.bf16.mxu0 0
  %1652 = vmatpush1.bf16.msra.mxu0 0
  %1653 = vmatprep.subr.bf16.mxu0 0
  %1654 = vmatpush1.bf16.msra.mxu0 0
  %1655 = vmatprep.subr.bf16.mxu0 0
  %1656 = vmatpush1.bf16.msra.mxu0 0
  %1657 = vmatprep.subr.bf16.mxu0 0
  %1658 = vmatpush1.bf16.msra.mxu0 0
  %1659 = vmatprep.subr.bf16.mxu0 0
  %1660 = vmatpush1.bf16.msra.mxu0 0
  %1661 = vmatprep.subr.bf16.mxu0 0
  %1662 = vmatpush1.bf16.msra.mxu0 0
  %1663 = vmatprep.subr.bf16.mxu0 0
  %1664 = vmatpush1.bf16.msra.mxu0 0
  %1665 = vmatprep.subr.bf16.mxu0 0
  %1666 = vmatpush1.bf16.msra.mxu0 0
  %1667 = vmatprep.mubr.bf16.mxu0 0
  %1668 = vmatmul.mubr.bf16.gmra.mrb[0].mxu0 %v1633
  %v1669 = vpop.f32.mrb[0].mxu0
  %v1670 = vadd.f32 %v1058, %v1669
  %v1671 = vpop.f32.mrb[0].mxu0
  %v1672 = vpop.f32.mrb[0].mxu0
  %v1673 = vpop.f32.mrb[0].mxu0
  %1674 = vdwg.mxu0
  %s1675 = scalar_lea.vmem [#allocation4], 48
  %v1676 = vld [vmem:[%s1675] sm:$0xff]
  %1678 = vset.pattern.permute.xlu0 0
  %1679 = vperm.xlu0 %1678, %v1676
  %v1680 = vpop.permute.xlu0 %1679
  %v1682 = vmul.f32 %v1680, %v1670
  %v1683 = vadd.f32 %v1581, %v1682
  %s1684 = scalar_lea.vmem %s22, 48
  %1685 = vst.msk [vmem:[%s1684] sm:$0xff] %vm929, %v1683
  %v1686 = vpack.c.bf16 %v1683, %v1683
  %s1687 = scalar_lea.vmem [#allocation3], 48
  %v1688 = vld [vmem:[%s1687] sm:$0xff]
  %v1690 = vsel %vm929, %v1686, 0
  %1692 = vmatprep.subr.bf16.mxu0 0
  %1693 = vmatpush1.bf16.msra.mxu0 %v1067
  %1694 = vmatprep.subr.bf16.mxu0 0
  %1695 = vmatpush1.bf16.msra.mxu0 0
  %1696 = vmatprep.subr.bf16.mxu0 0
  %1697 = vmatpush1.bf16.msra.mxu0 0
  %1698 = vmatprep.subr.bf16.mxu0 0
  %1699 = vmatpush1.bf16.msra.mxu0 0
  %1700 = vmatprep.subr.bf16.mxu0 0
  %1701 = vmatpush1.bf16.msra.mxu0 0
  %1702 = vmatprep.subr.bf16.mxu0 0
  %1703 = vmatpush1.bf16.msra.mxu0 0
  %1704 = vmatprep.subr.bf16.mxu0 0
  %1705 = vmatpush1.bf16.msra.mxu0 0
  %1706 = vmatprep.subr.bf16.mxu0 0
  %1707 = vmatpush1.bf16.msra.mxu0 0
  %1708 = vmatprep.subr.bf16.mxu0 0
  %1709 = vmatpush1.bf16.msra.mxu0 0
  %1710 = vmatprep.subr.bf16.mxu0 0
  %1711 = vmatpush1.bf16.msra.mxu0 0
  %1712 = vmatprep.subr.bf16.mxu0 0
  %1713 = vmatpush1.bf16.msra.mxu0 0
  %1714 = vmatprep.subr.bf16.mxu0 0
  %1715 = vmatpush1.bf16.msra.mxu0 0
  %1716 = vmatprep.subr.bf16.mxu0 0
  %1717 = vmatpush1.bf16.msra.mxu0 0
  %1718 = vmatprep.subr.bf16.mxu0 0
  %1719 = vmatpush1.bf16.msra.mxu0 0
  %1720 = vmatprep.subr.bf16.mxu0 0
  %1721 = vmatpush1.bf16.msra.mxu0 0
  %1722 = vmatprep.subr.bf16.mxu0 0
  %1723 = vmatpush1.bf16.msra.mxu0 0
  %1724 = vmatprep.mubr.bf16.mxu0 0
  %1725 = vmatmul.mubr.bf16.gmra.mrb[0].mxu0 %v1690
  %v1726 = vpop.f32.mrb[0].mxu0
  %v1727 = vadd.f32 %v1688, %v1726
  %v1728 = vpop.f32.mrb[0].mxu0
  %v1729 = vpop.f32.mrb[0].mxu0
  %v1730 = vpop.f32.mrb[0].mxu0
  %1731 = vdwg.mxu0
  %v1732 = vtanh.pop %v1727
  %v1733 = vpack.c.bf16 %v1732, %v1732
  %v1735 = vsel %vm207, %v1733, 0
  %1737 = vmatprep.subr.bf16.mxu0 0
  %1738 = vmatpush1.bf16.msra.mxu0 %v1119
  %1739 = vmatprep.subr.bf16.mxu0 0
  %1740 = vmatpush1.bf16.msra.mxu0 %v1120
  %1741 = vmatprep.subr.bf16.mxu0 0
  %1742 = vmatpush1.bf16.msra.mxu0 0
  %1743 = vmatprep.subr.bf16.mxu0 0
  %1744 = vmatpush1.bf16.msra.mxu0 0
  %1745 = vmatprep.subr.bf16.mxu0 0
  %1746 = vmatpush1.bf16.msra.mxu0 0
  %1747 = vmatprep.subr.bf16.mxu0 0
  %1748 = vmatpush1.bf16.msra.mxu0 0
  %1749 = vmatprep.subr.bf16.mxu0 0
  %1750 = vmatpush1.bf16.msra.mxu0 0
  %1751 = vmatprep.subr.bf16.mxu0 0
  %1752 = vmatpush1.bf16.msra.mxu0 0
  %1753 = vmatprep.subr.bf16.mxu0 0
  %1754 = vmatpush1.bf16.msra.mxu0 0
  %1755 = vmatprep.subr.bf16.mxu0 0
  %1756 = vmatpush1.bf16.msra.mxu0 0
  %1757 = vmatprep.subr.bf16.mxu0 0
  %1758 = vmatpush1.bf16.msra.mxu0 0
  %1759 = vmatprep.subr.bf16.mxu0 0
  %1760 = vmatpush1.bf16.msra.mxu0 0
  %1761 = vmatprep.subr.bf16.mxu0 0
  %1762 = vmatpush1.bf16.msra.mxu0 0
  %1763 = vmatprep.subr.bf16.mxu0 0
  %1764 = vmatpush1.bf16.msra.mxu0 0
  %1765 = vmatprep.subr.bf16.mxu0 0
  %1766 = vmatpush1.bf16.msra.mxu0 0
  %1767 = vmatprep.subr.bf16.mxu0 0
  %1768 = vmatpush1.bf16.msra.mxu0 0
  %1769 = vmatprep.mubr.bf16.mxu0 0
  %1770 = vmatmul.mubr.bf16.gmra.mrb[0].mxu0 %v1735
  %v1771 = vpop.f32.mrb[0].mxu0
  %v1772 = vadd.f32 %v1058, %v1771
  %v1773 = vpop.f32.mrb[0].mxu0
  %v1774 = vpop.f32.mrb[0].mxu0
  %v1775 = vpop.f32.mrb[0].mxu0
  %1776 = vdwg.mxu0
  %s1777 = scalar_lea.vmem [#allocation4], 56
  %v1778 = vld [vmem:[%s1777] sm:$0xff]
  %1780 = vset.pattern.permute.xlu0 0
  %1781 = vperm.xlu0 %1780, %v1778
  %v1782 = vpop.permute.xlu0 %1781
  %v1784 = vmul.f32 %v1782, %v1772
  %v1785 = vadd.f32 %v1683, %v1784
  %s1786 = scalar_lea.vmem %s22, 56
  %1787 = vst.msk [vmem:[%s1786] sm:$0xff] %vm929, %v1785
  %v1788 = vld [vmem:[%s22] sm:$0xff]
  %v1789 = vld [vmem:[%s22 + $0x8] sm:$0xff]
  %v1790 = vld [vmem:[%s22 + $0x10] sm:$0xff]
  %v1791 = vld [vmem:[%s22 + $0x18] sm:$0xff]
  %v1792 = vld [vmem:[%s22 + $0x20] sm:$0xff]
  %v1793 = vld [vmem:[%s22 + $0x28] sm:$0xff]
  %v1794 = vld [vmem:[%s22 + $0x30] sm:$0xff]
  %v1795 = vld [vmem:[%s22 + $0x38] sm:$0xff]
  %v1796 = vpack.c.bf16 %v1789, %v1788
  %v1797 = vpack.c.bf16 %v1791, %v1790
  %v1798 = vpack.c.bf16 %v1793, %v1792
  %v1799 = vpack.c.bf16 %v1795, %v1794
  %v1800 = vld [vmem:[%s16] sm:$0xf]
  %v1801 = vld [vmem:[%s17] sm:$0x1]
  %v1803 = vlaneseq
  %v1804 = vshrl.u32 %v1803, 7
  %v1805 = vsub.s32 0, %v1804
  %v1806 = vrot.slane %v1801, %v1805
  %v1809 = vsel %vm929, %v1796, 0
  %v1812 = vsel %vm929, %v1797, 0
  %v1815 = vsel %vm929, %v1798, 0
  %v1818 = vsel %vm929, %v1799, 0
  %v1821 = vsel %vm1065, %v1800, 0
  %1823 = vmatprep.subr.bf16.mxu0 0
  %1824 = vmatpush1.bf16.msra.mxu0 %v1821
  %1825 = vmatprep.subr.bf16.mxu0 0
  %1826 = vmatpush1.bf16.msra.mxu0 0
  %1827 = vmatprep.subr.bf16.mxu0 0
  %1828 = vmatpush1.bf16.msra.mxu0 0
  %1829 = vmatprep.subr.bf16.mxu0 0
  %1830 = vmatpush1.bf16.msra.mxu0 0
  %1831 = vmatprep.subr.bf16.mxu0 0
  %1832 = vmatpush1.bf16.msra.mxu0 0
  %1833 = vmatprep.subr.bf16.mxu0 0
  %1834 = vmatpush1.bf16.msra.mxu0 0
  %1835 = vmatprep.subr.bf16.mxu0 0
  %1836 = vmatpush1.bf16.msra.mxu0 0
  %1837 = vmatprep.subr.bf16.mxu0 0
  %1838 = vmatpush1.bf16.msra.mxu0 0
  %1839 = vmatprep.subr.bf16.mxu0 0
  %1840 = vmatpush1.bf16.msra.mxu0 0
  %1841 = vmatprep.subr.bf16.mxu0 0
  %1842 = vmatpush1.bf16.msra.mxu0 0
  %1843 = vmatprep.subr.bf16.mxu0 0
  %1844 = vmatpush1.bf16.msra.mxu0 0
  %1845 = vmatprep.subr.bf16.mxu0 0
  %1846 = vmatpush1.bf16.msra.mxu0 0
  %1847 = vmatprep.subr.bf16.mxu0 0
  %1848 = vmatpush1.bf16.msra.mxu0 0
  %1849 = vmatprep.subr.bf16.mxu0 0
  %1850 = vmatpush1.bf16.msra.mxu0 0
  %1851 = vmatprep.subr.bf16.mxu0 0
  %1852 = vmatpush1.bf16.msra.mxu0 0
  %1853 = vmatprep.subr.bf16.mxu0 0
  %1854 = vmatpush1.bf16.msra.mxu0 0
  %1855 = vmatprep.mubr.bf16.mxu0 0
  %1856 = vmatmul.mubr.bf16.gmra.mrb[0].mxu0 %v1809
  %v1857 = vpop.f32.mrb[0].mxu0
  %v1858 = vadd.f32 %v1806, %v1857
  %v1859 = vpop.f32.mrb[0].mxu0
  %v1860 = vpop.f32.mrb[0].mxu0
  %v1861 = vadd.f32 %v1806, %v1860
  %v1862 = vpop.f32.mrb[0].mxu0
  %1863 = vmatprep.mubr.bf16.mxu0 0
  %1864 = vmatmul.mubr.bf16.gmra.mrb[0].mxu0 %v1812
  %v1865 = vpop.f32.mrb[0].mxu0
  %v1866 = vadd.f32 %v1806, %v1865
  %v1867 = vpop.f32.mrb[0].mxu0
  %v1868 = vpop.f32.mrb[0].mxu0
  %v1869 = vadd.f32 %v1806, %v1868
  %v1870 = vpop.f32.mrb[0].mxu0
  %1871 = vmatprep.mubr.bf16.mxu0 0
  %1872 = vmatmul.mubr.bf16.gmra.mrb[0].mxu0 %v1815
  %v1873 = vpop.f32.mrb[0].mxu0
  %v1874 = vadd.f32 %v1806, %v1873
  %v1875 = vpop.f32.mrb[0].mxu0
  %v1876 = vpop.f32.mrb[0].mxu0
  %v1877 = vadd.f32 %v1806, %v1876
  %v1878 = vpop.f32.mrb[0].mxu0
  %1879 = vmatprep.mubr.bf16.mxu0 0
  %1880 = vmatmul.mubr.bf16.gmra.mrb[0].mxu0 %v1818
  %v1881 = vpop.f32.mrb[0].mxu0
  %v1882 = vadd.f32 %v1806, %v1881
  %v1883 = vpop.f32.mrb[0].mxu0
  %v1884 = vpop.f32.mrb[0].mxu0
  %v1885 = vadd.f32 %v1806, %v1884
  %v1886 = vpop.f32.mrb[0].mxu0
  %1887 = vdwg.mxu0
  %v1888 = vmax.f32 %v1858, 0.0
  %v1889 = vmax.f32 %v1861, 0.0
  %v1890 = vmax.f32 %v1866, 0.0
  %v1891 = vmax.f32 %v1869, 0.0
  %v1892 = vmax.f32 %v1874, 0.0
  %v1893 = vmax.f32 %v1877, 0.0
  %v1894 = vmax.f32 %v1882, 0.0
  %v1895 = vmax.f32 %v1885, 0.0
  %v1896 = vpack.c.bf16 %v1889, %v1888
  %v1897 = vpack.c.bf16 %v1891, %v1890
  %v1898 = vpack.c.bf16 %v1893, %v1892
  %v1899 = vpack.c.bf16 %v1895, %v1894
  %v1900 = vld [vmem:[%s18] sm:$0xf]
  %v1901 = vld [vmem:[%s18 + $0x4] sm:$0xf]
  %v1902 = vld [vmem:[%s18 + $0x8] sm:$0xf]
  %v1903 = vld [vmem:[%s18 + $0xc] sm:$0xf]
  %v1904 = vld [vmem:[%s19] sm:$0x1]
  %v1906 = vlaneseq
  %v1907 = vshrl.u32 %v1906, 7
  %v1908 = vsub.s32 0, %v1907
  %v1909 = vrot.slane %v1904, %v1908
  %v1915 = vunpack.c.l.b16 %v1900
  %v1916 = vunpack.c.l.b16 %v1901
  %v1917 = vunpack.c.l.b16 %v1902
  %v1918 = vunpack.c.l.b16 %v1903
  %v1919 = vpack.c.b16 %v1916, %v1915
  %v1920 = vpack.c.b16 %v1918, %v1917
  %v1924 = vsel %vm207, %v1896, 0
  %v1927 = vsel %vm207, %v1897, 0
  %v1930 = vsel %vm207, %v1898, 0
  %v1933 = vsel %vm207, %v1899, 0
  %1935 = vmatprep.subr.bf16.mxu0 0
  %1936 = vmatpush1.bf16.msra.mxu0 %v1919
  %1937 = vmatprep.subr.bf16.mxu0 0
  %1938 = vmatpush1.bf16.msra.mxu0 %v1920
  %1939 = vmatprep.subr.bf16.mxu0 0
  %1940 = vmatpush1.bf16.msra.mxu0 0
  %1941 = vmatprep.subr.bf16.mxu0 0
  %1942 = vmatpush1.bf16.msra.mxu0 0
  %1943 = vmatprep.subr.bf16.mxu0 0
  %1944 = vmatpush1.bf16.msra.mxu0 0
  %1945 = vmatprep.subr.bf16.mxu0 0
  %1946 = vmatpush1.bf16.msra.mxu0 0
  %1947 = vmatprep.subr.bf16.mxu0 0
  %1948 = vmatpush1.bf16.msra.mxu0 0
  %1949 = vmatprep.subr.bf16.mxu0 0
  %1950 = vmatpush1.bf16.msra.mxu0 0
  %1951 = vmatprep.subr.bf16.mxu0 0
  %1952 = vmatpush1.bf16.msra.mxu0 0
  %1953 = vmatprep.subr.bf16.mxu0 0
  %1954 = vmatpush1.bf16.msra.mxu0 0
  %1955 = vmatprep.subr.bf16.mxu0 0
  %1956 = vmatpush1.bf16.msra.mxu0 0
  %1957 = vmatprep.subr.bf16.mxu0 0
  %1958 = vmatpush1.bf16.msra.mxu0 0
  %1959 = vmatprep.subr.bf16.mxu0 0
  %1960 = vmatpush1.bf16.msra.mxu0 0
  %1961 = vmatprep.subr.bf16.mxu0 0
  %1962 = vmatpush1.bf16.msra.mxu0 0
  %1963 = vmatprep.subr.bf16.mxu0 0
  %1964 = vmatpush1.bf16.msra.mxu0 0
  %1965 = vmatprep.subr.bf16.mxu0 0
  %1966 = vmatpush1.bf16.msra.mxu0 0
  %1967 = vmatprep.mubr.bf16.mxu0 0
  %1968 = vmatmul.mubr.bf16.gmra.mrb[0].mxu0 %v1924
  %v1969 = vpop.f32.mrb[0].mxu0
  %v1970 = vadd.f32 %v1909, %v1969
  %v1971 = vpop.f32.mrb[0].mxu0
  %v1972 = vpop.f32.mrb[0].mxu0
  %v1973 = vadd.f32 %v1909, %v1972
  %v1974 = vpop.f32.mrb[0].mxu0
  %1975 = vmatprep.mubr.bf16.mxu0 0
  %1976 = vmatmul.mubr.bf16.gmra.mrb[0].mxu0 %v1927
  %v1977 = vpop.f32.mrb[0].mxu0
  %v1978 = vadd.f32 %v1909, %v1977
  %v1979 = vpop.f32.mrb[0].mxu0
  %v1980 = vpop.f32.mrb[0].mxu0
  %v1981 = vadd.f32 %v1909, %v1980
  %v1982 = vpop.f32.mrb[0].mxu0
  %1983 = vmatprep.mubr.bf16.mxu0 0
  %1984 = vmatmul.mubr.bf16.gmra.mrb[0].mxu0 %v1930
  %v1985 = vpop.f32.mrb[0].mxu0
  %v1986 = vadd.f32 %v1909, %v1985
  %v1987 = vpop.f32.mrb[0].mxu0
  %v1988 = vpop.f32.mrb[0].mxu0
  %v1989 = vadd.f32 %v1909, %v1988
  %v1990 = vpop.f32.mrb[0].mxu0
  %1991 = vmatprep.mubr.bf16.mxu0 0
  %1992 = vmatmul.mubr.bf16.gmra.mrb[0].mxu0 %v1933
  %v1993 = vpop.f32.mrb[0].mxu0
  %v1994 = vadd.f32 %v1909, %v1993
  %v1995 = vpop.f32.mrb[0].mxu0
  %v1996 = vpop.f32.mrb[0].mxu0
  %v1997 = vadd.f32 %v1909, %v1996
  %v1998 = vpop.f32.mrb[0].mxu0
  %1999 = vdwg.mxu0
  %2000 = vst [vmem:[%s23] sm:$0xff] %v1970
  %2001 = vst [vmem:[%s23 + $0x8] sm:$0xff] %v1973
  %2002 = vst [vmem:[%s23 + $0x10] sm:$0xff] %v1978
  %2003 = vst [vmem:[%s23 + $0x18] sm:$0xff] %v1981
  %2004 = vst [vmem:[%s23 + $0x20] sm:$0xff] %v1986
  %2005 = vst [vmem:[%s23 + $0x28] sm:$0xff] %v1989
  %2006 = vst [vmem:[%s23 + $0x30] sm:$0xff] %v1994
  %2007 = vst [vmem:[%s23 + $0x38] sm:$0xff] %v1997
  // Predicated region
  $region82: #{latent_ode_forward.1} parent=0 // pred_check
    _
  $region83: #{latent_ode_forward.1} parent=0 // pred_check_branch
    %2009 = sbr.rel (0) target = $region85
  $region84: #{latent_ode_forward.1} parent=0 // pred_region
    _
  $region85: #{latent_ode_forward.1} parent=0 // pred_fallthru
    _
  // Predicated region
  $region86: #{latent_ode_forward.1} parent=0 // pred_check
    _
  $region87: #{latent_ode_forward.1} parent=0 // pred_check_branch
    %2011 = sbr.rel (0) target = $region89
  $region88: #{latent_ode_forward.1} parent=0 // pred_region
    _
  $region89: #{latent_ode_forward.1} parent=0 // pred_fallthru
    _
  // Predicated region
  $region90: #{latent_ode_forward.1} parent=0 // pred_check
    _
  $region91: #{latent_ode_forward.1} parent=0 // pred_check_branch
    %2013 = sbr.rel (0) target = $region93
  $region92: #{latent_ode_forward.1} parent=0 // pred_region
    _
  $region93: #{latent_ode_forward.1} parent=0 // pred_fallthru
    _
  // Predicated region
  $region94: #{latent_ode_forward.1} parent=0 // pred_check
    _
  $region95: #{latent_ode_forward.1} parent=0 // pred_check_branch
    %2015 = sbr.rel (0) target = $region97
  $region96: #{latent_ode_forward.1} parent=0 // pred_region
    _
  $region97: #{latent_ode_forward.1} parent=0 // pred_fallthru
    _
  // Predicated region
  $region98: #{latent_ode_forward.1} parent=0 // pred_check
    _
  $region99: #{latent_ode_forward.1} parent=0 // pred_check_branch
    %2017 = sbr.rel (0) target = $region101
  $region100: #{latent_ode_forward.1} parent=0 // pred_region
    _
  $region101: #{latent_ode_forward.1} parent=0 // pred_fallthru
    _
  // Predicated region
  $region102: #{latent_ode_forward.1} parent=0 // pred_check
    _
  $region103: #{latent_ode_forward.1} parent=0 // pred_check_branch
    %2019 = sbr.rel (0) target = $region105
  $region104: #{latent_ode_forward.1} parent=0 // pred_region
    _
  $region105: #{latent_ode_forward.1} parent=0 // pred_fallthru
    _
  // Predicated region
  $region106: #{latent_ode_forward.1} parent=0 // pred_check
    _
  $region107: #{latent_ode_forward.1} parent=0 // pred_check_branch
    %2021 = sbr.rel (0) target = $region109
  $region108: #{latent_ode_forward.1} parent=0 // pred_region
    _
  $region109: #{latent_ode_forward.1} parent=0 // pred_fallthru
    _
  // Predicated region
  $region110: #{latent_ode_forward.1} parent=0 // pred_check
    _
  $region111: #{latent_ode_forward.1} parent=0 // pred_check_branch
    %2023 = sbr.rel (0) target = $region113
  $region112: #{latent_ode_forward.1} parent=0 // pred_region
    _
  $region113: #{latent_ode_forward.1} parent=0 // pred_fallthru
    _

</llo_original>
